<compile_context>
chip_gen: v6e
topology: v6e:2x2x1
jax: 0.10.0
libtpu: 0.0.40
codegen_flags: <defaults>
</compile_context>

<pallas_src>
import functools

import jax
import jax.numpy as jnp
from jax.experimental import pallas as pl
from jax.experimental.pallas import tpu as pltpu


def _round_up(x, m):
    return (x + m - 1) // m * m


# 8 recurrent timesteps per sequential grid step amortizes the ~0.35us/step grid
# overhead while keeping vreg pressure manageable with two interleaved directions.
_CHUNK = 8
_VMEM_LIMIT = 32 * 1024 * 1024


# ---------- fused conv stack (Conv1d+BN(+ReLU)) x3 + hoisted bidirectional LSTM input projection ----------

def _conv_gates_kernel(x_ref, w_ref, scale_ref, shift_ref, wih_ref, b_ref,
                       gf_ref, gb_ref, buf_ref, *, L, Lpad, K, n_layers, H4):
    pad = K // 2
    Lp, C = buf_ref.shape
    # in-kernel zero padding: zero only the halo rows (top pad rows + everything
    # past the L valid rows); the interior rows are fully overwritten below.
    buf_ref[0:pad, :] = jnp.zeros((pad, C), buf_ref.dtype)
    buf_ref[pad + L:, :] = jnp.zeros((Lp - pad - L, C), buf_ref.dtype)
    buf_ref[pad:pad + L, :] = x_ref[0]                       # already bf16

    acc = None
    for l in range(n_layers):
        cur = buf_ref[...]                                   # (Lp, C) bf16
        # im2col: one long-contraction MXU matmul instead of K short ones.
        xcat = jnp.concatenate([cur[k:k + L, :] for k in range(K)], axis=1)  # (L, K*C)
        acc = jnp.dot(xcat, w_ref[l], preferred_element_type=jnp.float32)    # (L, C) f32
        acc = acc * scale_ref[l] + shift_ref[l]              # conv bias + BN folded
        if l < n_layers - 1:
            acc = jnp.maximum(acc, 0.0)                      # ReLU on first two blocks only
            buf_ref[pad:pad + L, :] = acc.astype(buf_ref.dtype)   # halo stays zero
        # TODO(synk): train-mode dropout between conv layers omitted (identity in eval).

    a_bf = acc.astype(jnp.bfloat16)                          # (L, C) conv output
    # hoisted LSTM input projection, both directions in one wide matmul:
    #   gates = conv_out @ [W_ih_fwd | W_ih_bwd] + [b_fwd | b_bwd]
    gall = jnp.dot(a_bf, wih_ref[...], preferred_element_type=jnp.float32) + b_ref[...]
    gf = gall[:, :H4].astype(gf_ref.dtype)
    gb = gall[:, H4:].astype(gb_ref.dtype)
    if Lpad > L:        # static branch; padded-time rows are masked out in the LSTM
        zpad = jnp.zeros((Lpad - L, H4), gf_ref.dtype)
        gf = jnp.concatenate([gf, zpad], axis=0)
        gb = jnp.concatenate([gb, zpad], axis=0)
    gf_ref[0] = gf
    gb_ref[0] = gb


def conv_gates(x, w_all, scale_all, shift_all, wih_all, b_all, Lpad):
    """x: [B,L,C] bf16 -> (gx_fwd, gx_bwd), each [B,Lpad,4H] bf16 (batch-major,
    consumed directly by the LSTM kernel -> no HBM transpose)."""
    B, L, C = x.shape
    n_layers, KC, _ = w_all.shape
    H8 = wih_all.shape[1]
    H4 = H8 // 2
    K = KC // C
    Lp = _round_up(L + 2 * (K // 2), 16)     # bf16 halo scratch, 16-row sublane tiling
    kernel = functools.partial(_conv_gates_kernel, L=L, Lpad=Lpad, K=K,
                               n_layers=n_layers, H4=H4)
    # TODO(synk): for long L, tile the sequence axis (with an n_layers*pad halo) and
    # mark the constant weight specs pipeline_mode=pl.Buffered(1) to drop the
    # double-buffered weight copies (VMEM headroom on v7x 64MiB / v5e 16MiB scoped).
    return pl.pallas_call(
        kernel,
        out_shape=(jax.ShapeDtypeStruct((B, Lpad, H4), jnp.bfloat16),
                   jax.ShapeDtypeStruct((B, Lpad, H4), jnp.bfloat16)),
        grid_spec=pltpu.PrefetchScalarGridSpec(
            num_scalar_prefetch=0,
            grid=(B,),
            in_specs=[
                pl.BlockSpec((1, L, C), lambda b: (b, 0, 0)),
                pl.BlockSpec((n_layers, KC, C), lambda b: (0, 0, 0)),   # im2col weights
                pl.BlockSpec((n_layers, 1, C), lambda b: (0, 0, 0)),
                pl.BlockSpec((n_layers, 1, C), lambda b: (0, 0, 0)),
                pl.BlockSpec((C, H8), lambda b: (0, 0)),                # [W_ih_f | W_ih_b]
                pl.BlockSpec((1, H8), lambda b: (0, 0)),
            ],
            out_specs=(pl.BlockSpec((1, Lpad, H4), lambda b: (b, 0, 0)),
                       pl.BlockSpec((1, Lpad, H4), lambda b: (b, 0, 0))),
            scratch_shapes=[pltpu.VMEM((Lp, C), jnp.bfloat16)],
        ),
        compiler_params=pltpu.CompilerParams(
            dimension_semantics=("parallel",),
            vmem_limit_bytes=_VMEM_LIMIT),
    )(x, w_all, scale_all, shift_all, wih_all, b_all)


# ----------------------------- fused bidirectional chunked masked (packed) LSTM -----------------------------

def _bilstm_kernel(gxf_ref, gxb_ref, lens_ref, whhf_ref, whhb_ref,
                   of_ref, ob_ref, hf_sc, cf_sc, hb_sc, cb_sc, *, hidden, chunk):
    c = pl.program_id(0)
    n_chunks = pl.num_programs(0)

    @pl.when(c == 0)
    def _():
        hf_sc[...] = jnp.zeros_like(hf_sc)
        cf_sc[...] = jnp.zeros_like(cf_sc)
        hb_sc[...] = jnp.zeros_like(hb_sc)
        cb_sc[...] = jnp.zeros_like(cb_sc)

    hf = hf_sc[...]; cf = cf_sc[...]          # (B, H) f32 state, carried in VMEM across chunks
    hb = hb_sc[...]; cb = cb_sc[...]
    whhf = whhf_ref[...]                      # (H, 4H) bf16
    whhb = whhb_ref[...]
    lens = lens_ref[...]                      # (B, 1) int32
    H = hidden
    base_f = c * chunk
    base_b = (n_chunks - 1 - c) * chunk

    def cell(gx, h, cs, whh):
        gates = gx.astype(jnp.float32) + jnp.dot(h.astype(jnp.bfloat16), whh,
                                                 preferred_element_type=jnp.float32)
        sig = jax.nn.sigmoid(gates[:, :3 * H])   # prepped gate order: i, f, o, g
        i_g = sig[:, 0:H]
        f_g = sig[:, H:2 * H]
        o_g = sig[:, 2 * H:3 * H]
        g_g = jnp.tanh(gates[:, 3 * H:])
        c_new = f_g * cs + i_g * g_g
        h_new = o_g * jnp.tanh(c_new)
        return h_new, c_new

    for i in range(chunk):                    # fully unrolled, static in-chunk indices
        # two independent dependency chains per step (fwd + bwd) -> the small-M
        # MXU matmul of one direction hides under the EUP/VPU gate math of the other
        li_f = i
        li_b = chunk - 1 - i
        t_f = base_f + li_f
        t_b = base_b + li_b

        hf_new, cf_new = cell(gxf_ref[:, li_f, :], hf, cf, whhf)
        hb_new, cb_new = cell(gxb_ref[:, li_b, :], hb, cb, whhb)

        m_f = t_f < lens                      # (B,1) packed-sequence validity masks
        m_b = t_b < lens
        cf = jnp.where(m_f, cf_new, cf)       # state frozen on padded steps
        hf = jnp.where(m_f, hf_new, hf)
        cb = jnp.where(m_b, cb_new, cb)
        hb = jnp.where(m_b, hb_new, hb)
        of_ref[li_f] = jnp.where(m_f, hf_new, 0.0).astype(of_ref.dtype)   # zero output on padding
        ob_ref[li_b] = jnp.where(m_b, hb_new, 0.0).astype(ob_ref.dtype)

    hf_sc[...] = hf; cf_sc[...] = cf
    hb_sc[...] = hb; cb_sc[...] = cb


def bilstm(gx_f, gx_b, lens2d, whh_f, whh_b, hidden, chunk):
    """gx_f/gx_b: [B,Lpad,4H] bf16 gate pre-activations, lens2d: [B,1] int32,
    whh_*: [H,4H] bf16 -> (out_fwd, out_bwd), each [Lpad,B,H] f32."""
    B, Lpad, H4 = gx_f.shape
    n_chunks = Lpad // chunk
    kernel = functools.partial(_bilstm_kernel, hidden=hidden, chunk=chunk)
    # TODO(synk): on v7x, split the two directions across the 2 TensorCores
    # (core-parallel leading grid axis) instead of interleaving on one core.
    return pl.pallas_call(
        kernel,
        out_shape=(jax.ShapeDtypeStruct((Lpad, B, hidden), jnp.float32),
                   jax.ShapeDtypeStruct((Lpad, B, hidden), jnp.float32)),
        grid_spec=pltpu.PrefetchScalarGridSpec(
            num_scalar_prefetch=0,
            grid=(n_chunks,),
            in_specs=[
                pl.BlockSpec((B, chunk, H4), lambda c: (0, c, 0)),                 # fwd gates
                pl.BlockSpec((B, chunk, H4), lambda c: (0, n_chunks - 1 - c, 0)),  # bwd gates
                pl.BlockSpec((B, 1), lambda c: (0, 0)),
                pl.BlockSpec((hidden, H4), lambda c: (0, 0)),
                pl.BlockSpec((hidden, H4), lambda c: (0, 0)),
            ],
            out_specs=(pl.BlockSpec((chunk, B, hidden), lambda c: (c, 0, 0)),
                       pl.BlockSpec((chunk, B, hidden), lambda c: (n_chunks - 1 - c, 0, 0))),
            scratch_shapes=[pltpu.VMEM((B, hidden), jnp.float32),   # h_fwd
                            pltpu.VMEM((B, hidden), jnp.float32),   # c_fwd
                            pltpu.VMEM((B, hidden), jnp.float32),   # h_bwd
                            pltpu.VMEM((B, hidden), jnp.float32)],  # c_bwd
        ),
        compiler_params=pltpu.CompilerParams(
            dimension_semantics=("arbitrary",),
            vmem_limit_bytes=_VMEM_LIMIT),
    )(gx_f, gx_b, lens2d, whh_f, whh_b)


# ------------------------------------ parameter init ------------------------------------

def init_params(key, voc_size, d_enc):
    # Conv weights are stored as (K, Cin, Cout); from PyTorch (Cout, Cin, K) transpose (2,1,0).
    # LSTM weights are stored as (in, 4H); from PyTorch (4H, in) transpose. Bias = b_ih + b_hh.
    H = d_enc // 2
    keys = jax.random.split(key, 20)
    p = {}
    p["emb"] = 0.1 * jax.random.normal(keys[0], (voc_size, d_enc), jnp.float32)
    for l in range(3):
        p[f"conv{l}_w"] = 0.05 * jax.random.normal(keys[1 + l], (5, d_enc, d_enc), jnp.float32)
        p[f"conv{l}_b"] = 0.05 * jax.random.normal(keys[4 + l], (d_enc,), jnp.float32)
        p[f"bn{l}_gamma"] = 1.0 + 0.1 * jax.random.normal(keys[7 + l], (d_enc,), jnp.float32)
        p[f"bn{l}_beta"] = 0.1 * jax.random.normal(keys[10 + l], (d_enc,), jnp.float32)
        p[f"bn{l}_mean"] = jnp.zeros((d_enc,), jnp.float32)
        p[f"bn{l}_var"] = jnp.ones((d_enc,), jnp.float32)
    for d, name in enumerate(["fwd", "bwd"]):
        p[f"lstm_{name}_wih"] = 0.1 * jax.random.normal(keys[13 + 3 * d], (d_enc, 4 * H), jnp.float32)
        p[f"lstm_{name}_whh"] = 0.1 * jax.random.normal(keys[14 + 3 * d], (H, 4 * H), jnp.float32)
        p[f"lstm_{name}_b"] = 0.05 * jax.random.normal(keys[15 + 3 * d], (1, 4 * H), jnp.float32)
    return p


# ------------------------------------ encoder forward ------------------------------------

def encoder_forward(params, token_pad, token_lengths, d_enc):
    """token_pad: [L, B] int32, token_lengths: [B] -> enc_out [L, B, d_enc] f32."""
    L, B = token_pad.shape
    H = d_enc // 2
    eps = 1e-5
    chunk = _CHUNK
    Lpad = _round_up(L, chunk)

    # ---- tiny weight prep: fold BN, im2col-reshape conv weights, reorder & fuse LSTM weights ----
    w_all = jnp.stack([params[f"conv{l}_w"] for l in range(3)])          # [3, K, C, C]
    w_all = w_all.reshape(3, 5 * d_enc, d_enc).astype(jnp.bfloat16)      # [3, K*C, C] im2col layout
    scales, shifts = [], []
    for l in range(3):
        inv = params[f"bn{l}_gamma"] * jax.lax.rsqrt(params[f"bn{l}_var"] + eps)
        scales.append(inv)
        shifts.append((params[f"conv{l}_b"] - params[f"bn{l}_mean"]) * inv + params[f"bn{l}_beta"])
    scale_all = jnp.stack(scales).reshape(3, 1, d_enc).astype(jnp.float32)
    shift_all = jnp.stack(shifts).reshape(3, 1, d_enc).astype(jnp.float32)

    # PyTorch gate order (i,f,g,o) -> kernel order (i,f,o,g): one contiguous sigmoid slice.
    perm = jnp.concatenate([jnp.arange(0, 2 * H), jnp.arange(3 * H, 4 * H),
                            jnp.arange(2 * H, 3 * H)])

    def prep_dir(name):
        wih = params[f"lstm_{name}_wih"][:, perm].astype(jnp.bfloat16)   # [C, 4H]
        whh = params[f"lstm_{name}_whh"][:, perm].astype(jnp.bfloat16)   # [H, 4H]
        b = params[f"lstm_{name}_b"][:, perm].astype(jnp.float32)        # [1, 4H] (= b_ih + b_hh)
        return wih, whh, b

    wih_f, whh_f, b_f = prep_dir("fwd")
    wih_b, whh_b, b_b = prep_dir("bwd")
    wih_all = jnp.concatenate([wih_f, wih_b], axis=1)                    # [C, 8H] fused projection
    b_all = jnp.concatenate([b_f, b_b], axis=1)                          # [1, 8H]

    # embedding: transpose the small int32 index tensor, not the float activations
    emb = jnp.take(params["emb"], token_pad.T, axis=0).astype(jnp.bfloat16)   # [B, L, C]

    # fused conv stack + hoisted bidirectional LSTM input projection (batch-major gates)
    gx_f, gx_b = conv_gates(emb, w_all, scale_all, shift_all, wih_all, b_all, Lpad)

    lens2d = token_lengths.reshape(B, 1).astype(jnp.int32)
    out_f, out_b = bilstm(gx_f, gx_b, lens2d, whh_f, whh_b, H, chunk)    # [Lpad, B, H] x2
    return jnp.concatenate([out_f[:L], out_b[:L]], axis=-1)              # [L, B, d_enc]


if __name__ == "__main__":
    key = jax.random.PRNGKey(0)
    voc_size, d_enc = 10, 32
    L, B = 16, 2

    pkey, tkey = jax.random.split(key)
    params = init_params(pkey, voc_size, d_enc)
    token_pad = jax.random.randint(tkey, (L, B), 0, voc_size, dtype=jnp.int32)
    token_lengths = jnp.array([16, 11], dtype=jnp.int32)    # max length == L

    fwd = jax.jit(encoder_forward, static_argnums=(3,))
    enc_out = fwd(params, token_pad, token_lengths, d_enc)
    enc_out = jax.block_until_ready(enc_out)
    assert enc_out.shape == (L, B, d_enc)
    assert bool(jnp.all(jnp.isfinite(enc_out)))
    # padded timesteps of the shorter sequence must be exactly zero (pack/pad semantics)
    assert bool(jnp.all(enc_out[int(token_lengths[1]):, 1, :] == 0.0))
    print("KERNEL_OK")
</pallas_src>

<mosaic_0001>
module attributes {stable_mosaic.version = 11 : i64} {
  func.func @_conv_gates_kernel(%arg0: i32, %arg1: memref<1x16x32xbf16, #tpu.memory_space<vmem>>, %arg2: memref<3x160x32xbf16, #tpu.memory_space<vmem>>, %arg3: memref<3x1x32xf32, #tpu.memory_space<vmem>>, %arg4: memref<3x1x32xf32, #tpu.memory_space<vmem>>, %arg5: memref<32x128xbf16, #tpu.memory_space<vmem>>, %arg6: memref<1x128xf32, #tpu.memory_space<vmem>>, %arg7: memref<1x16x64xbf16, #tpu.memory_space<vmem>>, %arg8: memref<1x16x64xbf16, #tpu.memory_space<vmem>>, %arg9: memref<32x32xbf16, #tpu.memory_space<vmem>>) attributes {dimension_semantics = [#tpu.dimension_semantics<parallel>], iteration_bounds = array<i64: 2>, scalar_prefetch = 0 : i64, scratch_operands = 1 : i64, tpu.core_type = #tpu.core_type<tc>, window_params = [{transform_indices = @transform_0, window_bounds = array<i64: 1, 16, 32>}, {pipeline_mode = #tpu.pipeline_mode<synchronous>, transform_indices = @transform_1, window_bounds = array<i64: 3, 160, 32>}, {pipeline_mode = #tpu.pipeline_mode<synchronous>, transform_indices = @transform_2, window_bounds = array<i64: 3, 1, 32>}, {pipeline_mode = #tpu.pipeline_mode<synchronous>, transform_indices = @transform_3, window_bounds = array<i64: 3, 1, 32>}, {pipeline_mode = #tpu.pipeline_mode<synchronous>, transform_indices = @transform_4, window_bounds = array<i64: 32, 128>}, {pipeline_mode = #tpu.pipeline_mode<synchronous>, transform_indices = @transform_5, window_bounds = array<i64: 1, 128>}, {transform_indices = @transform_6, window_bounds = array<i64: 1, 16, 64>}, {transform_indices = @transform_7, window_bounds = array<i64: 1, 16, 64>}]} {
    %cst = arith.constant 0.000000e+00 : bf16
    %0 = vector.broadcast %cst : bf16 to vector<2x32xbf16>
    %c0 = arith.constant 0 : index
    %c0_0 = arith.constant 0 : index
    %1 = vector.load %arg9[%c0, %c0_0] : memref<32x32xbf16, #tpu.memory_space<vmem>>, vector<2x32xbf16>
    tpu.vector_store %arg9[%c0, %c0_0], %0 {strides = array<i32>} : memref<32x32xbf16, #tpu.memory_space<vmem>>, vector<2x32xbf16>,
    %cst_1 = arith.constant 0.000000e+00 : bf16
    %2 = vector.broadcast %cst_1 : bf16 to vector<14x32xbf16>
    %c18 = arith.constant 18 : index
    %c0_2 = arith.constant 0 : index
    %3 = vector.load %arg9[%c18, %c0_2] : memref<32x32xbf16, #tpu.memory_space<vmem>>, vector<14x32xbf16>
    tpu.vector_store %arg9[%c18, %c0_2], %2 {strides = array<i32>} : memref<32x32xbf16, #tpu.memory_space<vmem>>, vector<14x32xbf16>,
    %c0_3 = arith.constant 0 : index
    %c0_4 = arith.constant 0 : index
    %c0_5 = arith.constant 0 : index
    %4 = vector.load %arg1[%c0_3, %c0_4, %c0_5] : memref<1x16x32xbf16, #tpu.memory_space<vmem>>, vector<1x16x32xbf16>
    %5 = vector.shape_cast %4 : vector<1x16x32xbf16> to vector<16x32xbf16>
    %c2 = arith.constant 2 : index
    %c0_6 = arith.constant 0 : index
    %6 = vector.load %arg9[%c2, %c0_6] : memref<32x32xbf16, #tpu.memory_space<vmem>>, vector<16x32xbf16>
    tpu.vector_store %arg9[%c2, %c0_6], %5 {strides = array<i32>} : memref<32x32xbf16, #tpu.memory_space<vmem>>, vector<16x32xbf16>,
    %c0_7 = arith.constant 0 : index
    %c0_8 = arith.constant 0 : index
    %7 = vector.load %arg9[%c0_7, %c0_8] : memref<32x32xbf16, #tpu.memory_space<vmem>>, vector<32x32xbf16>
    %8 = vector.extract_strided_slice %7 {offsets = [0, 0], sizes = [16, 32], strides = [1, 1]} : vector<32x32xbf16> to vector<16x32xbf16>
    %9 = vector.extract_strided_slice %7 {offsets = [1, 0], sizes = [16, 32], strides = [1, 1]} : vector<32x32xbf16> to vector<16x32xbf16>
    %10 = vector.extract_strided_slice %7 {offsets = [2, 0], sizes = [16, 32], strides = [1, 1]} : vector<32x32xbf16> to vector<16x32xbf16>
    %11 = vector.extract_strided_slice %7 {offsets = [3, 0], sizes = [16, 32], strides = [1, 1]} : vector<32x32xbf16> to vector<16x32xbf16>
    %12 = vector.extract_strided_slice %7 {offsets = [4, 0], sizes = [16, 32], strides = [1, 1]} : vector<32x32xbf16> to vector<16x32xbf16>
    %13 = tpu.concatenate %8, %9, %10, %11, %12 in 1 : vector<16x32xbf16>, vector<16x32xbf16>, vector<16x32xbf16>, vector<16x32xbf16>, vector<16x32xbf16> -> vector<16x160xbf16>
    %c0_9 = arith.constant 0 : index
    %c0_10 = arith.constant 0 : index
    %c0_11 = arith.constant 0 : index
    %14 = vector.load %arg2[%c0_9, %c0_10, %c0_11] : memref<3x160x32xbf16, #tpu.memory_space<vmem>>, vector<1x160x32xbf16>
    %15 = vector.shape_cast %14 : vector<1x160x32xbf16> to vector<160x32xbf16>
    %cst_12 = arith.constant dense<0.000000e+00> : vector<16x32xf32>
    %16 = tpu.matmul %13, %15, %cst_12 {dimension_numbers = #tpu.dot_dimension_numbers<[1], [0], [0], [1], [0, 0, 1, 1], [], []>} : vector<16x160xbf16>, vector<160x32xbf16>, vector<16x32xf32> -> vector<16x32xf32>
    %c0_13 = arith.constant 0 : index
    %c0_14 = arith.constant 0 : index
    %c0_15 = arith.constant 0 : index
    %17 = vector.load %arg3[%c0_13, %c0_14, %c0_15] : memref<3x1x32xf32, #tpu.memory_space<vmem>>, vector<1x1x32xf32>
    %18 = vector.shape_cast %17 : vector<1x1x32xf32> to vector<1x32xf32>
    %19 = vector.broadcast %18 : vector<1x32xf32> to vector<16x32xf32>
    %20 = arith.mulf %16, %19 : vector<16x32xf32>
    %c0_16 = arith.constant 0 : index
    %c0_17 = arith.constant 0 : index
    %c0_18 = arith.constant 0 : index
    %21 = vector.load %arg4[%c0_16, %c0_17, %c0_18] : memref<3x1x32xf32, #tpu.memory_space<vmem>>, vector<1x1x32xf32>
    %22 = vector.shape_cast %21 : vector<1x1x32xf32> to vector<1x32xf32>
    %23 = vector.broadcast %22 : vector<1x32xf32> to vector<16x32xf32>
    %24 = arith.addf %20, %23 : vector<16x32xf32>
    %cst_19 = arith.constant 0.000000e+00 : f32
    %25 = vector.broadcast %cst_19 : f32 to vector<16x32xf32>
    %26 = arith.maximumf %24, %25 : vector<16x32xf32>
    %27 = arith.truncf %26 : vector<16x32xf32> to vector<16x32xbf16>
    %c2_20 = arith.constant 2 : index
    %c0_21 = arith.constant 0 : index
    %28 = vector.load %arg9[%c2_20, %c0_21] : memref<32x32xbf16, #tpu.memory_space<vmem>>, vector<16x32xbf16>
    tpu.vector_store %arg9[%c2_20, %c0_21], %27 {strides = array<i32>} : memref<32x32xbf16, #tpu.memory_space<vmem>>, vector<16x32xbf16>,
    %c0_22 = arith.constant 0 : index
    %c0_23 = arith.constant 0 : index
    %29 = vector.load %arg9[%c0_22, %c0_23] : memref<32x32xbf16, #tpu.memory_space<vmem>>, vector<32x32xbf16>
    %30 = vector.extract_strided_slice %29 {offsets = [0, 0], sizes = [16, 32], strides = [1, 1]} : vector<32x32xbf16> to vector<16x32xbf16>
    %31 = vector.extract_strided_slice %29 {offsets = [1, 0], sizes = [16, 32], strides = [1, 1]} : vector<32x32xbf16> to vector<16x32xbf16>
    %32 = vector.extract_strided_slice %29 {offsets = [2, 0], sizes = [16, 32], strides = [1, 1]} : vector<32x32xbf16> to vector<16x32xbf16>
    %33 = vector.extract_strided_slice %29 {offsets = [3, 0], sizes = [16, 32], strides = [1, 1]} : vector<32x32xbf16> to vector<16x32xbf16>
    %34 = vector.extract_strided_slice %29 {offsets = [4, 0], sizes = [16, 32], strides = [1, 1]} : vector<32x32xbf16> to vector<16x32xbf16>
    %35 = tpu.concatenate %30, %31, %32, %33, %34 in 1 : vector<16x32xbf16>, vector<16x32xbf16>, vector<16x32xbf16>, vector<16x32xbf16>, vector<16x32xbf16> -> vector<16x160xbf16>
    %c1 = arith.constant 1 : index
    %c0_24 = arith.constant 0 : index
    %c0_25 = arith.constant 0 : index
    %36 = vector.load %arg2[%c1, %c0_24, %c0_25] : memref<3x160x32xbf16, #tpu.memory_space<vmem>>, vector<1x160x32xbf16>
    %37 = vector.shape_cast %36 : vector<1x160x32xbf16> to vector<160x32xbf16>
    %cst_26 = arith.constant dense<0.000000e+00> : vector<16x32xf32>
    %38 = tpu.matmul %35, %37, %cst_26 {dimension_numbers = #tpu.dot_dimension_numbers<[1], [0], [0], [1], [0, 0, 1, 1], [], []>} : vector<16x160xbf16>, vector<160x32xbf16>, vector<16x32xf32> -> vector<16x32xf32>
    %c1_27 = arith.constant 1 : index
    %c0_28 = arith.constant 0 : index
    %c0_29 = arith.constant 0 : index
    %39 = vector.load %arg3[%c1_27, %c0_28, %c0_29] : memref<3x1x32xf32, #tpu.memory_space<vmem>>, vector<1x1x32xf32>
    %40 = vector.shape_cast %39 : vector<1x1x32xf32> to vector<1x32xf32>
    %41 = vector.broadcast %40 : vector<1x32xf32> to vector<16x32xf32>
    %42 = arith.mulf %38, %41 : vector<16x32xf32>
    %c1_30 = arith.constant 1 : index
    %c0_31 = arith.constant 0 : index
    %c0_32 = arith.constant 0 : index
    %43 = vector.load %arg4[%c1_30, %c0_31, %c0_32] : memref<3x1x32xf32, #tpu.memory_space<vmem>>, vector<1x1x32xf32>
    %44 = vector.shape_cast %43 : vector<1x1x32xf32> to vector<1x32xf32>
    %45 = vector.broadcast %44 : vector<1x32xf32> to vector<16x32xf32>
    %46 = arith.addf %42, %45 : vector<16x32xf32>
    %cst_33 = arith.constant 0.000000e+00 : f32
    %47 = vector.broadcast %cst_33 : f32 to vector<16x32xf32>
    %48 = arith.maximumf %46, %47 : vector<16x32xf32>
    %49 = arith.truncf %48 : vector<16x32xf32> to vector<16x32xbf16>
    %c2_34 = arith.constant 2 : index
    %c0_35 = arith.constant 0 : index
    %50 = vector.load %arg9[%c2_34, %c0_35] : memref<32x32xbf16, #tpu.memory_space<vmem>>, vector<16x32xbf16>
    tpu.vector_store %arg9[%c2_34, %c0_35], %49 {strides = array<i32>} : memref<32x32xbf16, #tpu.memory_space<vmem>>, vector<16x32xbf16>,
    %c0_36 = arith.constant 0 : index
    %c0_37 = arith.constant 0 : index
    %51 = vector.load %arg9[%c0_36, %c0_37] : memref<32x32xbf16, #tpu.memory_space<vmem>>, vector<32x32xbf16>
    %52 = vector.extract_strided_slice %51 {offsets = [0, 0], sizes = [16, 32], strides = [1, 1]} : vector<32x32xbf16> to vector<16x32xbf16>
    %53 = vector.extract_strided_slice %51 {offsets = [1, 0], sizes = [16, 32], strides = [1, 1]} : vector<32x32xbf16> to vector<16x32xbf16>
    %54 = vector.extract_strided_slice %51 {offsets = [2, 0], sizes = [16, 32], strides = [1, 1]} : vector<32x32xbf16> to vector<16x32xbf16>
    %55 = vector.extract_strided_slice %51 {offsets = [3, 0], sizes = [16, 32], strides = [1, 1]} : vector<32x32xbf16> to vector<16x32xbf16>
    %56 = vector.extract_strided_slice %51 {offsets = [4, 0], sizes = [16, 32], strides = [1, 1]} : vector<32x32xbf16> to vector<16x32xbf16>
    %57 = tpu.concatenate %52, %53, %54, %55, %56 in 1 : vector<16x32xbf16>, vector<16x32xbf16>, vector<16x32xbf16>, vector<16x32xbf16>, vector<16x32xbf16> -> vector<16x160xbf16>
    %c2_38 = arith.constant 2 : index
    %c0_39 = arith.constant 0 : index
    %c0_40 = arith.constant 0 : index
    %58 = vector.load %arg2[%c2_38, %c0_39, %c0_40] : memref<3x160x32xbf16, #tpu.memory_space<vmem>>, vector<1x160x32xbf16>
    %59 = vector.shape_cast %58 : vector<1x160x32xbf16> to vector<160x32xbf16>
    %cst_41 = arith.constant dense<0.000000e+00> : vector<16x32xf32>
    %60 = tpu.matmul %57, %59, %cst_41 {dimension_numbers = #tpu.dot_dimension_numbers<[1], [0], [0], [1], [0, 0, 1, 1], [], []>} : vector<16x160xbf16>, vector<160x32xbf16>, vector<16x32xf32> -> vector<16x32xf32>
    %c2_42 = arith.constant 2 : index
    %c0_43 = arith.constant 0 : index
    %c0_44 = arith.constant 0 : index
    %61 = vector.load %arg3[%c2_42, %c0_43, %c0_44] : memref<3x1x32xf32, #tpu.memory_space<vmem>>, vector<1x1x32xf32>
    %62 = vector.shape_cast %61 : vector<1x1x32xf32> to vector<1x32xf32>
    %63 = vector.broadcast %62 : vector<1x32xf32> to vector<16x32xf32>
    %64 = arith.mulf %60, %63 : vector<16x32xf32>
    %c2_45 = arith.constant 2 : index
    %c0_46 = arith.constant 0 : index
    %c0_47 = arith.constant 0 : index
    %65 = vector.load %arg4[%c2_45, %c0_46, %c0_47] : memref<3x1x32xf32, #tpu.memory_space<vmem>>, vector<1x1x32xf32>
    %66 = vector.shape_cast %65 : vector<1x1x32xf32> to vector<1x32xf32>
    %67 = vector.broadcast %66 : vector<1x32xf32> to vector<16x32xf32>
    %68 = arith.addf %64, %67 : vector<16x32xf32>
    %69 = arith.truncf %68 : vector<16x32xf32> to vector<16x32xbf16>
    %c0_48 = arith.constant 0 : index
    %c0_49 = arith.constant 0 : index
    %70 = vector.load %arg5[%c0_48, %c0_49] : memref<32x128xbf16, #tpu.memory_space<vmem>>, vector<32x128xbf16>
    %cst_50 = arith.constant dense<0.000000e+00> : vector<16x128xf32>
    %71 = tpu.matmul %69, %70, %cst_50 {dimension_numbers = #tpu.dot_dimension_numbers<[1], [0], [0], [1], [0, 0, 1, 1], [], []>} : vector<16x32xbf16>, vector<32x128xbf16>, vector<16x128xf32> -> vector<16x128xf32>
    %c0_51 = arith.constant 0 : index
    %c0_52 = arith.constant 0 : index
    %72 = vector.load %arg6[%c0_51, %c0_52] : memref<1x128xf32, #tpu.memory_space<vmem>>, vector<1x128xf32>
    %73 = vector.broadcast %72 : vector<1x128xf32> to vector<16x128xf32>
    %74 = arith.addf %71, %73 : vector<16x128xf32>
    %75 = vector.extract_strided_slice %74 {offsets = [0, 0], sizes = [16, 64], strides = [1, 1]} : vector<16x128xf32> to vector<16x64xf32>
    %76 = arith.truncf %75 : vector<16x64xf32> to vector<16x64xbf16>
    %77 = vector.extract_strided_slice %74 {offsets = [0, 64], sizes = [16, 64], strides = [1, 1]} : vector<16x128xf32> to vector<16x64xf32>
    %78 = arith.truncf %77 : vector<16x64xf32> to vector<16x64xbf16>
    %c0_53 = arith.constant 0 : index
    %c0_54 = arith.constant 0 : index
    %c0_55 = arith.constant 0 : index
    %79 = vector.load %arg7[%c0_53, %c0_54, %c0_55] : memref<1x16x64xbf16, #tpu.memory_space<vmem>>, vector<1x16x64xbf16>
    %80 = vector.shape_cast %79 : vector<1x16x64xbf16> to vector<16x64xbf16>
    %81 = vector.shape_cast %76 : vector<16x64xbf16> to vector<1x16x64xbf16>
    tpu.vector_store %arg7[%c0_53, %c0_54, %c0_55], %81 {strides = array<i32>} : memref<1x16x64xbf16, #tpu.memory_space<vmem>>, vector<1x16x64xbf16>,
    %c0_56 = arith.constant 0 : index
    %c0_57 = arith.constant 0 : index
    %c0_58 = arith.constant 0 : index
    %82 = vector.load %arg8[%c0_56, %c0_57, %c0_58] : memref<1x16x64xbf16, #tpu.memory_space<vmem>>, vector<1x16x64xbf16>
    %83 = vector.shape_cast %82 : vector<1x16x64xbf16> to vector<16x64xbf16>
    %84 = vector.shape_cast %78 : vector<16x64xbf16> to vector<1x16x64xbf16>
    tpu.vector_store %arg8[%c0_56, %c0_57, %c0_58], %84 {strides = array<i32>} : memref<1x16x64xbf16, #tpu.memory_space<vmem>>, vector<1x16x64xbf16>,
    return
  }
  func.func @transform_0(%arg0: i32) -> (i32, i32, i32) {
    %c0_i32 = arith.constant 0 : i32
    %c0_i32_0 = arith.constant 0 : i32
    %c0_i32_1 = arith.constant 0 : i32
    return %arg0, %c0_i32, %c0_i32_0 : i32, i32, i32
  }
  func.func @transform_1(%arg0: i32) -> (i32, i32, i32) {
    %c0_i32 = arith.constant 0 : i32
    %c0_i32_0 = arith.constant 0 : i32
    %c0_i32_1 = arith.constant 0 : i32
    %c0_i32_2 = arith.constant 0 : i32
    return %c0_i32, %c0_i32_0, %c0_i32_1 : i32, i32, i32
  }
  func.func @transform_2(%arg0: i32) -> (i32, i32, i32) {
    %c0_i32 = arith.constant 0 : i32
    %c0_i32_0 = arith.constant 0 : i32
    %c0_i32_1 = arith.constant 0 : i32
    %c0_i32_2 = arith.constant 0 : i32
    return %c0_i32, %c0_i32_0, %c0_i32_1 : i32, i32, i32
  }
  func.func @transform_3(%arg0: i32) -> (i32, i32, i32) {
    %c0_i32 = arith.constant 0 : i32
    %c0_i32_0 = arith.constant 0 : i32
    %c0_i32_1 = arith.constant 0 : i32
    %c0_i32_2 = arith.constant 0 : i32
    return %c0_i32, %c0_i32_0, %c0_i32_1 : i32, i32, i32
  }
  func.func @transform_4(%arg0: i32) -> (i32, i32) {
    %c0_i32 = arith.constant 0 : i32
    %c0_i32_0 = arith.constant 0 : i32
    %c0_i32_1 = arith.constant 0 : i32
    return %c0_i32, %c0_i32_0 : i32, i32
  }
  func.func @transform_5(%arg0: i32) -> (i32, i32) {
    %c0_i32 = arith.constant 0 : i32
    %c0_i32_0 = arith.constant 0 : i32
    %c0_i32_1 = arith.constant 0 : i32
    return %c0_i32, %c0_i32_0 : i32, i32
  }
  func.func @transform_6(%arg0: i32) -> (i32, i32, i32) {
    %c0_i32 = arith.constant 0 : i32
    %c0_i32_0 = arith.constant 0 : i32
    %c0_i32_1 = arith.constant 0 : i32
    return %arg0, %c0_i32, %c0_i32_0 : i32, i32, i32
  }
  func.func @transform_7(%arg0: i32) -> (i32, i32, i32) {
    %c0_i32 = arith.constant 0 : i32
    %c0_i32_0 = arith.constant 0 : i32
    %c0_i32_1 = arith.constant 0 : i32
    return %arg0, %c0_i32, %c0_i32_0 : i32, i32, i32
  }
}

module attributes {stable_mosaic.version = 11 : i64} {
  func.func @_bilstm_kernel(%arg0: i32, %arg1: memref<2x8x64xbf16, #tpu.memory_space<vmem>>, %arg2: memref<2x8x64xbf16, #tpu.memory_space<vmem>>, %arg3: memref<2x1xi32, #tpu.memory_space<vmem>>, %arg4: memref<16x64xbf16, #tpu.memory_space<vmem>>, %arg5: memref<16x64xbf16, #tpu.memory_space<vmem>>, %arg6: memref<8x2x16xf32, #tpu.memory_space<vmem>>, %arg7: memref<8x2x16xf32, #tpu.memory_space<vmem>>, %arg8: memref<2x16xf32, #tpu.memory_space<vmem>>, %arg9: memref<2x16xf32, #tpu.memory_space<vmem>>, %arg10: memref<2x16xf32, #tpu.memory_space<vmem>>, %arg11: memref<2x16xf32, #tpu.memory_space<vmem>>) attributes {dimension_semantics = [#tpu.dimension_semantics<arbitrary>], iteration_bounds = array<i64: 2>, scalar_prefetch = 0 : i64, scratch_operands = 4 : i64, tpu.core_type = #tpu.core_type<tc>, window_params = [{transform_indices = @transform_0, window_bounds = array<i64: 2, 8, 64>}, {transform_indices = @transform_1, window_bounds = array<i64: 2, 8, 64>}, {pipeline_mode = #tpu.pipeline_mode<synchronous>, transform_indices = @transform_2, window_bounds = array<i64: 2, 1>}, {pipeline_mode = #tpu.pipeline_mode<synchronous>, transform_indices = @transform_3, window_bounds = array<i64: 16, 64>}, {pipeline_mode = #tpu.pipeline_mode<synchronous>, transform_indices = @transform_4, window_bounds = array<i64: 16, 64>}, {transform_indices = @transform_5, window_bounds = array<i64: 8, 2, 16>}, {transform_indices = @transform_6, window_bounds = array<i64: 8, 2, 16>}]} {
    %c0_i32 = arith.constant 0 : i32
    %0 = arith.cmpi eq, %arg0, %c0_i32 : i32
    %1 = arith.extui %0 : i1 to i32
    %c0_i32_0 = arith.constant 0 : i32
    %2 = arith.cmpi ne, %1, %c0_i32_0 : i32
    scf.if %2 {
      %cst_169 = arith.constant 0.000000e+00 : f32
      %625 = vector.broadcast %cst_169 : f32 to vector<2x16xf32>
      %c0_170 = arith.constant 0 : index
      %c0_171 = arith.constant 0 : index
      %626 = vector.load %arg8[%c0_170, %c0_171] : memref<2x16xf32, #tpu.memory_space<vmem>>, vector<2x16xf32>
      tpu.vector_store %arg8[%c0_170, %c0_171], %625 {strides = array<i32>} : memref<2x16xf32, #tpu.memory_space<vmem>>, vector<2x16xf32>,
      %cst_172 = arith.constant 0.000000e+00 : f32
      %627 = vector.broadcast %cst_172 : f32 to vector<2x16xf32>
      %c0_173 = arith.constant 0 : index
      %c0_174 = arith.constant 0 : index
      %628 = vector.load %arg9[%c0_173, %c0_174] : memref<2x16xf32, #tpu.memory_space<vmem>>, vector<2x16xf32>
      tpu.vector_store %arg9[%c0_173, %c0_174], %627 {strides = array<i32>} : memref<2x16xf32, #tpu.memory_space<vmem>>, vector<2x16xf32>,
      %cst_175 = arith.constant 0.000000e+00 : f32
      %629 = vector.broadcast %cst_175 : f32 to vector<2x16xf32>
      %c0_176 = arith.constant 0 : index
      %c0_177 = arith.constant 0 : index
      %630 = vector.load %arg10[%c0_176, %c0_177] : memref<2x16xf32, #tpu.memory_space<vmem>>, vector<2x16xf32>
      tpu.vector_store %arg10[%c0_176, %c0_177], %629 {strides = array<i32>} : memref<2x16xf32, #tpu.memory_space<vmem>>, vector<2x16xf32>,
      %cst_178 = arith.constant 0.000000e+00 : f32
      %631 = vector.broadcast %cst_178 : f32 to vector<2x16xf32>
      %c0_179 = arith.constant 0 : index
      %c0_180 = arith.constant 0 : index
      %632 = vector.load %arg11[%c0_179, %c0_180] : memref<2x16xf32, #tpu.memory_space<vmem>>, vector<2x16xf32>
      tpu.vector_store %arg11[%c0_179, %c0_180], %631 {strides = array<i32>} : memref<2x16xf32, #tpu.memory_space<vmem>>, vector<2x16xf32>,
    } else {
    }
    %c0 = arith.constant 0 : index
    %c0_1 = arith.constant 0 : index
    %3 = vector.load %arg8[%c0, %c0_1] : memref<2x16xf32, #tpu.memory_space<vmem>>, vector<2x16xf32>
    %c0_2 = arith.constant 0 : index
    %c0_3 = arith.constant 0 : index
    %4 = vector.load %arg9[%c0_2, %c0_3] : memref<2x16xf32, #tpu.memory_space<vmem>>, vector<2x16xf32>
    %c0_4 = arith.constant 0 : index
    %c0_5 = arith.constant 0 : index
    %5 = vector.load %arg10[%c0_4, %c0_5] : memref<2x16xf32, #tpu.memory_space<vmem>>, vector<2x16xf32>
    %c0_6 = arith.constant 0 : index
    %c0_7 = arith.constant 0 : index
    %6 = vector.load %arg11[%c0_6, %c0_7] : memref<2x16xf32, #tpu.memory_space<vmem>>, vector<2x16xf32>
    %c0_8 = arith.constant 0 : index
    %c0_9 = arith.constant 0 : index
    %7 = vector.load %arg4[%c0_8, %c0_9] : memref<16x64xbf16, #tpu.memory_space<vmem>>, vector<16x64xbf16>
    %c0_10 = arith.constant 0 : index
    %c0_11 = arith.constant 0 : index
    %8 = vector.load %arg5[%c0_10, %c0_11] : memref<16x64xbf16, #tpu.memory_space<vmem>>, vector<16x64xbf16>
    %c0_12 = arith.constant 0 : index
    %c0_13 = arith.constant 0 : index
    %9 = vector.load %arg3[%c0_12, %c0_13] : memref<2x1xi32, #tpu.memory_space<vmem>>, vector<2x1xi32>
    %c8_i32 = arith.constant 8 : i32
    %10 = arith.muli %arg0, %c8_i32 : i32
    %c1_i32 = arith.constant 1 : i32
    %11 = arith.subi %c1_i32, %arg0 : i32
    %c8_i32_14 = arith.constant 8 : i32
    %12 = arith.muli %11, %c8_i32_14 : i32
    %c0_i32_15 = arith.constant 0 : i32
    %13 = arith.addi %10, %c0_i32_15 : i32
    %c7_i32 = arith.constant 7 : i32
    %14 = arith.addi %12, %c7_i32 : i32
    %c0_16 = arith.constant 0 : index
    %c0_17 = arith.constant 0 : index
    %c0_18 = arith.constant 0 : index
    %15 = vector.load %arg1[%c0_16, %c0_17, %c0_18] : memref<2x8x64xbf16, #tpu.memory_space<vmem>>, vector<2x1x64xbf16>
    %16 = vector.shape_cast %15 : vector<2x1x64xbf16> to vector<2x64xbf16>
    %17 = arith.extf %16 : vector<2x64xbf16> to vector<2x64xf32>
    %18 = arith.truncf %3 : vector<2x16xf32> to vector<2x16xbf16>
    %cst = arith.constant dense<0.000000e+00> : vector<2x64xf32>
    %19 = tpu.matmul %18, %7, %cst {dimension_numbers = #tpu.dot_dimension_numbers<[1], [0], [0], [1], [0, 0, 1, 1], [], []>} : vector<2x16xbf16>, vector<16x64xbf16>, vector<2x64xf32> -> vector<2x64xf32>
    %20 = arith.addf %17, %19 : vector<2x64xf32>
    %21 = vector.extract_strided_slice %20 {offsets = [0, 0], sizes = [2, 48], strides = [1, 1]} : vector<2x64xf32> to vector<2x48xf32>
    %22 = arith.negf %21 : vector<2x48xf32>
    %23 = math.exp %22 : vector<2x48xf32>
    %cst_19 = arith.constant 1.000000e+00 : f32
    %24 = vector.broadcast %cst_19 : f32 to vector<2x48xf32>
    %25 = arith.addf %24, %23 : vector<2x48xf32>
    %26 = arith.divf %24, %25 : vector<2x48xf32>
    %27 = vector.extract_strided_slice %26 {offsets = [0, 0], sizes = [2, 16], strides = [1, 1]} : vector<2x48xf32> to vector<2x16xf32>
    %28 = vector.extract_strided_slice %26 {offsets = [0, 16], sizes = [2, 16], strides = [1, 1]} : vector<2x48xf32> to vector<2x16xf32>
    %29 = vector.extract_strided_slice %26 {offsets = [0, 32], sizes = [2, 16], strides = [1, 1]} : vector<2x48xf32> to vector<2x16xf32>
    %30 = vector.extract_strided_slice %20 {offsets = [0, 48], sizes = [2, 16], strides = [1, 1]} : vector<2x64xf32> to vector<2x16xf32>
    %31 = math.tanh %30 : vector<2x16xf32>
    %32 = arith.mulf %28, %4 : vector<2x16xf32>
    %33 = arith.mulf %27, %31 : vector<2x16xf32>
    %34 = arith.addf %32, %33 : vector<2x16xf32>
    %35 = math.tanh %34 : vector<2x16xf32>
    %36 = arith.mulf %29, %35 : vector<2x16xf32>
    %c0_20 = arith.constant 0 : index
    %c7 = arith.constant 7 : index
    %c0_21 = arith.constant 0 : index
    %37 = vector.load %arg2[%c0_20, %c7, %c0_21] : memref<2x8x64xbf16, #tpu.memory_space<vmem>>, vector<2x1x64xbf16>
    %38 = vector.shape_cast %37 : vector<2x1x64xbf16> to vector<2x64xbf16>
    %39 = arith.extf %38 : vector<2x64xbf16> to vector<2x64xf32>
    %40 = arith.truncf %5 : vector<2x16xf32> to vector<2x16xbf16>
    %cst_22 = arith.constant dense<0.000000e+00> : vector<2x64xf32>
    %41 = tpu.matmul %40, %8, %cst_22 {dimension_numbers = #tpu.dot_dimension_numbers<[1], [0], [0], [1], [0, 0, 1, 1], [], []>} : vector<2x16xbf16>, vector<16x64xbf16>, vector<2x64xf32> -> vector<2x64xf32>
    %42 = arith.addf %39, %41 : vector<2x64xf32>
    %43 = vector.extract_strided_slice %42 {offsets = [0, 0], sizes = [2, 48], strides = [1, 1]} : vector<2x64xf32> to vector<2x48xf32>
    %44 = arith.negf %43 : vector<2x48xf32>
    %45 = math.exp %44 : vector<2x48xf32>
    %cst_23 = arith.constant 1.000000e+00 : f32
    %46 = vector.broadcast %cst_23 : f32 to vector<2x48xf32>
    %47 = arith.addf %46, %45 : vector<2x48xf32>
    %48 = arith.divf %46, %47 : vector<2x48xf32>
    %49 = vector.extract_strided_slice %48 {offsets = [0, 0], sizes = [2, 16], strides = [1, 1]} : vector<2x48xf32> to vector<2x16xf32>
    %50 = vector.extract_strided_slice %48 {offsets = [0, 16], sizes = [2, 16], strides = [1, 1]} : vector<2x48xf32> to vector<2x16xf32>
    %51 = vector.extract_strided_slice %48 {offsets = [0, 32], sizes = [2, 16], strides = [1, 1]} : vector<2x48xf32> to vector<2x16xf32>
    %52 = vector.extract_strided_slice %42 {offsets = [0, 48], sizes = [2, 16], strides = [1, 1]} : vector<2x64xf32> to vector<2x16xf32>
    %53 = math.tanh %52 : vector<2x16xf32>
    %54 = arith.mulf %50, %6 : vector<2x16xf32>
    %55 = arith.mulf %49, %53 : vector<2x16xf32>
    %56 = arith.addf %54, %55 : vector<2x16xf32>
    %57 = math.tanh %56 : vector<2x16xf32>
    %58 = arith.mulf %51, %57 : vector<2x16xf32>
    %59 = vector.broadcast %13 : i32 to vector<2x1xi32>
    %60 = arith.cmpi slt, %59, %9 : vector<2x1xi32>
    %61 = vector.broadcast %14 : i32 to vector<2x1xi32>
    %62 = arith.cmpi slt, %61, %9 : vector<2x1xi32>
    %63 = vector.shape_cast %60 : vector<2x1xi1> to vector<2x1xi1>
    %64 = vector.broadcast %63 : vector<2x1xi1> to vector<2x16xi1>
    %65 = arith.select %64, %34, %4 : vector<2x16xi1>, vector<2x16xf32>
    %66 = vector.shape_cast %60 : vector<2x1xi1> to vector<2x1xi1>
    %67 = vector.broadcast %66 : vector<2x1xi1> to vector<2x16xi1>
    %68 = arith.select %67, %36, %3 : vector<2x16xi1>, vector<2x16xf32>
    %69 = vector.shape_cast %62 : vector<2x1xi1> to vector<2x1xi1>
    %70 = vector.broadcast %69 : vector<2x1xi1> to vector<2x16xi1>
    %71 = arith.select %70, %56, %6 : vector<2x16xi1>, vector<2x16xf32>
    %72 = vector.shape_cast %62 : vector<2x1xi1> to vector<2x1xi1>
    %73 = vector.broadcast %72 : vector<2x1xi1> to vector<2x16xi1>
    %74 = arith.select %73, %58, %5 : vector<2x16xi1>, vector<2x16xf32>
    %cst_24 = arith.constant 0.000000e+00 : f32
    %75 = vector.shape_cast %60 : vector<2x1xi1> to vector<2x1xi1>
    %76 = vector.broadcast %75 : vector<2x1xi1> to vector<2x16xi1>
    %77 = vector.broadcast %cst_24 : f32 to vector<2x16xf32>
    %78 = arith.select %76, %36, %77 : vector<2x16xi1>, vector<2x16xf32>
    %c0_25 = arith.constant 0 : index
    %c0_26 = arith.constant 0 : index
    %c0_27 = arith.constant 0 : index
    %79 = vector.load %arg6[%c0_25, %c0_26, %c0_27] : memref<8x2x16xf32, #tpu.memory_space<vmem>>, vector<1x2x16xf32>
    %80 = vector.shape_cast %79 : vector<1x2x16xf32> to vector<2x16xf32>
    %81 = vector.shape_cast %78 : vector<2x16xf32> to vector<1x2x16xf32>
    tpu.vector_store %arg6[%c0_25, %c0_26, %c0_27], %81 {strides = array<i32>} : memref<8x2x16xf32, #tpu.memory_space<vmem>>, vector<1x2x16xf32>,
    %cst_28 = arith.constant 0.000000e+00 : f32
    %82 = vector.shape_cast %62 : vector<2x1xi1> to vector<2x1xi1>
    %83 = vector.broadcast %82 : vector<2x1xi1> to vector<2x16xi1>
    %84 = vector.broadcast %cst_28 : f32 to vector<2x16xf32>
    %85 = arith.select %83, %58, %84 : vector<2x16xi1>, vector<2x16xf32>
    %c7_29 = arith.constant 7 : index
    %c0_30 = arith.constant 0 : index
    %c0_31 = arith.constant 0 : index
    %86 = vector.load %arg7[%c7_29, %c0_30, %c0_31] : memref<8x2x16xf32, #tpu.memory_space<vmem>>, vector<1x2x16xf32>
    %87 = vector.shape_cast %86 : vector<1x2x16xf32> to vector<2x16xf32>
    %88 = vector.shape_cast %85 : vector<2x16xf32> to vector<1x2x16xf32>
    tpu.vector_store %arg7[%c7_29, %c0_30, %c0_31], %88 {strides = array<i32>} : memref<8x2x16xf32, #tpu.memory_space<vmem>>, vector<1x2x16xf32>,
    %c1_i32_32 = arith.constant 1 : i32
    %89 = arith.addi %10, %c1_i32_32 : i32
    %c6_i32 = arith.constant 6 : i32
    %90 = arith.addi %12, %c6_i32 : i32
    %c0_33 = arith.constant 0 : index
    %c1 = arith.constant 1 : index
    %c0_34 = arith.constant 0 : index
    %91 = vector.load %arg1[%c0_33, %c1, %c0_34] : memref<2x8x64xbf16, #tpu.memory_space<vmem>>, vector<2x1x64xbf16>
    %92 = vector.shape_cast %91 : vector<2x1x64xbf16> to vector<2x64xbf16>
    %93 = arith.extf %92 : vector<2x64xbf16> to vector<2x64xf32>
    %94 = arith.truncf %68 : vector<2x16xf32> to vector<2x16xbf16>
    %cst_35 = arith.constant dense<0.000000e+00> : vector<2x64xf32>
    %95 = tpu.matmul %94, %7, %cst_35 {dimension_numbers = #tpu.dot_dimension_numbers<[1], [0], [0], [1], [0, 0, 1, 1], [], []>} : vector<2x16xbf16>, vector<16x64xbf16>, vector<2x64xf32> -> vector<2x64xf32>
    %96 = arith.addf %93, %95 : vector<2x64xf32>
    %97 = vector.extract_strided_slice %96 {offsets = [0, 0], sizes = [2, 48], strides = [1, 1]} : vector<2x64xf32> to vector<2x48xf32>
    %98 = arith.negf %97 : vector<2x48xf32>
    %99 = math.exp %98 : vector<2x48xf32>
    %cst_36 = arith.constant 1.000000e+00 : f32
    %100 = vector.broadcast %cst_36 : f32 to vector<2x48xf32>
    %101 = arith.addf %100, %99 : vector<2x48xf32>
    %102 = arith.divf %100, %101 : vector<2x48xf32>
    %103 = vector.extract_strided_slice %102 {offsets = [0, 0], sizes = [2, 16], strides = [1, 1]} : vector<2x48xf32> to vector<2x16xf32>
    %104 = vector.extract_strided_slice %102 {offsets = [0, 16], sizes = [2, 16], strides = [1, 1]} : vector<2x48xf32> to vector<2x16xf32>
    %105 = vector.extract_strided_slice %102 {offsets = [0, 32], sizes = [2, 16], strides = [1, 1]} : vector<2x48xf32> to vector<2x16xf32>
    %106 = vector.extract_strided_slice %96 {offsets = [0, 48], sizes = [2, 16], strides = [1, 1]} : vector<2x64xf32> to vector<2x16xf32>
    %107 = math.tanh %106 : vector<2x16xf32>
    %108 = arith.mulf %104, %65 : vector<2x16xf32>
    %109 = arith.mulf %103, %107 : vector<2x16xf32>
    %110 = arith.addf %108, %109 : vector<2x16xf32>
    %111 = math.tanh %110 : vector<2x16xf32>
    %112 = arith.mulf %105, %111 : vector<2x16xf32>
    %c0_37 = arith.constant 0 : index
    %c6 = arith.constant 6 : index
    %c0_38 = arith.constant 0 : index
    %113 = vector.load %arg2[%c0_37, %c6, %c0_38] : memref<2x8x64xbf16, #tpu.memory_space<vmem>>, vector<2x1x64xbf16>
    %114 = vector.shape_cast %113 : vector<2x1x64xbf16> to vector<2x64xbf16>
    %115 = arith.extf %114 : vector<2x64xbf16> to vector<2x64xf32>
    %116 = arith.truncf %74 : vector<2x16xf32> to vector<2x16xbf16>
    %cst_39 = arith.constant dense<0.000000e+00> : vector<2x64xf32>
    %117 = tpu.matmul %116, %8, %cst_39 {dimension_numbers = #tpu.dot_dimension_numbers<[1], [0], [0], [1], [0, 0, 1, 1], [], []>} : vector<2x16xbf16>, vector<16x64xbf16>, vector<2x64xf32> -> vector<2x64xf32>
    %118 = arith.addf %115, %117 : vector<2x64xf32>
    %119 = vector.extract_strided_slice %118 {offsets = [0, 0], sizes = [2, 48], strides = [1, 1]} : vector<2x64xf32> to vector<2x48xf32>
    %120 = arith.negf %119 : vector<2x48xf32>
    %121 = math.exp %120 : vector<2x48xf32>
    %cst_40 = arith.constant 1.000000e+00 : f32
    %122 = vector.broadcast %cst_40 : f32 to vector<2x48xf32>
    %123 = arith.addf %122, %121 : vector<2x48xf32>
    %124 = arith.divf %122, %123 : vector<2x48xf32>
    %125 = vector.extract_strided_slice %124 {offsets = [0, 0], sizes = [2, 16], strides = [1, 1]} : vector<2x48xf32> to vector<2x16xf32>
    %126 = vector.extract_strided_slice %124 {offsets = [0, 16], sizes = [2, 16], strides = [1, 1]} : vector<2x48xf32> to vector<2x16xf32>
    %127 = vector.extract_strided_slice %124 {offsets = [0, 32], sizes = [2, 16], strides = [1, 1]} : vector<2x48xf32> to vector<2x16xf32>
    %128 = vector.extract_strided_slice %118 {offsets = [0, 48], sizes = [2, 16], strides = [1, 1]} : vector<2x64xf32> to vector<2x16xf32>
    %129 = math.tanh %128 : vector<2x16xf32>
    %130 = arith.mulf %126, %71 : vector<2x16xf32>
    %131 = arith.mulf %125, %129 : vector<2x16xf32>
    %132 = arith.addf %130, %131 : vector<2x16xf32>
    %133 = math.tanh %132 : vector<2x16xf32>
    %134 = arith.mulf %127, %133 : vector<2x16xf32>
    %135 = vector.broadcast %89 : i32 to vector<2x1xi32>
    %136 = arith.cmpi slt, %135, %9 : vector<2x1xi32>
    %137 = vector.broadcast %90 : i32 to vector<2x1xi32>
    %138 = arith.cmpi slt, %137, %9 : vector<2x1xi32>
    %139 = vector.shape_cast %136 : vector<2x1xi1> to vector<2x1xi1>
    %140 = vector.broadcast %139 : vector<2x1xi1> to vector<2x16xi1>
    %141 = arith.select %140, %110, %65 : vector<2x16xi1>, vector<2x16xf32>
    %142 = vector.shape_cast %136 : vector<2x1xi1> to vector<2x1xi1>
    %143 = vector.broadcast %142 : vector<2x1xi1> to vector<2x16xi1>
    %144 = arith.select %143, %112, %68 : vector<2x16xi1>, vector<2x16xf32>
    %145 = vector.shape_cast %138 : vector<2x1xi1> to vector<2x1xi1>
    %146 = vector.broadcast %145 : vector<2x1xi1> to vector<2x16xi1>
    %147 = arith.select %146, %132, %71 : vector<2x16xi1>, vector<2x16xf32>
    %148 = vector.shape_cast %138 : vector<2x1xi1> to vector<2x1xi1>
    %149 = vector.broadcast %148 : vector<2x1xi1> to vector<2x16xi1>
    %150 = arith.select %149, %134, %74 : vector<2x16xi1>, vector<2x16xf32>
    %cst_41 = arith.constant 0.000000e+00 : f32
    %151 = vector.shape_cast %136 : vector<2x1xi1> to vector<2x1xi1>
    %152 = vector.broadcast %151 : vector<2x1xi1> to vector<2x16xi1>
    %153 = vector.broadcast %cst_41 : f32 to vector<2x16xf32>
    %154 = arith.select %152, %112, %153 : vector<2x16xi1>, vector<2x16xf32>
    %c1_42 = arith.constant 1 : index
    %c0_43 = arith.constant 0 : index
    %c0_44 = arith.constant 0 : index
    %155 = vector.load %arg6[%c1_42, %c0_43, %c0_44] : memref<8x2x16xf32, #tpu.memory_space<vmem>>, vector<1x2x16xf32>
    %156 = vector.shape_cast %155 : vector<1x2x16xf32> to vector<2x16xf32>
    %157 = vector.shape_cast %154 : vector<2x16xf32> to vector<1x2x16xf32>
    tpu.vector_store %arg6[%c1_42, %c0_43, %c0_44], %157 {strides = array<i32>} : memref<8x2x16xf32, #tpu.memory_space<vmem>>, vector<1x2x16xf32>,
    %cst_45 = arith.constant 0.000000e+00 : f32
    %158 = vector.shape_cast %138 : vector<2x1xi1> to vector<2x1xi1>
    %159 = vector.broadcast %158 : vector<2x1xi1> to vector<2x16xi1>
    %160 = vector.broadcast %cst_45 : f32 to vector<2x16xf32>
    %161 = arith.select %159, %134, %160 : vector<2x16xi1>, vector<2x16xf32>
    %c6_46 = arith.constant 6 : index
    %c0_47 = arith.constant 0 : index
    %c0_48 = arith.constant 0 : index
    %162 = vector.load %arg7[%c6_46, %c0_47, %c0_48] : memref<8x2x16xf32, #tpu.memory_space<vmem>>, vector<1x2x16xf32>
    %163 = vector.shape_cast %162 : vector<1x2x16xf32> to vector<2x16xf32>
    %164 = vector.shape_cast %161 : vector<2x16xf32> to vector<1x2x16xf32>
    tpu.vector_store %arg7[%c6_46, %c0_47, %c0_48], %164 {strides = array<i32>} : memref<8x2x16xf32, #tpu.memory_space<vmem>>, vector<1x2x16xf32>,
    %c2_i32 = arith.constant 2 : i32
    %165 = arith.addi %10, %c2_i32 : i32
    %c5_i32 = arith.constant 5 : i32
    %166 = arith.addi %12, %c5_i32 : i32
    %c0_49 = arith.constant 0 : index
    %c2 = arith.constant 2 : index
    %c0_50 = arith.constant 0 : index
    %167 = vector.load %arg1[%c0_49, %c2, %c0_50] : memref<2x8x64xbf16, #tpu.memory_space<vmem>>, vector<2x1x64xbf16>
    %168 = vector.shape_cast %167 : vector<2x1x64xbf16> to vector<2x64xbf16>
    %169 = arith.extf %168 : vector<2x64xbf16> to vector<2x64xf32>
    %170 = arith.truncf %144 : vector<2x16xf32> to vector<2x16xbf16>
    %cst_51 = arith.constant dense<0.000000e+00> : vector<2x64xf32>
    %171 = tpu.matmul %170, %7, %cst_51 {dimension_numbers = #tpu.dot_dimension_numbers<[1], [0], [0], [1], [0, 0, 1, 1], [], []>} : vector<2x16xbf16>, vector<16x64xbf16>, vector<2x64xf32> -> vector<2x64xf32>
    %172 = arith.addf %169, %171 : vector<2x64xf32>
    %173 = vector.extract_strided_slice %172 {offsets = [0, 0], sizes = [2, 48], strides = [1, 1]} : vector<2x64xf32> to vector<2x48xf32>
    %174 = arith.negf %173 : vector<2x48xf32>
    %175 = math.exp %174 : vector<2x48xf32>
    %cst_52 = arith.constant 1.000000e+00 : f32
    %176 = vector.broadcast %cst_52 : f32 to vector<2x48xf32>
    %177 = arith.addf %176, %175 : vector<2x48xf32>
    %178 = arith.divf %176, %177 : vector<2x48xf32>
    %179 = vector.extract_strided_slice %178 {offsets = [0, 0], sizes = [2, 16], strides = [1, 1]} : vector<2x48xf32> to vector<2x16xf32>
    %180 = vector.extract_strided_slice %178 {offsets = [0, 16], sizes = [2, 16], strides = [1, 1]} : vector<2x48xf32> to vector<2x16xf32>
    %181 = vector.extract_strided_slice %178 {offsets = [0, 32], sizes = [2, 16], strides = [1, 1]} : vector<2x48xf32> to vector<2x16xf32>
    %182 = vector.extract_strided_slice %172 {offsets = [0, 48], sizes = [2, 16], strides = [1, 1]} : vector<2x64xf32> to vector<2x16xf32>
    %183 = math.tanh %182 : vector<2x16xf32>
    %184 = arith.mulf %180, %141 : vector<2x16xf32>
    %185 = arith.mulf %179, %183 : vector<2x16xf32>
    %186 = arith.addf %184, %185 : vector<2x16xf32>
    %187 = math.tanh %186 : vector<2x16xf32>
    %188 = arith.mulf %181, %187 : vector<2x16xf32>
    %c0_53 = arith.constant 0 : index
    %c5 = arith.constant 5 : index
    %c0_54 = arith.constant 0 : index
    %189 = vector.load %arg2[%c0_53, %c5, %c0_54] : memref<2x8x64xbf16, #tpu.memory_space<vmem>>, vector<2x1x64xbf16>
    %190 = vector.shape_cast %189 : vector<2x1x64xbf16> to vector<2x64xbf16>
    %191 = arith.extf %190 : vector<2x64xbf16> to vector<2x64xf32>
    %192 = arith.truncf %150 : vector<2x16xf32> to vector<2x16xbf16>
    %cst_55 = arith.constant dense<0.000000e+00> : vector<2x64xf32>
    %193 = tpu.matmul %192, %8, %cst_55 {dimension_numbers = #tpu.dot_dimension_numbers<[1], [0], [0], [1], [0, 0, 1, 1], [], []>} : vector<2x16xbf16>, vector<16x64xbf16>, vector<2x64xf32> -> vector<2x64xf32>
    %194 = arith.addf %191, %193 : vector<2x64xf32>
    %195 = vector.extract_strided_slice %194 {offsets = [0, 0], sizes = [2, 48], strides = [1, 1]} : vector<2x64xf32> to vector<2x48xf32>
    %196 = arith.negf %195 : vector<2x48xf32>
    %197 = math.exp %196 : vector<2x48xf32>
    %cst_56 = arith.constant 1.000000e+00 : f32
    %198 = vector.broadcast %cst_56 : f32 to vector<2x48xf32>
    %199 = arith.addf %198, %197 : vector<2x48xf32>
    %200 = arith.divf %198, %199 : vector<2x48xf32>
    %201 = vector.extract_strided_slice %200 {offsets = [0, 0], sizes = [2, 16], strides = [1, 1]} : vector<2x48xf32> to vector<2x16xf32>
    %202 = vector.extract_strided_slice %200 {offsets = [0, 16], sizes = [2, 16], strides = [1, 1]} : vector<2x48xf32> to vector<2x16xf32>
    %203 = vector.extract_strided_slice %200 {offsets = [0, 32], sizes = [2, 16], strides = [1, 1]} : vector<2x48xf32> to vector<2x16xf32>
    %204 = vector.extract_strided_slice %194 {offsets = [0, 48], sizes = [2, 16], strides = [1, 1]} : vector<2x64xf32> to vector<2x16xf32>
    %205 = math.tanh %204 : vector<2x16xf32>
    %206 = arith.mulf %202, %147 : vector<2x16xf32>
    %207 = arith.mulf %201, %205 : vector<2x16xf32>
    %208 = arith.addf %206, %207 : vector<2x16xf32>
    %209 = math.tanh %208 : vector<2x16xf32>
    %210 = arith.mulf %203, %209 : vector<2x16xf32>
    %211 = vector.broadcast %165 : i32 to vector<2x1xi32>
    %212 = arith.cmpi slt, %211, %9 : vector<2x1xi32>
    %213 = vector.broadcast %166 : i32 to vector<2x1xi32>
    %214 = arith.cmpi slt, %213, %9 : vector<2x1xi32>
    %215 = vector.shape_cast %212 : vector<2x1xi1> to vector<2x1xi1>
    %216 = vector.broadcast %215 : vector<2x1xi1> to vector<2x16xi1>
    %217 = arith.select %216, %186, %141 : vector<2x16xi1>, vector<2x16xf32>
    %218 = vector.shape_cast %212 : vector<2x1xi1> to vector<2x1xi1>
    %219 = vector.broadcast %218 : vector<2x1xi1> to vector<2x16xi1>
    %220 = arith.select %219, %188, %144 : vector<2x16xi1>, vector<2x16xf32>
    %221 = vector.shape_cast %214 : vector<2x1xi1> to vector<2x1xi1>
    %222 = vector.broadcast %221 : vector<2x1xi1> to vector<2x16xi1>
    %223 = arith.select %222, %208, %147 : vector<2x16xi1>, vector<2x16xf32>
    %224 = vector.shape_cast %214 : vector<2x1xi1> to vector<2x1xi1>
    %225 = vector.broadcast %224 : vector<2x1xi1> to vector<2x16xi1>
    %226 = arith.select %225, %210, %150 : vector<2x16xi1>, vector<2x16xf32>
    %cst_57 = arith.constant 0.000000e+00 : f32
    %227 = vector.shape_cast %212 : vector<2x1xi1> to vector<2x1xi1>
    %228 = vector.broadcast %227 : vector<2x1xi1> to vector<2x16xi1>
    %229 = vector.broadcast %cst_57 : f32 to vector<2x16xf32>
    %230 = arith.select %228, %188, %229 : vector<2x16xi1>, vector<2x16xf32>
    %c2_58 = arith.constant 2 : index
    %c0_59 = arith.constant 0 : index
    %c0_60 = arith.constant 0 : index
    %231 = vector.load %arg6[%c2_58, %c0_59, %c0_60] : memref<8x2x16xf32, #tpu.memory_space<vmem>>, vector<1x2x16xf32>
    %232 = vector.shape_cast %231 : vector<1x2x16xf32> to vector<2x16xf32>
    %233 = vector.shape_cast %230 : vector<2x16xf32> to vector<1x2x16xf32>
    tpu.vector_store %arg6[%c2_58, %c0_59, %c0_60], %233 {strides = array<i32>} : memref<8x2x16xf32, #tpu.memory_space<vmem>>, vector<1x2x16xf32>,
    %cst_61 = arith.constant 0.000000e+00 : f32
    %234 = vector.shape_cast %214 : vector<2x1xi1> to vector<2x1xi1>
    %235 = vector.broadcast %234 : vector<2x1xi1> to vector<2x16xi1>
    %236 = vector.broadcast %cst_61 : f32 to vector<2x16xf32>
    %237 = arith.select %235, %210, %236 : vector<2x16xi1>, vector<2x16xf32>
    %c5_62 = arith.constant 5 : index
    %c0_63 = arith.constant 0 : index
    %c0_64 = arith.constant 0 : index
    %238 = vector.load %arg7[%c5_62, %c0_63, %c0_64] : memref<8x2x16xf32, #tpu.memory_space<vmem>>, vector<1x2x16xf32>
    %239 = vector.shape_cast %238 : vector<1x2x16xf32> to vector<2x16xf32>
    %240 = vector.shape_cast %237 : vector<2x16xf32> to vector<1x2x16xf32>
    tpu.vector_store %arg7[%c5_62, %c0_63, %c0_64], %240 {strides = array<i32>} : memref<8x2x16xf32, #tpu.memory_space<vmem>>, vector<1x2x16xf32>,
    %c3_i32 = arith.constant 3 : i32
    %241 = arith.addi %10, %c3_i32 : i32
    %c4_i32 = arith.constant 4 : i32
    %242 = arith.addi %12, %c4_i32 : i32
    %c0_65 = arith.constant 0 : index
    %c3 = arith.constant 3 : index
    %c0_66 = arith.constant 0 : index
    %243 = vector.load %arg1[%c0_65, %c3, %c0_66] : memref<2x8x64xbf16, #tpu.memory_space<vmem>>, vector<2x1x64xbf16>
    %244 = vector.shape_cast %243 : vector<2x1x64xbf16> to vector<2x64xbf16>
    %245 = arith.extf %244 : vector<2x64xbf16> to vector<2x64xf32>
    %246 = arith.truncf %220 : vector<2x16xf32> to vector<2x16xbf16>
    %cst_67 = arith.constant dense<0.000000e+00> : vector<2x64xf32>
    %247 = tpu.matmul %246, %7, %cst_67 {dimension_numbers = #tpu.dot_dimension_numbers<[1], [0], [0], [1], [0, 0, 1, 1], [], []>} : vector<2x16xbf16>, vector<16x64xbf16>, vector<2x64xf32> -> vector<2x64xf32>
    %248 = arith.addf %245, %247 : vector<2x64xf32>
    %249 = vector.extract_strided_slice %248 {offsets = [0, 0], sizes = [2, 48], strides = [1, 1]} : vector<2x64xf32> to vector<2x48xf32>
    %250 = arith.negf %249 : vector<2x48xf32>
    %251 = math.exp %250 : vector<2x48xf32>
    %cst_68 = arith.constant 1.000000e+00 : f32
    %252 = vector.broadcast %cst_68 : f32 to vector<2x48xf32>
    %253 = arith.addf %252, %251 : vector<2x48xf32>
    %254 = arith.divf %252, %253 : vector<2x48xf32>
    %255 = vector.extract_strided_slice %254 {offsets = [0, 0], sizes = [2, 16], strides = [1, 1]} : vector<2x48xf32> to vector<2x16xf32>
    %256 = vector.extract_strided_slice %254 {offsets = [0, 16], sizes = [2, 16], strides = [1, 1]} : vector<2x48xf32> to vector<2x16xf32>
    %257 = vector.extract_strided_slice %254 {offsets = [0, 32], sizes = [2, 16], strides = [1, 1]} : vector<2x48xf32> to vector<2x16xf32>
    %258 = vector.extract_strided_slice %248 {offsets = [0, 48], sizes = [2, 16], strides = [1, 1]} : vector<2x64xf32> to vector<2x16xf32>
    %259 = math.tanh %258 : vector<2x16xf32>
    %260 = arith.mulf %256, %217 : vector<2x16xf32>
    %261 = arith.mulf %255, %259 : vector<2x16xf32>
    %262 = arith.addf %260, %261 : vector<2x16xf32>
    %263 = math.tanh %262 : vector<2x16xf32>
    %264 = arith.mulf %257, %263 : vector<2x16xf32>
    %c0_69 = arith.constant 0 : index
    %c4 = arith.constant 4 : index
    %c0_70 = arith.constant 0 : index
    %265 = vector.load %arg2[%c0_69, %c4, %c0_70] : memref<2x8x64xbf16, #tpu.memory_space<vmem>>, vector<2x1x64xbf16>
    %266 = vector.shape_cast %265 : vector<2x1x64xbf16> to vector<2x64xbf16>
    %267 = arith.extf %266 : vector<2x64xbf16> to vector<2x64xf32>
    %268 = arith.truncf %226 : vector<2x16xf32> to vector<2x16xbf16>
    %cst_71 = arith.constant dense<0.000000e+00> : vector<2x64xf32>
    %269 = tpu.matmul %268, %8, %cst_71 {dimension_numbers = #tpu.dot_dimension_numbers<[1], [0], [0], [1], [0, 0, 1, 1], [], []>} : vector<2x16xbf16>, vector<16x64xbf16>, vector<2x64xf32> -> vector<2x64xf32>
    %270 = arith.addf %267, %269 : vector<2x64xf32>
    %271 = vector.extract_strided_slice %270 {offsets = [0, 0], sizes = [2, 48], strides = [1, 1]} : vector<2x64xf32> to vector<2x48xf32>
    %272 = arith.negf %271 : vector<2x48xf32>
    %273 = math.exp %272 : vector<2x48xf32>
    %cst_72 = arith.constant 1.000000e+00 : f32
    %274 = vector.broadcast %cst_72 : f32 to vector<2x48xf32>
    %275 = arith.addf %274, %273 : vector<2x48xf32>
    %276 = arith.divf %274, %275 : vector<2x48xf32>
    %277 = vector.extract_strided_slice %276 {offsets = [0, 0], sizes = [2, 16], strides = [1, 1]} : vector<2x48xf32> to vector<2x16xf32>
    %278 = vector.extract_strided_slice %276 {offsets = [0, 16], sizes = [2, 16], strides = [1, 1]} : vector<2x48xf32> to vector<2x16xf32>
    %279 = vector.extract_strided_slice %276 {offsets = [0, 32], sizes = [2, 16], strides = [1, 1]} : vector<2x48xf32> to vector<2x16xf32>
    %280 = vector.extract_strided_slice %270 {offsets = [0, 48], sizes = [2, 16], strides = [1, 1]} : vector<2x64xf32> to vector<2x16xf32>
    %281 = math.tanh %280 : vector<2x16xf32>
    %282 = arith.mulf %278, %223 : vector<2x16xf32>
    %283 = arith.mulf %277, %281 : vector<2x16xf32>
    %284 = arith.addf %282, %283 : vector<2x16xf32>
    %285 = math.tanh %284 : vector<2x16xf32>
    %286 = arith.mulf %279, %285 : vector<2x16xf32>
    %287 = vector.broadcast %241 : i32 to vector<2x1xi32>
    %288 = arith.cmpi slt, %287, %9 : vector<2x1xi32>
    %289 = vector.broadcast %242 : i32 to vector<2x1xi32>
    %290 = arith.cmpi slt, %289, %9 : vector<2x1xi32>
    %291 = vector.shape_cast %288 : vector<2x1xi1> to vector<2x1xi1>
    %292 = vector.broadcast %291 : vector<2x1xi1> to vector<2x16xi1>
    %293 = arith.select %292, %262, %217 : vector<2x16xi1>, vector<2x16xf32>
    %294 = vector.shape_cast %288 : vector<2x1xi1> to vector<2x1xi1>
    %295 = vector.broadcast %294 : vector<2x1xi1> to vector<2x16xi1>
    %296 = arith.select %295, %264, %220 : vector<2x16xi1>, vector<2x16xf32>
    %297 = vector.shape_cast %290 : vector<2x1xi1> to vector<2x1xi1>
    %298 = vector.broadcast %297 : vector<2x1xi1> to vector<2x16xi1>
    %299 = arith.select %298, %284, %223 : vector<2x16xi1>, vector<2x16xf32>
    %300 = vector.shape_cast %290 : vector<2x1xi1> to vector<2x1xi1>
    %301 = vector.broadcast %300 : vector<2x1xi1> to vector<2x16xi1>
    %302 = arith.select %301, %286, %226 : vector<2x16xi1>, vector<2x16xf32>
    %cst_73 = arith.constant 0.000000e+00 : f32
    %303 = vector.shape_cast %288 : vector<2x1xi1> to vector<2x1xi1>
    %304 = vector.broadcast %303 : vector<2x1xi1> to vector<2x16xi1>
    %305 = vector.broadcast %cst_73 : f32 to vector<2x16xf32>
    %306 = arith.select %304, %264, %305 : vector<2x16xi1>, vector<2x16xf32>
    %c3_74 = arith.constant 3 : index
    %c0_75 = arith.constant 0 : index
    %c0_76 = arith.constant 0 : index
    %307 = vector.load %arg6[%c3_74, %c0_75, %c0_76] : memref<8x2x16xf32, #tpu.memory_space<vmem>>, vector<1x2x16xf32>
    %308 = vector.shape_cast %307 : vector<1x2x16xf32> to vector<2x16xf32>
    %309 = vector.shape_cast %306 : vector<2x16xf32> to vector<1x2x16xf32>
    tpu.vector_store %arg6[%c3_74, %c0_75, %c0_76], %309 {strides = array<i32>} : memref<8x2x16xf32, #tpu.memory_space<vmem>>, vector<1x2x16xf32>,
    %cst_77 = arith.constant 0.000000e+00 : f32
    %310 = vector.shape_cast %290 : vector<2x1xi1> to vector<2x1xi1>
    %311 = vector.broadcast %310 : vector<2x1xi1> to vector<2x16xi1>
    %312 = vector.broadcast %cst_77 : f32 to vector<2x16xf32>
    %313 = arith.select %311, %286, %312 : vector<2x16xi1>, vector<2x16xf32>
    %c4_78 = arith.constant 4 : index
    %c0_79 = arith.constant 0 : index
    %c0_80 = arith.constant 0 : index
    %314 = vector.load %arg7[%c4_78, %c0_79, %c0_80] : memref<8x2x16xf32, #tpu.memory_space<vmem>>, vector<1x2x16xf32>
    %315 = vector.shape_cast %314 : vector<1x2x16xf32> to vector<2x16xf32>
    %316 = vector.shape_cast %313 : vector<2x16xf32> to vector<1x2x16xf32>
    tpu.vector_store %arg7[%c4_78, %c0_79, %c0_80], %316 {strides = array<i32>} : memref<8x2x16xf32, #tpu.memory_space<vmem>>, vector<1x2x16xf32>,
    %c4_i32_81 = arith.constant 4 : i32
    %317 = arith.addi %10, %c4_i32_81 : i32
    %c3_i32_82 = arith.constant 3 : i32
    %318 = arith.addi %12, %c3_i32_82 : i32
    %c0_83 = arith.constant 0 : index
    %c4_84 = arith.constant 4 : index
    %c0_85 = arith.constant 0 : index
    %319 = vector.load %arg1[%c0_83, %c4_84, %c0_85] : memref<2x8x64xbf16, #tpu.memory_space<vmem>>, vector<2x1x64xbf16>
    %320 = vector.shape_cast %319 : vector<2x1x64xbf16> to vector<2x64xbf16>
    %321 = arith.extf %320 : vector<2x64xbf16> to vector<2x64xf32>
    %322 = arith.truncf %296 : vector<2x16xf32> to vector<2x16xbf16>
    %cst_86 = arith.constant dense<0.000000e+00> : vector<2x64xf32>
    %323 = tpu.matmul %322, %7, %cst_86 {dimension_numbers = #tpu.dot_dimension_numbers<[1], [0], [0], [1], [0, 0, 1, 1], [], []>} : vector<2x16xbf16>, vector<16x64xbf16>, vector<2x64xf32> -> vector<2x64xf32>
    %324 = arith.addf %321, %323 : vector<2x64xf32>
    %325 = vector.extract_strided_slice %324 {offsets = [0, 0], sizes = [2, 48], strides = [1, 1]} : vector<2x64xf32> to vector<2x48xf32>
    %326 = arith.negf %325 : vector<2x48xf32>
    %327 = math.exp %326 : vector<2x48xf32>
    %cst_87 = arith.constant 1.000000e+00 : f32
    %328 = vector.broadcast %cst_87 : f32 to vector<2x48xf32>
    %329 = arith.addf %328, %327 : vector<2x48xf32>
    %330 = arith.divf %328, %329 : vector<2x48xf32>
    %331 = vector.extract_strided_slice %330 {offsets = [0, 0], sizes = [2, 16], strides = [1, 1]} : vector<2x48xf32> to vector<2x16xf32>
    %332 = vector.extract_strided_slice %330 {offsets = [0, 16], sizes = [2, 16], strides = [1, 1]} : vector<2x48xf32> to vector<2x16xf32>
    %333 = vector.extract_strided_slice %330 {offsets = [0, 32], sizes = [2, 16], strides = [1, 1]} : vector<2x48xf32> to vector<2x16xf32>
    %334 = vector.extract_strided_slice %324 {offsets = [0, 48], sizes = [2, 16], strides = [1, 1]} : vector<2x64xf32> to vector<2x16xf32>
    %335 = math.tanh %334 : vector<2x16xf32>
    %336 = arith.mulf %332, %293 : vector<2x16xf32>
    %337 = arith.mulf %331, %335 : vector<2x16xf32>
    %338 = arith.addf %336, %337 : vector<2x16xf32>
    %339 = math.tanh %338 : vector<2x16xf32>
    %340 = arith.mulf %333, %339 : vector<2x16xf32>
    %c0_88 = arith.constant 0 : index
    %c3_89 = arith.constant 3 : index
    %c0_90 = arith.constant 0 : index
    %341 = vector.load %arg2[%c0_88, %c3_89, %c0_90] : memref<2x8x64xbf16, #tpu.memory_space<vmem>>, vector<2x1x64xbf16>
    %342 = vector.shape_cast %341 : vector<2x1x64xbf16> to vector<2x64xbf16>
    %343 = arith.extf %342 : vector<2x64xbf16> to vector<2x64xf32>
    %344 = arith.truncf %302 : vector<2x16xf32> to vector<2x16xbf16>
    %cst_91 = arith.constant dense<0.000000e+00> : vector<2x64xf32>
    %345 = tpu.matmul %344, %8, %cst_91 {dimension_numbers = #tpu.dot_dimension_numbers<[1], [0], [0], [1], [0, 0, 1, 1], [], []>} : vector<2x16xbf16>, vector<16x64xbf16>, vector<2x64xf32> -> vector<2x64xf32>
    %346 = arith.addf %343, %345 : vector<2x64xf32>
    %347 = vector.extract_strided_slice %346 {offsets = [0, 0], sizes = [2, 48], strides = [1, 1]} : vector<2x64xf32> to vector<2x48xf32>
    %348 = arith.negf %347 : vector<2x48xf32>
    %349 = math.exp %348 : vector<2x48xf32>
    %cst_92 = arith.constant 1.000000e+00 : f32
    %350 = vector.broadcast %cst_92 : f32 to vector<2x48xf32>
    %351 = arith.addf %350, %349 : vector<2x48xf32>
    %352 = arith.divf %350, %351 : vector<2x48xf32>
    %353 = vector.extract_strided_slice %352 {offsets = [0, 0], sizes = [2, 16], strides = [1, 1]} : vector<2x48xf32> to vector<2x16xf32>
    %354 = vector.extract_strided_slice %352 {offsets = [0, 16], sizes = [2, 16], strides = [1, 1]} : vector<2x48xf32> to vector<2x16xf32>
    %355 = vector.extract_strided_slice %352 {offsets = [0, 32], sizes = [2, 16], strides = [1, 1]} : vector<2x48xf32> to vector<2x16xf32>
    %356 = vector.extract_strided_slice %346 {offsets = [0, 48], sizes = [2, 16], strides = [1, 1]} : vector<2x64xf32> to vector<2x16xf32>
    %357 = math.tanh %356 : vector<2x16xf32>
    %358 = arith.mulf %354, %299 : vector<2x16xf32>
    %359 = arith.mulf %353, %357 : vector<2x16xf32>
    %360 = arith.addf %358, %359 : vector<2x16xf32>
    %361 = math.tanh %360 : vector<2x16xf32>
    %362 = arith.mulf %355, %361 : vector<2x16xf32>
    %363 = vector.broadcast %317 : i32 to vector<2x1xi32>
    %364 = arith.cmpi slt, %363, %9 : vector<2x1xi32>
    %365 = vector.broadcast %318 : i32 to vector<2x1xi32>
    %366 = arith.cmpi slt, %365, %9 : vector<2x1xi32>
    %367 = vector.shape_cast %364 : vector<2x1xi1> to vector<2x1xi1>
    %368 = vector.broadcast %367 : vector<2x1xi1> to vector<2x16xi1>
    %369 = arith.select %368, %338, %293 : vector<2x16xi1>, vector<2x16xf32>
    %370 = vector.shape_cast %364 : vector<2x1xi1> to vector<2x1xi1>
    %371 = vector.broadcast %370 : vector<2x1xi1> to vector<2x16xi1>
    %372 = arith.select %371, %340, %296 : vector<2x16xi1>, vector<2x16xf32>
    %373 = vector.shape_cast %366 : vector<2x1xi1> to vector<2x1xi1>
    %374 = vector.broadcast %373 : vector<2x1xi1> to vector<2x16xi1>
    %375 = arith.select %374, %360, %299 : vector<2x16xi1>, vector<2x16xf32>
    %376 = vector.shape_cast %366 : vector<2x1xi1> to vector<2x1xi1>
    %377 = vector.broadcast %376 : vector<2x1xi1> to vector<2x16xi1>
    %378 = arith.select %377, %362, %302 : vector<2x16xi1>, vector<2x16xf32>
    %cst_93 = arith.constant 0.000000e+00 : f32
    %379 = vector.shape_cast %364 : vector<2x1xi1> to vector<2x1xi1>
    %380 = vector.broadcast %379 : vector<2x1xi1> to vector<2x16xi1>
    %381 = vector.broadcast %cst_93 : f32 to vector<2x16xf32>
    %382 = arith.select %380, %340, %381 : vector<2x16xi1>, vector<2x16xf32>
    %c4_94 = arith.constant 4 : index
    %c0_95 = arith.constant 0 : index
    %c0_96 = arith.constant 0 : index
    %383 = vector.load %arg6[%c4_94, %c0_95, %c0_96] : memref<8x2x16xf32, #tpu.memory_space<vmem>>, vector<1x2x16xf32>
    %384 = vector.shape_cast %383 : vector<1x2x16xf32> to vector<2x16xf32>
    %385 = vector.shape_cast %382 : vector<2x16xf32> to vector<1x2x16xf32>
    tpu.vector_store %arg6[%c4_94, %c0_95, %c0_96], %385 {strides = array<i32>} : memref<8x2x16xf32, #tpu.memory_space<vmem>>, vector<1x2x16xf32>,
    %cst_97 = arith.constant 0.000000e+00 : f32
    %386 = vector.shape_cast %366 : vector<2x1xi1> to vector<2x1xi1>
    %387 = vector.broadcast %386 : vector<2x1xi1> to vector<2x16xi1>
    %388 = vector.broadcast %cst_97 : f32 to vector<2x16xf32>
    %389 = arith.select %387, %362, %388 : vector<2x16xi1>, vector<2x16xf32>
    %c3_98 = arith.constant 3 : index
    %c0_99 = arith.constant 0 : index
    %c0_100 = arith.constant 0 : index
    %390 = vector.load %arg7[%c3_98, %c0_99, %c0_100] : memref<8x2x16xf32, #tpu.memory_space<vmem>>, vector<1x2x16xf32>
    %391 = vector.shape_cast %390 : vector<1x2x16xf32> to vector<2x16xf32>
    %392 = vector.shape_cast %389 : vector<2x16xf32> to vector<1x2x16xf32>
    tpu.vector_store %arg7[%c3_98, %c0_99, %c0_100], %392 {strides = array<i32>} : memref<8x2x16xf32, #tpu.memory_space<vmem>>, vector<1x2x16xf32>,
    %c5_i32_101 = arith.constant 5 : i32
    %393 = arith.addi %10, %c5_i32_101 : i32
    %c2_i32_102 = arith.constant 2 : i32
    %394 = arith.addi %12, %c2_i32_102 : i32
    %c0_103 = arith.constant 0 : index
    %c5_104 = arith.constant 5 : index
    %c0_105 = arith.constant 0 : index
    %395 = vector.load %arg1[%c0_103, %c5_104, %c0_105] : memref<2x8x64xbf16, #tpu.memory_space<vmem>>, vector<2x1x64xbf16>
    %396 = vector.shape_cast %395 : vector<2x1x64xbf16> to vector<2x64xbf16>
    %397 = arith.extf %396 : vector<2x64xbf16> to vector<2x64xf32>
    %398 = arith.truncf %372 : vector<2x16xf32> to vector<2x16xbf16>
    %cst_106 = arith.constant dense<0.000000e+00> : vector<2x64xf32>
    %399 = tpu.matmul %398, %7, %cst_106 {dimension_numbers = #tpu.dot_dimension_numbers<[1], [0], [0], [1], [0, 0, 1, 1], [], []>} : vector<2x16xbf16>, vector<16x64xbf16>, vector<2x64xf32> -> vector<2x64xf32>
    %400 = arith.addf %397, %399 : vector<2x64xf32>
    %401 = vector.extract_strided_slice %400 {offsets = [0, 0], sizes = [2, 48], strides = [1, 1]} : vector<2x64xf32> to vector<2x48xf32>
    %402 = arith.negf %401 : vector<2x48xf32>
    %403 = math.exp %402 : vector<2x48xf32>
    %cst_107 = arith.constant 1.000000e+00 : f32
    %404 = vector.broadcast %cst_107 : f32 to vector<2x48xf32>
    %405 = arith.addf %404, %403 : vector<2x48xf32>
    %406 = arith.divf %404, %405 : vector<2x48xf32>
    %407 = vector.extract_strided_slice %406 {offsets = [0, 0], sizes = [2, 16], strides = [1, 1]} : vector<2x48xf32> to vector<2x16xf32>
    %408 = vector.extract_strided_slice %406 {offsets = [0, 16], sizes = [2, 16], strides = [1, 1]} : vector<2x48xf32> to vector<2x16xf32>
    %409 = vector.extract_strided_slice %406 {offsets = [0, 32], sizes = [2, 16], strides = [1, 1]} : vector<2x48xf32> to vector<2x16xf32>
    %410 = vector.extract_strided_slice %400 {offsets = [0, 48], sizes = [2, 16], strides = [1, 1]} : vector<2x64xf32> to vector<2x16xf32>
    %411 = math.tanh %410 : vector<2x16xf32>
    %412 = arith.mulf %408, %369 : vector<2x16xf32>
    %413 = arith.mulf %407, %411 : vector<2x16xf32>
    %414 = arith.addf %412, %413 : vector<2x16xf32>
    %415 = math.tanh %414 : vector<2x16xf32>
    %416 = arith.mulf %409, %415 : vector<2x16xf32>
    %c0_108 = arith.constant 0 : index
    %c2_109 = arith.constant 2 : index
    %c0_110 = arith.constant 0 : index
    %417 = vector.load %arg2[%c0_108, %c2_109, %c0_110] : memref<2x8x64xbf16, #tpu.memory_space<vmem>>, vector<2x1x64xbf16>
    %418 = vector.shape_cast %417 : vector<2x1x64xbf16> to vector<2x64xbf16>
    %419 = arith.extf %418 : vector<2x64xbf16> to vector<2x64xf32>
    %420 = arith.truncf %378 : vector<2x16xf32> to vector<2x16xbf16>
    %cst_111 = arith.constant dense<0.000000e+00> : vector<2x64xf32>
    %421 = tpu.matmul %420, %8, %cst_111 {dimension_numbers = #tpu.dot_dimension_numbers<[1], [0], [0], [1], [0, 0, 1, 1], [], []>} : vector<2x16xbf16>, vector<16x64xbf16>, vector<2x64xf32> -> vector<2x64xf32>
    %422 = arith.addf %419, %421 : vector<2x64xf32>
    %423 = vector.extract_strided_slice %422 {offsets = [0, 0], sizes = [2, 48], strides = [1, 1]} : vector<2x64xf32> to vector<2x48xf32>
    %424 = arith.negf %423 : vector<2x48xf32>
    %425 = math.exp %424 : vector<2x48xf32>
    %cst_112 = arith.constant 1.000000e+00 : f32
    %426 = vector.broadcast %cst_112 : f32 to vector<2x48xf32>
    %427 = arith.addf %426, %425 : vector<2x48xf32>
    %428 = arith.divf %426, %427 : vector<2x48xf32>
    %429 = vector.extract_strided_slice %428 {offsets = [0, 0], sizes = [2, 16], strides = [1, 1]} : vector<2x48xf32> to vector<2x16xf32>
    %430 = vector.extract_strided_slice %428 {offsets = [0, 16], sizes = [2, 16], strides = [1, 1]} : vector<2x48xf32> to vector<2x16xf32>
    %431 = vector.extract_strided_slice %428 {offsets = [0, 32], sizes = [2, 16], strides = [1, 1]} : vector<2x48xf32> to vector<2x16xf32>
    %432 = vector.extract_strided_slice %422 {offsets = [0, 48], sizes = [2, 16], strides = [1, 1]} : vector<2x64xf32> to vector<2x16xf32>
    %433 = math.tanh %432 : vector<2x16xf32>
    %434 = arith.mulf %430, %375 : vector<2x16xf32>
    %435 = arith.mulf %429, %433 : vector<2x16xf32>
    %436 = arith.addf %434, %435 : vector<2x16xf32>
    %437 = math.tanh %436 : vector<2x16xf32>
    %438 = arith.mulf %431, %437 : vector<2x16xf32>
    %439 = vector.broadcast %393 : i32 to vector<2x1xi32>
    %440 = arith.cmpi slt, %439, %9 : vector<2x1xi32>
    %441 = vector.broadcast %394 : i32 to vector<2x1xi32>
    %442 = arith.cmpi slt, %441, %9 : vector<2x1xi32>
    %443 = vector.shape_cast %440 : vector<2x1xi1> to vector<2x1xi1>
    %444 = vector.broadcast %443 : vector<2x1xi1> to vector<2x16xi1>
    %445 = arith.select %444, %414, %369 : vector<2x16xi1>, vector<2x16xf32>
    %446 = vector.shape_cast %440 : vector<2x1xi1> to vector<2x1xi1>
    %447 = vector.broadcast %446 : vector<2x1xi1> to vector<2x16xi1>
    %448 = arith.select %447, %416, %372 : vector<2x16xi1>, vector<2x16xf32>
    %449 = vector.shape_cast %442 : vector<2x1xi1> to vector<2x1xi1>
    %450 = vector.broadcast %449 : vector<2x1xi1> to vector<2x16xi1>
    %451 = arith.select %450, %436, %375 : vector<2x16xi1>, vector<2x16xf32>
    %452 = vector.shape_cast %442 : vector<2x1xi1> to vector<2x1xi1>
    %453 = vector.broadcast %452 : vector<2x1xi1> to vector<2x16xi1>
    %454 = arith.select %453, %438, %378 : vector<2x16xi1>, vector<2x16xf32>
    %cst_113 = arith.constant 0.000000e+00 : f32
    %455 = vector.shape_cast %440 : vector<2x1xi1> to vector<2x1xi1>
    %456 = vector.broadcast %455 : vector<2x1xi1> to vector<2x16xi1>
    %457 = vector.broadcast %cst_113 : f32 to vector<2x16xf32>
    %458 = arith.select %456, %416, %457 : vector<2x16xi1>, vector<2x16xf32>
    %c5_114 = arith.constant 5 : index
    %c0_115 = arith.constant 0 : index
    %c0_116 = arith.constant 0 : index
    %459 = vector.load %arg6[%c5_114, %c0_115, %c0_116] : memref<8x2x16xf32, #tpu.memory_space<vmem>>, vector<1x2x16xf32>
    %460 = vector.shape_cast %459 : vector<1x2x16xf32> to vector<2x16xf32>
    %461 = vector.shape_cast %458 : vector<2x16xf32> to vector<1x2x16xf32>
    tpu.vector_store %arg6[%c5_114, %c0_115, %c0_116], %461 {strides = array<i32>} : memref<8x2x16xf32, #tpu.memory_space<vmem>>, vector<1x2x16xf32>,
    %cst_117 = arith.constant 0.000000e+00 : f32
    %462 = vector.shape_cast %442 : vector<2x1xi1> to vector<2x1xi1>
    %463 = vector.broadcast %462 : vector<2x1xi1> to vector<2x16xi1>
    %464 = vector.broadcast %cst_117 : f32 to vector<2x16xf32>
    %465 = arith.select %463, %438, %464 : vector<2x16xi1>, vector<2x16xf32>
    %c2_118 = arith.constant 2 : index
    %c0_119 = arith.constant 0 : index
    %c0_120 = arith.constant 0 : index
    %466 = vector.load %arg7[%c2_118, %c0_119, %c0_120] : memref<8x2x16xf32, #tpu.memory_space<vmem>>, vector<1x2x16xf32>
    %467 = vector.shape_cast %466 : vector<1x2x16xf32> to vector<2x16xf32>
    %468 = vector.shape_cast %465 : vector<2x16xf32> to vector<1x2x16xf32>
    tpu.vector_store %arg7[%c2_118, %c0_119, %c0_120], %468 {strides = array<i32>} : memref<8x2x16xf32, #tpu.memory_space<vmem>>, vector<1x2x16xf32>,
    %c6_i32_121 = arith.constant 6 : i32
    %469 = arith.addi %10, %c6_i32_121 : i32
    %c1_i32_122 = arith.constant 1 : i32
    %470 = arith.addi %12, %c1_i32_122 : i32
    %c0_123 = arith.constant 0 : index
    %c6_124 = arith.constant 6 : index
    %c0_125 = arith.constant 0 : index
    %471 = vector.load %arg1[%c0_123, %c6_124, %c0_125] : memref<2x8x64xbf16, #tpu.memory_space<vmem>>, vector<2x1x64xbf16>
    %472 = vector.shape_cast %471 : vector<2x1x64xbf16> to vector<2x64xbf16>
    %473 = arith.extf %472 : vector<2x64xbf16> to vector<2x64xf32>
    %474 = arith.truncf %448 : vector<2x16xf32> to vector<2x16xbf16>
    %cst_126 = arith.constant dense<0.000000e+00> : vector<2x64xf32>
    %475 = tpu.matmul %474, %7, %cst_126 {dimension_numbers = #tpu.dot_dimension_numbers<[1], [0], [0], [1], [0, 0, 1, 1], [], []>} : vector<2x16xbf16>, vector<16x64xbf16>, vector<2x64xf32> -> vector<2x64xf32>
    %476 = arith.addf %473, %475 : vector<2x64xf32>
    %477 = vector.extract_strided_slice %476 {offsets = [0, 0], sizes = [2, 48], strides = [1, 1]} : vector<2x64xf32> to vector<2x48xf32>
    %478 = arith.negf %477 : vector<2x48xf32>
    %479 = math.exp %478 : vector<2x48xf32>
    %cst_127 = arith.constant 1.000000e+00 : f32
    %480 = vector.broadcast %cst_127 : f32 to vector<2x48xf32>
    %481 = arith.addf %480, %479 : vector<2x48xf32>
    %482 = arith.divf %480, %481 : vector<2x48xf32>
    %483 = vector.extract_strided_slice %482 {offsets = [0, 0], sizes = [2, 16], strides = [1, 1]} : vector<2x48xf32> to vector<2x16xf32>
    %484 = vector.extract_strided_slice %482 {offsets = [0, 16], sizes = [2, 16], strides = [1, 1]} : vector<2x48xf32> to vector<2x16xf32>
    %485 = vector.extract_strided_slice %482 {offsets = [0, 32], sizes = [2, 16], strides = [1, 1]} : vector<2x48xf32> to vector<2x16xf32>
    %486 = vector.extract_strided_slice %476 {offsets = [0, 48], sizes = [2, 16], strides = [1, 1]} : vector<2x64xf32> to vector<2x16xf32>
    %487 = math.tanh %486 : vector<2x16xf32>
    %488 = arith.mulf %484, %445 : vector<2x16xf32>
    %489 = arith.mulf %483, %487 : vector<2x16xf32>
    %490 = arith.addf %488, %489 : vector<2x16xf32>
    %491 = math.tanh %490 : vector<2x16xf32>
    %492 = arith.mulf %485, %491 : vector<2x16xf32>
    %c0_128 = arith.constant 0 : index
    %c1_129 = arith.constant 1 : index
    %c0_130 = arith.constant 0 : index
    %493 = vector.load %arg2[%c0_128, %c1_129, %c0_130] : memref<2x8x64xbf16, #tpu.memory_space<vmem>>, vector<2x1x64xbf16>
    %494 = vector.shape_cast %493 : vector<2x1x64xbf16> to vector<2x64xbf16>
    %495 = arith.extf %494 : vector<2x64xbf16> to vector<2x64xf32>
    %496 = arith.truncf %454 : vector<2x16xf32> to vector<2x16xbf16>
    %cst_131 = arith.constant dense<0.000000e+00> : vector<2x64xf32>
    %497 = tpu.matmul %496, %8, %cst_131 {dimension_numbers = #tpu.dot_dimension_numbers<[1], [0], [0], [1], [0, 0, 1, 1], [], []>} : vector<2x16xbf16>, vector<16x64xbf16>, vector<2x64xf32> -> vector<2x64xf32>
    %498 = arith.addf %495, %497 : vector<2x64xf32>
    %499 = vector.extract_strided_slice %498 {offsets = [0, 0], sizes = [2, 48], strides = [1, 1]} : vector<2x64xf32> to vector<2x48xf32>
    %500 = arith.negf %499 : vector<2x48xf32>
    %501 = math.exp %500 : vector<2x48xf32>
    %cst_132 = arith.constant 1.000000e+00 : f32
    %502 = vector.broadcast %cst_132 : f32 to vector<2x48xf32>
    %503 = arith.addf %502, %501 : vector<2x48xf32>
    %504 = arith.divf %502, %503 : vector<2x48xf32>
    %505 = vector.extract_strided_slice %504 {offsets = [0, 0], sizes = [2, 16], strides = [1, 1]} : vector<2x48xf32> to vector<2x16xf32>
    %506 = vector.extract_strided_slice %504 {offsets = [0, 16], sizes = [2, 16], strides = [1, 1]} : vector<2x48xf32> to vector<2x16xf32>
    %507 = vector.extract_strided_slice %504 {offsets = [0, 32], sizes = [2, 16], strides = [1, 1]} : vector<2x48xf32> to vector<2x16xf32>
    %508 = vector.extract_strided_slice %498 {offsets = [0, 48], sizes = [2, 16], strides = [1, 1]} : vector<2x64xf32> to vector<2x16xf32>
    %509 = math.tanh %508 : vector<2x16xf32>
    %510 = arith.mulf %506, %451 : vector<2x16xf32>
    %511 = arith.mulf %505, %509 : vector<2x16xf32>
    %512 = arith.addf %510, %511 : vector<2x16xf32>
    %513 = math.tanh %512 : vector<2x16xf32>
    %514 = arith.mulf %507, %513 : vector<2x16xf32>
    %515 = vector.broadcast %469 : i32 to vector<2x1xi32>
    %516 = arith.cmpi slt, %515, %9 : vector<2x1xi32>
    %517 = vector.broadcast %470 : i32 to vector<2x1xi32>
    %518 = arith.cmpi slt, %517, %9 : vector<2x1xi32>
    %519 = vector.shape_cast %516 : vector<2x1xi1> to vector<2x1xi1>
    %520 = vector.broadcast %519 : vector<2x1xi1> to vector<2x16xi1>
    %521 = arith.select %520, %490, %445 : vector<2x16xi1>, vector<2x16xf32>
    %522 = vector.shape_cast %516 : vector<2x1xi1> to vector<2x1xi1>
    %523 = vector.broadcast %522 : vector<2x1xi1> to vector<2x16xi1>
    %524 = arith.select %523, %492, %448 : vector<2x16xi1>, vector<2x16xf32>
    %525 = vector.shape_cast %518 : vector<2x1xi1> to vector<2x1xi1>
    %526 = vector.broadcast %525 : vector<2x1xi1> to vector<2x16xi1>
    %527 = arith.select %526, %512, %451 : vector<2x16xi1>, vector<2x16xf32>
    %528 = vector.shape_cast %518 : vector<2x1xi1> to vector<2x1xi1>
    %529 = vector.broadcast %528 : vector<2x1xi1> to vector<2x16xi1>
    %530 = arith.select %529, %514, %454 : vector<2x16xi1>, vector<2x16xf32>
    %cst_133 = arith.constant 0.000000e+00 : f32
    %531 = vector.shape_cast %516 : vector<2x1xi1> to vector<2x1xi1>
    %532 = vector.broadcast %531 : vector<2x1xi1> to vector<2x16xi1>
    %533 = vector.broadcast %cst_133 : f32 to vector<2x16xf32>
    %534 = arith.select %532, %492, %533 : vector<2x16xi1>, vector<2x16xf32>
    %c6_134 = arith.constant 6 : index
    %c0_135 = arith.constant 0 : index
    %c0_136 = arith.constant 0 : index
    %535 = vector.load %arg6[%c6_134, %c0_135, %c0_136] : memref<8x2x16xf32, #tpu.memory_space<vmem>>, vector<1x2x16xf32>
    %536 = vector.shape_cast %535 : vector<1x2x16xf32> to vector<2x16xf32>
    %537 = vector.shape_cast %534 : vector<2x16xf32> to vector<1x2x16xf32>
    tpu.vector_store %arg6[%c6_134, %c0_135, %c0_136], %537 {strides = array<i32>} : memref<8x2x16xf32, #tpu.memory_space<vmem>>, vector<1x2x16xf32>,
    %cst_137 = arith.constant 0.000000e+00 : f32
    %538 = vector.shape_cast %518 : vector<2x1xi1> to vector<2x1xi1>
    %539 = vector.broadcast %538 : vector<2x1xi1> to vector<2x16xi1>
    %540 = vector.broadcast %cst_137 : f32 to vector<2x16xf32>
    %541 = arith.select %539, %514, %540 : vector<2x16xi1>, vector<2x16xf32>
    %c1_138 = arith.constant 1 : index
    %c0_139 = arith.constant 0 : index
    %c0_140 = arith.constant 0 : index
    %542 = vector.load %arg7[%c1_138, %c0_139, %c0_140] : memref<8x2x16xf32, #tpu.memory_space<vmem>>, vector<1x2x16xf32>
    %543 = vector.shape_cast %542 : vector<1x2x16xf32> to vector<2x16xf32>
    %544 = vector.shape_cast %541 : vector<2x16xf32> to vector<1x2x16xf32>
    tpu.vector_store %arg7[%c1_138, %c0_139, %c0_140], %544 {strides = array<i32>} : memref<8x2x16xf32, #tpu.memory_space<vmem>>, vector<1x2x16xf32>,
    %c7_i32_141 = arith.constant 7 : i32
    %545 = arith.addi %10, %c7_i32_141 : i32
    %c0_i32_142 = arith.constant 0 : i32
    %546 = arith.addi %12, %c0_i32_142 : i32
    %c0_143 = arith.constant 0 : index
    %c7_144 = arith.constant 7 : index
    %c0_145 = arith.constant 0 : index
    %547 = vector.load %arg1[%c0_143, %c7_144, %c0_145] : memref<2x8x64xbf16, #tpu.memory_space<vmem>>, vector<2x1x64xbf16>
    %548 = vector.shape_cast %547 : vector<2x1x64xbf16> to vector<2x64xbf16>
    %549 = arith.extf %548 : vector<2x64xbf16> to vector<2x64xf32>
    %550 = arith.truncf %524 : vector<2x16xf32> to vector<2x16xbf16>
    %cst_146 = arith.constant dense<0.000000e+00> : vector<2x64xf32>
    %551 = tpu.matmul %550, %7, %cst_146 {dimension_numbers = #tpu.dot_dimension_numbers<[1], [0], [0], [1], [0, 0, 1, 1], [], []>} : vector<2x16xbf16>, vector<16x64xbf16>, vector<2x64xf32> -> vector<2x64xf32>
    %552 = arith.addf %549, %551 : vector<2x64xf32>
    %553 = vector.extract_strided_slice %552 {offsets = [0, 0], sizes = [2, 48], strides = [1, 1]} : vector<2x64xf32> to vector<2x48xf32>
    %554 = arith.negf %553 : vector<2x48xf32>
    %555 = math.exp %554 : vector<2x48xf32>
    %cst_147 = arith.constant 1.000000e+00 : f32
    %556 = vector.broadcast %cst_147 : f32 to vector<2x48xf32>
    %557 = arith.addf %556, %555 : vector<2x48xf32>
    %558 = arith.divf %556, %557 : vector<2x48xf32>
    %559 = vector.extract_strided_slice %558 {offsets = [0, 0], sizes = [2, 16], strides = [1, 1]} : vector<2x48xf32> to vector<2x16xf32>
    %560 = vector.extract_strided_slice %558 {offsets = [0, 16], sizes = [2, 16], strides = [1, 1]} : vector<2x48xf32> to vector<2x16xf32>
    %561 = vector.extract_strided_slice %558 {offsets = [0, 32], sizes = [2, 16], strides = [1, 1]} : vector<2x48xf32> to vector<2x16xf32>
    %562 = vector.extract_strided_slice %552 {offsets = [0, 48], sizes = [2, 16], strides = [1, 1]} : vector<2x64xf32> to vector<2x16xf32>
    %563 = math.tanh %562 : vector<2x16xf32>
    %564 = arith.mulf %560, %521 : vector<2x16xf32>
    %565 = arith.mulf %559, %563 : vector<2x16xf32>
    %566 = arith.addf %564, %565 : vector<2x16xf32>
    %567 = math.tanh %566 : vector<2x16xf32>
    %568 = arith.mulf %561, %567 : vector<2x16xf32>
    %c0_148 = arith.constant 0 : index
    %c0_149 = arith.constant 0 : index
    %c0_150 = arith.constant 0 : index
    %569 = vector.load %arg2[%c0_148, %c0_149, %c0_150] : memref<2x8x64xbf16, #tpu.memory_space<vmem>>, vector<2x1x64xbf16>
    %570 = vector.shape_cast %569 : vector<2x1x64xbf16> to vector<2x64xbf16>
    %571 = arith.extf %570 : vector<2x64xbf16> to vector<2x64xf32>
    %572 = arith.truncf %530 : vector<2x16xf32> to vector<2x16xbf16>
    %cst_151 = arith.constant dense<0.000000e+00> : vector<2x64xf32>
    %573 = tpu.matmul %572, %8, %cst_151 {dimension_numbers = #tpu.dot_dimension_numbers<[1], [0], [0], [1], [0, 0, 1, 1], [], []>} : vector<2x16xbf16>, vector<16x64xbf16>, vector<2x64xf32> -> vector<2x64xf32>
    %574 = arith.addf %571, %573 : vector<2x64xf32>
    %575 = vector.extract_strided_slice %574 {offsets = [0, 0], sizes = [2, 48], strides = [1, 1]} : vector<2x64xf32> to vector<2x48xf32>
    %576 = arith.negf %575 : vector<2x48xf32>
    %577 = math.exp %576 : vector<2x48xf32>
    %cst_152 = arith.constant 1.000000e+00 : f32
    %578 = vector.broadcast %cst_152 : f32 to vector<2x48xf32>
    %579 = arith.addf %578, %577 : vector<2x48xf32>
    %580 = arith.divf %578, %579 : vector<2x48xf32>
    %581 = vector.extract_strided_slice %580 {offsets = [0, 0], sizes = [2, 16], strides = [1, 1]} : vector<2x48xf32> to vector<2x16xf32>
    %582 = vector.extract_strided_slice %580 {offsets = [0, 16], sizes = [2, 16], strides = [1, 1]} : vector<2x48xf32> to vector<2x16xf32>
    %583 = vector.extract_strided_slice %580 {offsets = [0, 32], sizes = [2, 16], strides = [1, 1]} : vector<2x48xf32> to vector<2x16xf32>
    %584 = vector.extract_strided_slice %574 {offsets = [0, 48], sizes = [2, 16], strides = [1, 1]} : vector<2x64xf32> to vector<2x16xf32>
    %585 = math.tanh %584 : vector<2x16xf32>
    %586 = arith.mulf %582, %527 : vector<2x16xf32>
    %587 = arith.mulf %581, %585 : vector<2x16xf32>
    %588 = arith.addf %586, %587 : vector<2x16xf32>
    %589 = math.tanh %588 : vector<2x16xf32>
    %590 = arith.mulf %583, %589 : vector<2x16xf32>
    %591 = vector.broadcast %545 : i32 to vector<2x1xi32>
    %592 = arith.cmpi slt, %591, %9 : vector<2x1xi32>
    %593 = vector.broadcast %546 : i32 to vector<2x1xi32>
    %594 = arith.cmpi slt, %593, %9 : vector<2x1xi32>
    %595 = vector.shape_cast %592 : vector<2x1xi1> to vector<2x1xi1>
    %596 = vector.broadcast %595 : vector<2x1xi1> to vector<2x16xi1>
    %597 = arith.select %596, %566, %521 : vector<2x16xi1>, vector<2x16xf32>
    %598 = vector.shape_cast %592 : vector<2x1xi1> to vector<2x1xi1>
    %599 = vector.broadcast %598 : vector<2x1xi1> to vector<2x16xi1>
    %600 = arith.select %599, %568, %524 : vector<2x16xi1>, vector<2x16xf32>
    %601 = vector.shape_cast %594 : vector<2x1xi1> to vector<2x1xi1>
    %602 = vector.broadcast %601 : vector<2x1xi1> to vector<2x16xi1>
    %603 = arith.select %602, %588, %527 : vector<2x16xi1>, vector<2x16xf32>
    %604 = vector.shape_cast %594 : vector<2x1xi1> to vector<2x1xi1>
    %605 = vector.broadcast %604 : vector<2x1xi1> to vector<2x16xi1>
    %606 = arith.select %605, %590, %530 : vector<2x16xi1>, vector<2x16xf32>
    %cst_153 = arith.constant 0.000000e+00 : f32
    %607 = vector.shape_cast %592 : vector<2x1xi1> to vector<2x1xi1>
    %608 = vector.broadcast %607 : vector<2x1xi1> to vector<2x16xi1>
    %609 = vector.broadcast %cst_153 : f32 to vector<2x16xf32>
    %610 = arith.select %608, %568, %609 : vector<2x16xi1>, vector<2x16xf32>
    %c7_154 = arith.constant 7 : index
    %c0_155 = arith.constant 0 : index
    %c0_156 = arith.constant 0 : index
    %611 = vector.load %arg6[%c7_154, %c0_155, %c0_156] : memref<8x2x16xf32, #tpu.memory_space<vmem>>, vector<1x2x16xf32>
    %612 = vector.shape_cast %611 : vector<1x2x16xf32> to vector<2x16xf32>
    %613 = vector.shape_cast %610 : vector<2x16xf32> to vector<1x2x16xf32>
    tpu.vector_store %arg6[%c7_154, %c0_155, %c0_156], %613 {strides = array<i32>} : memref<8x2x16xf32, #tpu.memory_space<vmem>>, vector<1x2x16xf32>,
    %cst_157 = arith.constant 0.000000e+00 : f32
    %614 = vector.shape_cast %594 : vector<2x1xi1> to vector<2x1xi1>
    %615 = vector.broadcast %614 : vector<2x1xi1> to vector<2x16xi1>
    %616 = vector.broadcast %cst_157 : f32 to vector<2x16xf32>
    %617 = arith.select %615, %590, %616 : vector<2x16xi1>, vector<2x16xf32>
    %c0_158 = arith.constant 0 : index
    %c0_159 = arith.constant 0 : index
    %c0_160 = arith.constant 0 : index
    %618 = vector.load %arg7[%c0_158, %c0_159, %c0_160] : memref<8x2x16xf32, #tpu.memory_space<vmem>>, vector<1x2x16xf32>
    %619 = vector.shape_cast %618 : vector<1x2x16xf32> to vector<2x16xf32>
    %620 = vector.shape_cast %617 : vector<2x16xf32> to vector<1x2x16xf32>
    tpu.vector_store %arg7[%c0_158, %c0_159, %c0_160], %620 {strides = array<i32>} : memref<8x2x16xf32, #tpu.memory_space<vmem>>, vector<1x2x16xf32>,
    %c0_161 = arith.constant 0 : index
    %c0_162 = arith.constant 0 : index
    %621 = vector.load %arg8[%c0_161, %c0_162] : memref<2x16xf32, #tpu.memory_space<vmem>>, vector<2x16xf32>
    tpu.vector_store %arg8[%c0_161, %c0_162], %600 {strides = array<i32>} : memref<2x16xf32, #tpu.memory_space<vmem>>, vector<2x16xf32>,
    %c0_163 = arith.constant 0 : index
    %c0_164 = arith.constant 0 : index
    %622 = vector.load %arg9[%c0_163, %c0_164] : memref<2x16xf32, #tpu.memory_space<vmem>>, vector<2x16xf32>
    tpu.vector_store %arg9[%c0_163, %c0_164], %597 {strides = array<i32>} : memref<2x16xf32, #tpu.memory_space<vmem>>, vector<2x16xf32>,
    %c0_165 = arith.constant 0 : index
    %c0_166 = arith.constant 0 : index
    %623 = vector.load %arg10[%c0_165, %c0_166] : memref<2x16xf32, #tpu.memory_space<vmem>>, vector<2x16xf32>
    tpu.vector_store %arg10[%c0_165, %c0_166], %606 {strides = array<i32>} : memref<2x16xf32, #tpu.memory_space<vmem>>, vector<2x16xf32>,
    %c0_167 = arith.constant 0 : index
    %c0_168 = arith.constant 0 : index
    %624 = vector.load %arg11[%c0_167, %c0_168] : memref<2x16xf32, #tpu.memory_space<vmem>>, vector<2x16xf32>
    tpu.vector_store %arg11[%c0_167, %c0_168], %603 {strides = array<i32>} : memref<2x16xf32, #tpu.memory_space<vmem>>, vector<2x16xf32>,
    return
  }
  func.func @transform_0(%arg0: i32) -> (i32, i32, i32) {
    %c0_i32 = arith.constant 0 : i32
    %c0_i32_0 = arith.constant 0 : i32
    %c0_i32_1 = arith.constant 0 : i32
    return %c0_i32, %arg0, %c0_i32_0 : i32, i32, i32
  }
  func.func @transform_1(%arg0: i32) -> (i32, i32, i32) {
    %c1_i32 = arith.constant 1 : i32
    %0 = arith.subi %c1_i32, %arg0 : i32
    %c0_i32 = arith.constant 0 : i32
    %c0_i32_0 = arith.constant 0 : i32
    %c0_i32_1 = arith.constant 0 : i32
    return %c0_i32, %0, %c0_i32_0 : i32, i32, i32
  }
  func.func @transform_2(%arg0: i32) -> (i32, i32) {
    %c0_i32 = arith.constant 0 : i32
    %c0_i32_0 = arith.constant 0 : i32
    %c0_i32_1 = arith.constant 0 : i32
    return %c0_i32, %c0_i32_0 : i32, i32
  }
  func.func @transform_3(%arg0: i32) -> (i32, i32) {
    %c0_i32 = arith.constant 0 : i32
    %c0_i32_0 = arith.constant 0 : i32
    %c0_i32_1 = arith.constant 0 : i32
    return %c0_i32, %c0_i32_0 : i32, i32
  }
  func.func @transform_4(%arg0: i32) -> (i32, i32) {
    %c0_i32 = arith.constant 0 : i32
    %c0_i32_0 = arith.constant 0 : i32
    %c0_i32_1 = arith.constant 0 : i32
    return %c0_i32, %c0_i32_0 : i32, i32
  }
  func.func @transform_5(%arg0: i32) -> (i32, i32, i32) {
    %c0_i32 = arith.constant 0 : i32
    %c0_i32_0 = arith.constant 0 : i32
    %c0_i32_1 = arith.constant 0 : i32
    return %arg0, %c0_i32, %c0_i32_0 : i32, i32, i32
  }
  func.func @transform_6(%arg0: i32) -> (i32, i32, i32) {
    %c1_i32 = arith.constant 1 : i32
    %0 = arith.subi %c1_i32, %arg0 : i32
    %c0_i32 = arith.constant 0 : i32
    %c0_i32_0 = arith.constant 0 : i32
    %c0_i32_1 = arith.constant 0 : i32
    return %0, %c0_i32, %c0_i32_0 : i32, i32, i32
  }
}

</mosaic_0001>

<llo_original>
// kernel: encoder_forward.2
$region0: #{encoder_forward.2}
  #allocation0 [shape = 'u32[]', space=smem, size = 0x4, offset = 0x4, fixed_abs, tag = 'smem constant byte address 0x4 - core index']
  #allocation1 [shape = 'u32[144,128]{1,0:T(1,128)}', space=vmem, size = 0x12000, scoped, tag = 'internal scratch']
  #allocation2 [shape = 'bf16[32,32]{1,0:T(8,128)(2,1)}', space=vmem, size = 0x2000, scoped, tag = 'scratch operand']
  %s0 = inlined_call_operand.vmem [shape: bf16[2,16,32], index: 0, kind: input, shape index: {}]
  %s1 = inlined_call_operand.vmem [shape: bf16[3,160,32], index: 1, kind: input, shape index: {}]
  %s2 = inlined_call_operand.vmem [shape: f32[3,1,32], index: 2, kind: input, shape index: {}]
  %s3 = inlined_call_operand.vmem [shape: f32[3,1,32], index: 3, kind: input, shape index: {}]
  %s4 = inlined_call_operand.vmem [shape: bf16[32,128], index: 4, kind: input, shape index: {}]
  %s5 = inlined_call_operand.vmem [shape: f32[1,128], index: 5, kind: input, shape index: {}]
  %s6 = inlined_call_operand.vmem [shape: bf16[2,16,64], index: 6, kind: output, shape index: {0}]
  %s7 = inlined_call_operand.vmem [shape: bf16[2,16,64], index: 7, kind: output, shape index: {1}]
  %8 = xla_tuple %s6, %s7
  %s9 = sld [smem:[#allocation0]]
  $region65: #{encoder_forward.2} parent=0
    _
  %s11 = ssub.s32 1, %s9
  %s12 = scalar_select 0, %s11, %s9
  loop: start=0, step=1, limit=4
  $region2: #{encoder_forward.2} parent=0 // loop_pre_header
    _
  $region3: #{encoder_forward.2} parent=0 // loop_header
    %s14 = sphi 0, %s18
    %p15 = scmp.ge.s32.totalorder %s14, 4
    %s24 = sphi 0, %s26
    %s27 = sphi 0, %s24
    %s28 = sphi 0, %s27
    %s44 = sphi 0, %s28
    %s48 = sphi 0, %s48
    %s50 = sphi 0, %s48
    %s51 = sphi 0, %s50
    %s65 = sphi 0, %s51
    %s69 = sphi 0, %s69
    %s71 = sphi 0, %s69
    %s72 = sphi 0, %s71
    %s86 = sphi 0, %s72
    %s90 = sphi 0, %s90
    %s92 = sphi 0, %s90
    %s93 = sphi 0, %s92
    %s107 = sphi 0, %s93
    %s111 = sphi 0, %s111
    %s113 = sphi 0, %s111
    %s114 = sphi 0, %s113
    %s128 = sphi 0, %s114
    %s132 = sphi 0, %s132
    %s134 = sphi 0, %s132
    %s135 = sphi 0, %s134
    %s149 = sphi 0, %s135
    %s155 = sphi 0, %s157
    %s158 = sphi 0, %s155
    %s159 = sphi 0, %s158
    %s175 = sphi 0, %s159
    %s181 = sphi 0, %s183
    %s184 = sphi 0, %s181
    %s185 = sphi 0, %s184
    %s201 = sphi 0, %s185
  $region4: #{encoder_forward.2} parent=0 // loop_header_branch
    %17 = sbr.rel (%p15) target = $region8
  $region5: #{encoder_forward.2} parent=0 // loop_body
    %s19 = ssub.s32 %s14, 1
    %s20 = ssub.s32 %s14, 2
    %s21 = sadd.s32 %s14, 1
    %s22 = ssub.s32 %s14, %s21
    %p23 = scmp.eq.s32.totalorder %s22, 0
    %s25 = sadd.s32 %s24, 1
    %s26 = scalar_select %p23, %s24, %s25
    %p29 = pneg %p23
    %p30 = scmp.eq.s32.totalorder %s14, 1
    %p31 = por %p29, %p30
    %p32 = scmp.ne.s32.totalorder %s24, %s27
    %p33 = scmp.eq.s32.totalorder %s14, 0
    %p34 = por %p32, %p33
    %p35 = scmp.ne.s32.totalorder %s24, %s27
    %p36 = scmp.eq.s32.totalorder %s19, 1
    %p37 = por %p35, %p36
    %p38 = scmp.ne.s32.totalorder %s27, %s28
    %p39 = scmp.eq.s32.totalorder %s19, 0
    %p40 = por %p38, %p39
    %p41 = scmp.ne.s32.totalorder %s27, %s28
    %p42 = scmp.eq.s32.totalorder %s20, 1
    %p43 = por %p41, %p42
    %p45 = scmp.ne.s32.totalorder %s28, %s44
    %p46 = scmp.eq.s32.totalorder %s20, 0
    %p47 = por %p45, %p46
    %s49 = sadd.s32 %s48, 1
    %p52 = scmp.eq.s32.totalorder %s14, 1
    %p53 = scmp.ne.s32.totalorder %s48, %s50
    %p54 = scmp.eq.s32.totalorder %s14, 0
    %p55 = por %p53, %p54
    %p56 = scmp.ne.s32.totalorder %s48, %s50
    %p57 = scmp.eq.s32.totalorder %s19, 1
    %p58 = por %p56, %p57
    %p59 = scmp.ne.s32.totalorder %s50, %s51
    %p60 = scmp.eq.s32.totalorder %s19, 0
    %p61 = por %p59, %p60
    %p62 = scmp.ne.s32.totalorder %s50, %s51
    %p63 = scmp.eq.s32.totalorder %s20, 1
    %p64 = por %p62, %p63
    %p66 = scmp.ne.s32.totalorder %s51, %s65
    %p67 = scmp.eq.s32.totalorder %s20, 0
    %p68 = por %p66, %p67
    %s70 = sadd.s32 %s69, 1
    %p73 = scmp.eq.s32.totalorder %s14, 1
    %p74 = scmp.ne.s32.totalorder %s69, %s71
    %p75 = scmp.eq.s32.totalorder %s14, 0
    %p76 = por %p74, %p75
    %p77 = scmp.ne.s32.totalorder %s69, %s71
    %p78 = scmp.eq.s32.totalorder %s19, 1
    %p79 = por %p77, %p78
    %p80 = scmp.ne.s32.totalorder %s71, %s72
    %p81 = scmp.eq.s32.totalorder %s19, 0
    %p82 = por %p80, %p81
    %p83 = scmp.ne.s32.totalorder %s71, %s72
    %p84 = scmp.eq.s32.totalorder %s20, 1
    %p85 = por %p83, %p84
    %p87 = scmp.ne.s32.totalorder %s72, %s86
    %p88 = scmp.eq.s32.totalorder %s20, 0
    %p89 = por %p87, %p88
    %s91 = sadd.s32 %s90, 1
    %p94 = scmp.eq.s32.totalorder %s14, 1
    %p95 = scmp.ne.s32.totalorder %s90, %s92
    %p96 = scmp.eq.s32.totalorder %s14, 0
    %p97 = por %p95, %p96
    %p98 = scmp.ne.s32.totalorder %s90, %s92
    %p99 = scmp.eq.s32.totalorder %s19, 1
    %p100 = por %p98, %p99
    %p101 = scmp.ne.s32.totalorder %s92, %s93
    %p102 = scmp.eq.s32.totalorder %s19, 0
    %p103 = por %p101, %p102
    %p104 = scmp.ne.s32.totalorder %s92, %s93
    %p105 = scmp.eq.s32.totalorder %s20, 1
    %p106 = por %p104, %p105
    %p108 = scmp.ne.s32.totalorder %s93, %s107
    %p109 = scmp.eq.s32.totalorder %s20, 0
    %p110 = por %p108, %p109
    %s112 = sadd.s32 %s111, 1
    %p115 = scmp.eq.s32.totalorder %s14, 1
    %p116 = scmp.ne.s32.totalorder %s111, %s113
    %p117 = scmp.eq.s32.totalorder %s14, 0
    %p118 = por %p116, %p117
    %p119 = scmp.ne.s32.totalorder %s111, %s113
    %p120 = scmp.eq.s32.totalorder %s19, 1
    %p121 = por %p119, %p120
    %p122 = scmp.ne.s32.totalorder %s113, %s114
    %p123 = scmp.eq.s32.totalorder %s19, 0
    %p124 = por %p122, %p123
    %p125 = scmp.ne.s32.totalorder %s113, %s114
    %p126 = scmp.eq.s32.totalorder %s20, 1
    %p127 = por %p125, %p126
    %p129 = scmp.ne.s32.totalorder %s114, %s128
    %p130 = scmp.eq.s32.totalorder %s20, 0
    %p131 = por %p129, %p130
    %s133 = sadd.s32 %s132, 1
    %p136 = scmp.eq.s32.totalorder %s14, 1
    %p137 = scmp.ne.s32.totalorder %s132, %s134
    %p138 = scmp.eq.s32.totalorder %s14, 0
    %p139 = por %p137, %p138
    %p140 = scmp.ne.s32.totalorder %s132, %s134
    %p141 = scmp.eq.s32.totalorder %s19, 1
    %p142 = por %p140, %p141
    %p143 = scmp.ne.s32.totalorder %s134, %s135
    %p144 = scmp.eq.s32.totalorder %s19, 0
    %p145 = por %p143, %p144
    %p146 = scmp.ne.s32.totalorder %s134, %s135
    %p147 = scmp.eq.s32.totalorder %s20, 1
    %p148 = por %p146, %p147
    %p150 = scmp.ne.s32.totalorder %s135, %s149
    %p151 = scmp.eq.s32.totalorder %s20, 0
    %p152 = por %p150, %p151
    %s153 = ssub.s32 %s14, %s21
    %p154 = scmp.eq.s32.totalorder %s153, 0
    %s156 = sadd.s32 %s155, 1
    %s157 = scalar_select %p154, %s155, %s156
    %p160 = pneg %p154
    %p161 = scmp.eq.s32.totalorder %s14, 1
    %p162 = por %p160, %p161
    %p163 = scmp.ne.s32.totalorder %s155, %s158
    %p164 = scmp.eq.s32.totalorder %s14, 0
    %p165 = por %p163, %p164
    %p166 = scmp.ne.s32.totalorder %s155, %s158
    %p167 = scmp.eq.s32.totalorder %s19, 1
    %p168 = por %p166, %p167
    %p169 = scmp.ne.s32.totalorder %s158, %s159
    %p170 = scmp.eq.s32.totalorder %s19, 0
    %p171 = por %p169, %p170
    %p172 = scmp.ne.s32.totalorder %s158, %s159
    %p173 = scmp.eq.s32.totalorder %s20, 1
    %p174 = por %p172, %p173
    %p176 = scmp.ne.s32.totalorder %s159, %s175
    %p177 = scmp.eq.s32.totalorder %s20, 0
    %p178 = por %p176, %p177
    %s179 = ssub.s32 %s14, %s21
    %p180 = scmp.eq.s32.totalorder %s179, 0
    %s182 = sadd.s32 %s181, 1
    %s183 = scalar_select %p180, %s181, %s182
    %p186 = pneg %p180
    %p187 = scmp.eq.s32.totalorder %s14, 1
    %p188 = por %p186, %p187
    %p189 = scmp.ne.s32.totalorder %s181, %s184
    %p190 = scmp.eq.s32.totalorder %s14, 0
    %p191 = por %p189, %p190
    %p192 = scmp.ne.s32.totalorder %s181, %s184
    %p193 = scmp.eq.s32.totalorder %s19, 1
    %p194 = por %p192, %p193
    %p195 = scmp.ne.s32.totalorder %s184, %s185
    %p196 = scmp.eq.s32.totalorder %s19, 0
    %p197 = por %p195, %p196
    %p198 = scmp.ne.s32.totalorder %s184, %s185
    %p199 = scmp.eq.s32.totalorder %s20, 1
    %p200 = por %p198, %p199
    %p202 = scmp.ne.s32.totalorder %s185, %s201
    %p203 = scmp.eq.s32.totalorder %s20, 0
    %p204 = por %p202, %p203
    %p205 = scmp.le.s32.totalorder 1, %s14
    %p206 = scmp.lt.s32.totalorder %s14, 3
    %p207 = pnand %p205, %p206
    %p208 = pneg %p207
    // Predicated region
    $region9: #{encoder_forward.2} parent=5 // pred_check
      _
    $region10: #{encoder_forward.2} parent=5 // pred_check_branch
      %210 = sbr.rel (%p207) target = $region12
    $region11: #{encoder_forward.2} parent=5 // pred_region
      %s211 = ssub.s32 %s14, 1
      // Predicated region
      $region13: #{encoder_forward.2} parent=11 // pred_check
        %p212 = pneg %p61
      $region14: #{encoder_forward.2} parent=11 // pred_check_branch
        %214 = sbr.rel (%p212) target = $region16
      $region15: #{encoder_forward.2} parent=11 // pred_region
        _
      $region16: #{encoder_forward.2} parent=11 // pred_fallthru
        _
      // Predicated region
      $region17: #{encoder_forward.2} parent=11 // pred_check
        %p215 = pneg %p82
      $region18: #{encoder_forward.2} parent=11 // pred_check_branch
        %217 = sbr.rel (%p215) target = $region20
      $region19: #{encoder_forward.2} parent=11 // pred_region
        _
      $region20: #{encoder_forward.2} parent=11 // pred_fallthru
        _
      // Predicated region
      $region21: #{encoder_forward.2} parent=11 // pred_check
        %p218 = pneg %p103
      $region22: #{encoder_forward.2} parent=11 // pred_check_branch
        %220 = sbr.rel (%p218) target = $region24
      $region23: #{encoder_forward.2} parent=11 // pred_region
        _
      $region24: #{encoder_forward.2} parent=11 // pred_fallthru
        _
      // Predicated region
      $region25: #{encoder_forward.2} parent=11 // pred_check
        %p221 = pneg %p124
      $region26: #{encoder_forward.2} parent=11 // pred_check_branch
        %223 = sbr.rel (%p221) target = $region28
      $region27: #{encoder_forward.2} parent=11 // pred_region
        _
      $region28: #{encoder_forward.2} parent=11 // pred_fallthru
        _
      // Predicated region
      $region29: #{encoder_forward.2} parent=11 // pred_check
        %p224 = pneg %p145
      $region30: #{encoder_forward.2} parent=11 // pred_check_branch
        %226 = sbr.rel (%p224) target = $region32
      $region31: #{encoder_forward.2} parent=11 // pred_region
        _
      $region32: #{encoder_forward.2} parent=11 // pred_fallthru
        _
    $region12: #{encoder_forward.2} parent=5 // pred_fallthru
      _
    %p227 = scmp.lt.s32.totalorder %s14, 2
    // Predicated region
    $region33: #{encoder_forward.2} parent=5 // pred_check
      %p228 = pneg %p227
    $region34: #{encoder_forward.2} parent=5 // pred_check_branch
      %230 = sbr.rel (%p228) target = $region36
    $region35: #{encoder_forward.2} parent=5 // pred_region
      // Predicated region
      $region37: #{encoder_forward.2} parent=35 // pred_check
        %p231 = pneg %p34
      $region38: #{encoder_forward.2} parent=35 // pred_check_branch
        %233 = sbr.rel (%p231) target = $region40
      $region39: #{encoder_forward.2} parent=35 // pred_region
        %p234 = scmp.lt.s32.totalorder %s14, 1
        %s235 = scalar_select %p234, %s14, 1
        %s236 = smul.addr %s235, 2
        %s237 = smul.addr %s236, 4
        %s238 = scalar_lea.vmem %s0, %s237
      $region40: #{encoder_forward.2} parent=35 // pred_fallthru
        _
    $region36: #{encoder_forward.2} parent=5 // pred_fallthru
      _
    %p239 = scmp.le.s32.totalorder 1, %s14
    %p240 = scmp.lt.s32.totalorder %s14, 3
    %p241 = pnand %p239, %p240
    %p242 = pneg %p241
    // Predicated region
    $region41: #{encoder_forward.2} parent=5 // pred_check
      _
    $region42: #{encoder_forward.2} parent=5 // pred_check_branch
      %244 = sbr.rel (%p241) target = $region44
    $region43: #{encoder_forward.2} parent=5 // pred_region
      %s245 = ssub.s32 %s14, 1
      %p246 = scmp.lt.s32.totalorder %s19, 1
      %s247 = scalar_select %p246, %s19, 1
      %s248 = smul.addr %s247, 2
      %s249 = smul.addr %s248, 4
      %s250 = scalar_lea.vmem %s0, %s249
      %p251 = pneg %p40
      %p252 = pneg %p37
      %p253 = pneg %p61
      %p254 = pneg %p58
      %p255 = pneg %p82
      %p256 = pneg %p79
      %p257 = pneg %p103
      %p258 = pneg %p100
      %p259 = pneg %p124
      %p260 = pneg %p121
      %p261 = pneg %p145
      %p262 = pneg %p142
      %p263 = pneg %p171
      %p264 = pneg %p168
      %p265 = scmp.lt.s32.totalorder %s19, 1
      %s266 = scalar_select %p265, %s19, 1
      %s267 = smul.addr %s266, 2
      %s268 = smul.addr %s267, 4
      %s269 = scalar_lea.vmem %s6, %s268
      %p270 = pneg %p197
      %p271 = pneg %p194
      %p272 = scmp.lt.s32.totalorder %s19, 1
      %s273 = scalar_select %p272, %s19, 1
      %s274 = smul.addr %s273, 2
      %s275 = smul.addr %s274, 4
      %s276 = scalar_lea.vmem %s7, %s275
      %p277 = scmp.lt.s32.totalorder %s19, 1
      %s278 = scalar_select %p277, %s19, 1
      %s279 = smul.addr %s278, 2
      %s280 = smul.addr %s279, 4
      %s281 = scalar_lea.vmem %s0, %s280
      %p282 = scmp.lt.s32.totalorder %s19, 1
      %s283 = scalar_select %p282, %s19, 1
      %s284 = smul.addr %s283, 2
      %s285 = smul.addr %s284, 4
      %s286 = scalar_lea.vmem %s6, %s285
      %p287 = scmp.lt.s32.totalorder %s19, 1
      %s288 = scalar_select %p287, %s19, 1
      %s289 = smul.addr %s288, 2
      %s290 = smul.addr %s289, 4
      %s291 = scalar_lea.vmem %s7, %s290
      %vm293 = vcmask 253952
      %294 = vst.msk [vmem:[#allocation2] sm:$0x1] %vm293, 0
      %vm295 = vcmask 257025
      %296 = vst.msk [vmem:[#allocation2 + $0x8] sm:$0xe] %vm295, 0
      %vm297 = vcmask 257024
      %298 = vst.msk [vmem:[#allocation2 + $0xc] sm:$0xf] %vm297, 0
      %v299 = vld [vmem:[%s281] sm:$0xf]
      %v300 = vld [vmem:[%s281 + $0x4] sm:$0xf]
      %vm303 = vcmask 1040384
      %vm304 = vcmask 1044484
      %vm305 = vmor %vm303, %vm304
      %v306 = vrot.slane %v299, 7
      %v307 = vrot.slane %v306, 4
      %v308 = vrot.slane %v300, 7
      %v309 = vsel %vm305, %v307, %v308
      %v310 = vrot.slane %v308, 4
      %314 = vst.msk [vmem:[#allocation2] sm:$0xe] %vm295, %v306
      %315 = vst.msk [vmem:[#allocation2 + $0x4] sm:$0xf] %vm297, %v309
      %316 = vst.msk [vmem:[#allocation2 + $0x8] sm:$0x1] %vm293, %v310
      %v317 = vld [vmem:[#allocation2] sm:$0xf]
      %v318 = vld [vmem:[#allocation2 + $0x4] sm:$0xf]
      %v319 = vld [vmem:[#allocation2 + $0x8] sm:$0xf]
      %v322 = vunpack.c.l.b16 %v317
      %v323 = vunpack.c.l.b16 %v318
      %v324 = vpack.c.b16 %v323, %v322
      %v326 = vunpack.c.l.b16 %v319
      %v327 = vpack.c.b16 %v326, %v326
      %vm328 = vsmask.f32 7424
      %v330 = vshrl.u32 %v324, 16
      %v332 = vshll.u32 %v324, 16
      %v334 = vrot.slane %v332, 1
      %v335 = vor.u32 %v330, %v334
      %v337 = vshll.u32 %v327, 16
      %v339 = vrot.slane %v337, 1
      %v340 = vsel %vm328, %v335, %v339
      %341 = vrot.lane.b32.xlu0 %v340, 32
      %v342 = vpop.permute.xlu0 %341
      %vm343 = vcmask 1046528
      %v344 = vrot.slane %v324, 1
      %v345 = vrot.slane %v327, 1
      %v346 = vsel %vm343, %v344, %v345
      %347 = vrot.lane.b32.xlu0 %v346, 64
      %v348 = vpop.permute.xlu0 %347
      %vm349 = vsmask.f32 6400
      %v350 = vrot.slane %v330, 1
      %v351 = vrot.slane %v332, 2
      %v352 = vor.u32 %v350, %v351
      %v353 = vshrl.u32 %v327, 16
      %v355 = vrot.slane %v353, 1
      %v356 = vrot.slane %v337, 2
      %v357 = vor.u32 %v355, %v356
      %v358 = vsel %vm349, %v352, %v357
      %359 = vrot.lane.b32.xlu0 %v358, 96
      %v360 = vpop.permute.xlu0 %359
      %vm361 = vcmask 1045504
      %v362 = vrot.slane %v324, 2
      %v363 = vrot.slane %v327, 2
      %v364 = vsel %vm361, %v362, %v363
      %vm365 = vcmask 261120
      %v367 = vsel %vm365, %v324, %v342
      %vm368 = vcmask 523264
      %v370 = vsel %vm368, %v367, %v348
      %vm371 = vcmask 785408
      %v373 = vsel %vm371, %v370, %v360
      %v375 = vld [vmem:[%s1] sm:$0xf]
      %v376 = vld [vmem:[%s1 + $0x4] sm:$0xf]
      %v377 = vld [vmem:[%s1 + $0x8] sm:$0xf]
      %v378 = vld [vmem:[%s1 + $0xc] sm:$0xf]
      %v379 = vld [vmem:[%s1 + $0x10] sm:$0xf]
      %v380 = vld [vmem:[%s1 + $0x14] sm:$0xf]
      %v381 = vld [vmem:[%s1 + $0x18] sm:$0xf]
      %v382 = vld [vmem:[%s1 + $0x1c] sm:$0xf]
      %v383 = vld [vmem:[%s1 + $0x20] sm:$0xf]
      %v384 = vld [vmem:[%s1 + $0x24] sm:$0xf]
      %v385 = vld [vmem:[%s1 + $0x28] sm:$0xf]
      %v386 = vld [vmem:[%s1 + $0x2c] sm:$0xf]
      %v387 = vld [vmem:[%s1 + $0x30] sm:$0xf]
      %v388 = vld [vmem:[%s1 + $0x34] sm:$0xf]
      %v389 = vld [vmem:[%s1 + $0x38] sm:$0xf]
      %v390 = vld [vmem:[%s1 + $0x3c] sm:$0xf]
      %v391 = vld [vmem:[%s1 + $0x40] sm:$0xf]
      %v392 = vld [vmem:[%s1 + $0x44] sm:$0xf]
      %v393 = vld [vmem:[%s1 + $0x48] sm:$0xf]
      %v394 = vld [vmem:[%s1 + $0x4c] sm:$0xf]
      %v415 = vunpack.c.l.b16 %v375
      %v416 = vunpack.c.l.b16 %v376
      %v417 = vunpack.c.l.b16 %v377
      %v418 = vunpack.c.l.b16 %v378
      %v419 = vunpack.c.l.b16 %v379
      %v420 = vunpack.c.l.b16 %v380
      %v421 = vunpack.c.l.b16 %v381
      %v422 = vunpack.c.l.b16 %v382
      %v423 = vunpack.c.l.b16 %v383
      %v424 = vunpack.c.l.b16 %v384
      %v425 = vunpack.c.l.b16 %v385
      %v426 = vunpack.c.l.b16 %v386
      %v427 = vunpack.c.l.b16 %v387
      %v428 = vunpack.c.l.b16 %v388
      %v429 = vunpack.c.l.b16 %v389
      %v430 = vunpack.c.l.b16 %v390
      %v431 = vunpack.c.l.b16 %v391
      %v432 = vunpack.c.l.b16 %v392
      %v433 = vunpack.c.l.b16 %v393
      %v434 = vunpack.c.l.b16 %v394
      %v435 = vpack.c.b16 %v416, %v415
      %v436 = vpack.c.b16 %v418, %v417
      %v437 = vpack.c.b16 %v420, %v419
      %v438 = vpack.c.b16 %v422, %v421
      %v439 = vpack.c.b16 %v424, %v423
      %v440 = vpack.c.b16 %v426, %v425
      %v441 = vpack.c.b16 %v428, %v427
      %v442 = vpack.c.b16 %v430, %v429
      %v443 = vpack.c.b16 %v432, %v431
      %v444 = vpack.c.b16 %v434, %v433
      %v456 = vsel %vm365, %v364, 0
      %458 = vmatprep.subr.bf16.mxu0 0
      %459 = vmatpush1.bf16.msra.mxu0 %v442
      %460 = vmatprep.subr.bf16.mxu0 0
      %461 = vmatpush1.bf16.msra.mxu0 %v441
      %462 = vmatprep.subr.bf16.mxu0 0
      %463 = vmatpush1.bf16.msra.mxu0 %v440
      %464 = vmatprep.subr.bf16.mxu0 0
      %465 = vmatpush1.bf16.msra.mxu0 %v439
      %466 = vmatprep.subr.bf16.mxu0 0
      %467 = vmatpush1.bf16.msra.mxu0 %v438
      %468 = vmatprep.subr.bf16.mxu0 0
      %469 = vmatpush1.bf16.msra.mxu0 %v437
      %470 = vmatprep.subr.bf16.mxu0 0
      %471 = vmatpush1.bf16.msra.mxu0 %v436
      %472 = vmatprep.subr.bf16.mxu0 0
      %473 = vmatpush1.bf16.msra.mxu0 %v435
      %474 = vmatprep.subr.bf16.mxu0 0
      %475 = vmatpush2.bf16.msra.mxu0 0
      %476 = vmatprep.subr.bf16.mxu0 0
      %477 = vmatpush2.bf16.msra.mxu0 0
      %478 = vmatprep.subr.bf16.mxu0 0
      %479 = vmatpush2.bf16.msra.mxu0 0
      %480 = vmatprep.subr.bf16.mxu0 0
      %481 = vmatpush2.bf16.msra.mxu0 0
      %482 = vmatprep.subr.bf16.mxu0 0
      %483 = vmatpush2.bf16.msra.mxu0 0
      %484 = vmatprep.subr.bf16.mxu0 0
      %485 = vmatpush2.bf16.msra.mxu0 0
      %486 = vmatprep.subr.bf16.mxu0 0
      %487 = vmatpush2.bf16.msra.mxu0 %v444
      %488 = vmatprep.subr.bf16.mxu0 0
      %489 = vmatpush2.bf16.msra.mxu0 %v443
      %490 = vmatprep.mubr.bf16.mxu0 %v456
      %491 = vmatmul.mubr.bf16.gmra.mxu0 %v373
      %v492 = vpop.f32.mrf.mxu0
      %v493 = vadd.f32 0.0, %v492
      %v494 = vpop.f32.mrf.mxu0
      %v495 = vpop.f32.mrf.mxu0
      %v496 = vadd.f32 0.0, %v495
      %v497 = vpop.f32.mrf.mxu0
      %498 = vdwg.mxu0
      %v499 = vld [vmem:[%s2] sm:$0x1]
      %v501 = vlaneseq
      %v502 = vshrl.u32 %v501, 7
      %v503 = vsub.s32 0, %v502
      %v504 = vrot.slane %v499, %v503
      %v506 = vmul.f32 %v493, %v504
      %v507 = vmul.f32 %v496, %v504
      %v508 = vld [vmem:[%s3] sm:$0x1]
      %v510 = vlaneseq
      %v511 = vshrl.u32 %v510, 7
      %v512 = vsub.s32 0, %v511
      %v513 = vrot.slane %v508, %v512
      %v515 = vadd.f32 %v506, %v513
      %v516 = vadd.f32 %v507, %v513
      %v517 = vmax.f32 %v515, 0.0
      %v518 = vmax.f32 %v516, 0.0
      %v519 = vpack.c.bf16 %v518, %v517
      %v521 = vunpack.c.l.b16 %v519
      %v522 = vunpack.c.h.b16 %v519
      %v523 = vpack.c.b16 %v521, %v521
      %v524 = vpack.c.b16 %v522, %v522
      %v525 = vrot.slane %v523, 7
      %v526 = vrot.slane %v525, 4
      %v527 = vrot.slane %v524, 7
      %v528 = vsel %vm305, %v526, %v527
      %v529 = vrot.slane %v527, 4
      %533 = vst.msk [vmem:[#allocation2] sm:$0xe] %vm295, %v525
      %534 = vst.msk [vmem:[#allocation2 + $0x4] sm:$0xf] %vm297, %v528
      %535 = vst.msk [vmem:[#allocation2 + $0x8] sm:$0x1] %vm293, %v529
      %v536 = vld [vmem:[#allocation2] sm:$0xf]
      %v537 = vld [vmem:[#allocation2 + $0x4] sm:$0xf]
      %v538 = vld [vmem:[#allocation2 + $0x8] sm:$0xf]
      %v541 = vunpack.c.l.b16 %v536
      %v542 = vunpack.c.l.b16 %v537
      %v543 = vpack.c.b16 %v542, %v541
      %v545 = vunpack.c.l.b16 %v538
      %v546 = vpack.c.b16 %v545, %v545
      %v548 = vshrl.u32 %v543, 16
      %v550 = vshll.u32 %v543, 16
      %v552 = vrot.slane %v550, 1
      %v553 = vor.u32 %v548, %v552
      %v555 = vshll.u32 %v546, 16
      %v557 = vrot.slane %v555, 1
      %v558 = vsel %vm328, %v553, %v557
      %559 = vrot.lane.b32.xlu0 %v558, 32
      %v560 = vpop.permute.xlu0 %559
      %v561 = vrot.slane %v543, 1
      %v562 = vrot.slane %v546, 1
      %v563 = vsel %vm343, %v561, %v562
      %564 = vrot.lane.b32.xlu0 %v563, 64
      %v565 = vpop.permute.xlu0 %564
      %v566 = vrot.slane %v548, 1
      %v567 = vrot.slane %v550, 2
      %v568 = vor.u32 %v566, %v567
      %v569 = vshrl.u32 %v546, 16
      %v571 = vrot.slane %v569, 1
      %v572 = vrot.slane %v555, 2
      %v573 = vor.u32 %v571, %v572
      %v574 = vsel %vm349, %v568, %v573
      %575 = vrot.lane.b32.xlu0 %v574, 96
      %v576 = vpop.permute.xlu0 %575
      %v577 = vrot.slane %v543, 2
      %v578 = vrot.slane %v546, 2
      %v579 = vsel %vm361, %v577, %v578
      %v581 = vsel %vm365, %v543, %v560
      %v583 = vsel %vm368, %v581, %v565
      %v585 = vsel %vm371, %v583, %v576
      %s587 = scalar_lea.vmem %s1, 80
      %v588 = vld [vmem:[%s587] sm:$0xf]
      %v589 = vld [vmem:[%s587 + $0x4] sm:$0xf]
      %v590 = vld [vmem:[%s587 + $0x8] sm:$0xf]
      %v591 = vld [vmem:[%s587 + $0xc] sm:$0xf]
      %v592 = vld [vmem:[%s587 + $0x10] sm:$0xf]
      %v593 = vld [vmem:[%s587 + $0x14] sm:$0xf]
      %v594 = vld [vmem:[%s587 + $0x18] sm:$0xf]
      %v595 = vld [vmem:[%s587 + $0x1c] sm:$0xf]
      %v596 = vld [vmem:[%s587 + $0x20] sm:$0xf]
      %v597 = vld [vmem:[%s587 + $0x24] sm:$0xf]
      %v598 = vld [vmem:[%s587 + $0x28] sm:$0xf]
      %v599 = vld [vmem:[%s587 + $0x2c] sm:$0xf]
      %v600 = vld [vmem:[%s587 + $0x30] sm:$0xf]
      %v601 = vld [vmem:[%s587 + $0x34] sm:$0xf]
      %v602 = vld [vmem:[%s587 + $0x38] sm:$0xf]
      %v603 = vld [vmem:[%s587 + $0x3c] sm:$0xf]
      %v604 = vld [vmem:[%s587 + $0x40] sm:$0xf]
      %v605 = vld [vmem:[%s587 + $0x44] sm:$0xf]
      %v606 = vld [vmem:[%s587 + $0x48] sm:$0xf]
      %v607 = vld [vmem:[%s587 + $0x4c] sm:$0xf]
      %v628 = vunpack.c.l.b16 %v588
      %v629 = vunpack.c.l.b16 %v589
      %v630 = vunpack.c.l.b16 %v590
      %v631 = vunpack.c.l.b16 %v591
      %v632 = vunpack.c.l.b16 %v592
      %v633 = vunpack.c.l.b16 %v593
      %v634 = vunpack.c.l.b16 %v594
      %v635 = vunpack.c.l.b16 %v595
      %v636 = vunpack.c.l.b16 %v596
      %v637 = vunpack.c.l.b16 %v597
      %v638 = vunpack.c.l.b16 %v598
      %v639 = vunpack.c.l.b16 %v599
      %v640 = vunpack.c.l.b16 %v600
      %v641 = vunpack.c.l.b16 %v601
      %v642 = vunpack.c.l.b16 %v602
      %v643 = vunpack.c.l.b16 %v603
      %v644 = vunpack.c.l.b16 %v604
      %v645 = vunpack.c.l.b16 %v605
      %v646 = vunpack.c.l.b16 %v606
      %v647 = vunpack.c.l.b16 %v607
      %v648 = vpack.c.b16 %v629, %v628
      %v649 = vpack.c.b16 %v631, %v630
      %v650 = vpack.c.b16 %v633, %v632
      %v651 = vpack.c.b16 %v635, %v634
      %v652 = vpack.c.b16 %v637, %v636
      %v653 = vpack.c.b16 %v639, %v638
      %v654 = vpack.c.b16 %v641, %v640
      %v655 = vpack.c.b16 %v643, %v642
      %v656 = vpack.c.b16 %v645, %v644
      %v657 = vpack.c.b16 %v647, %v646
      %v669 = vsel %vm365, %v579, 0
      %671 = vmatprep.subr.bf16.mxu0 0
      %672 = vmatpush1.bf16.msra.mxu0 %v655
      %673 = vmatprep.subr.bf16.mxu0 0
      %674 = vmatpush1.bf16.msra.mxu0 %v654
      %675 = vmatprep.subr.bf16.mxu0 0
      %676 = vmatpush1.bf16.msra.mxu0 %v653
      %677 = vmatprep.subr.bf16.mxu0 0
      %678 = vmatpush1.bf16.msra.mxu0 %v652
      %679 = vmatprep.subr.bf16.mxu0 0
      %680 = vmatpush1.bf16.msra.mxu0 %v651
      %681 = vmatprep.subr.bf16.mxu0 0
      %682 = vmatpush1.bf16.msra.mxu0 %v650
      %683 = vmatprep.subr.bf16.mxu0 0
      %684 = vmatpush1.bf16.msra.mxu0 %v649
      %685 = vmatprep.subr.bf16.mxu0 0
      %686 = vmatpush1.bf16.msra.mxu0 %v648
      %687 = vmatprep.subr.bf16.mxu0 0
      %688 = vmatpush2.bf16.msra.mxu0 0
      %689 = vmatprep.subr.bf16.mxu0 0
      %690 = vmatpush2.bf16.msra.mxu0 0
      %691 = vmatprep.subr.bf16.mxu0 0
      %692 = vmatpush2.bf16.msra.mxu0 0
      %693 = vmatprep.subr.bf16.mxu0 0
      %694 = vmatpush2.bf16.msra.mxu0 0
      %695 = vmatprep.subr.bf16.mxu0 0
      %696 = vmatpush2.bf16.msra.mxu0 0
      %697 = vmatprep.subr.bf16.mxu0 0
      %698 = vmatpush2.bf16.msra.mxu0 0
      %699 = vmatprep.subr.bf16.mxu0 0
      %700 = vmatpush2.bf16.msra.mxu0 %v657
      %701 = vmatprep.subr.bf16.mxu0 0
      %702 = vmatpush2.bf16.msra.mxu0 %v656
      %703 = vmatprep.mubr.bf16.mxu0 %v669
      %704 = vmatmul.mubr.bf16.gmra.mxu0 %v585
      %v705 = vpop.f32.mrf.mxu0
      %v706 = vadd.f32 0.0, %v705
      %v707 = vpop.f32.mrf.mxu0
      %v708 = vpop.f32.mrf.mxu0
      %v709 = vadd.f32 0.0, %v708
      %v710 = vpop.f32.mrf.mxu0
      %711 = vdwg.mxu0
      %s712 = scalar_lea.vmem %s2, 1
      %v713 = vld [vmem:[%s712] sm:$0x1]
      %v715 = vlaneseq
      %v716 = vshrl.u32 %v715, 7
      %v717 = vsub.s32 0, %v716
      %v718 = vrot.slane %v713, %v717
      %v720 = vmul.f32 %v706, %v718
      %v721 = vmul.f32 %v709, %v718
      %s722 = scalar_lea.vmem %s3, 1
      %v723 = vld [vmem:[%s722] sm:$0x1]
      %v725 = vlaneseq
      %v726 = vshrl.u32 %v725, 7
      %v727 = vsub.s32 0, %v726
      %v728 = vrot.slane %v723, %v727
      %v730 = vadd.f32 %v720, %v728
      %v731 = vadd.f32 %v721, %v728
      %v732 = vmax.f32 %v730, 0.0
      %v733 = vmax.f32 %v731, 0.0
      %v734 = vpack.c.bf16 %v733, %v732
      %v736 = vunpack.c.l.b16 %v734
      %v737 = vunpack.c.h.b16 %v734
      %v738 = vpack.c.b16 %v736, %v736
      %v739 = vpack.c.b16 %v737, %v737
      %v740 = vrot.slane %v738, 7
      %v741 = vrot.slane %v740, 4
      %v742 = vrot.slane %v739, 7
      %v743 = vsel %vm305, %v741, %v742
      %v744 = vrot.slane %v742, 4
      %748 = vst.msk [vmem:[#allocation2] sm:$0xe] %vm295, %v740
      %749 = vst.msk [vmem:[#allocation2 + $0x4] sm:$0xf] %vm297, %v743
      %750 = vst.msk [vmem:[#allocation2 + $0x8] sm:$0x1] %vm293, %v744
      %v751 = vld [vmem:[#allocation2] sm:$0xf]
      %v752 = vld [vmem:[#allocation2 + $0x4] sm:$0xf]
      %v753 = vld [vmem:[#allocation2 + $0x8] sm:$0xf]
      %v756 = vunpack.c.l.b16 %v751
      %v757 = vunpack.c.l.b16 %v752
      %v758 = vpack.c.b16 %v757, %v756
      %v760 = vunpack.c.l.b16 %v753
      %v761 = vpack.c.b16 %v760, %v760
      %v763 = vshrl.u32 %v758, 16
      %v765 = vshll.u32 %v758, 16
      %v767 = vrot.slane %v765, 1
      %v768 = vor.u32 %v763, %v767
      %v770 = vshll.u32 %v761, 16
      %v772 = vrot.slane %v770, 1
      %v773 = vsel %vm328, %v768, %v772
      %774 = vrot.lane.b32.xlu0 %v773, 32
      %v775 = vpop.permute.xlu0 %774
      %v776 = vrot.slane %v758, 1
      %v777 = vrot.slane %v761, 1
      %v778 = vsel %vm343, %v776, %v777
      %779 = vrot.lane.b32.xlu0 %v778, 64
      %v780 = vpop.permute.xlu0 %779
      %v781 = vrot.slane %v763, 1
      %v782 = vrot.slane %v765, 2
      %v783 = vor.u32 %v781, %v782
      %v784 = vshrl.u32 %v761, 16
      %v786 = vrot.slane %v784, 1
      %v787 = vrot.slane %v770, 2
      %v788 = vor.u32 %v786, %v787
      %v789 = vsel %vm349, %v783, %v788
      %790 = vrot.lane.b32.xlu0 %v789, 96
      %v791 = vpop.permute.xlu0 %790
      %v792 = vrot.slane %v758, 2
      %v793 = vrot.slane %v761, 2
      %v794 = vsel %vm361, %v792, %v793
      %v796 = vsel %vm365, %v758, %v775
      %v798 = vsel %vm368, %v796, %v780
      %v800 = vsel %vm371, %v798, %v791
      %s802 = scalar_lea.vmem %s1, 160
      %v803 = vld [vmem:[%s802] sm:$0xf]
      %v804 = vld [vmem:[%s802 + $0x4] sm:$0xf]
      %v805 = vld [vmem:[%s802 + $0x8] sm:$0xf]
      %v806 = vld [vmem:[%s802 + $0xc] sm:$0xf]
      %v807 = vld [vmem:[%s802 + $0x10] sm:$0xf]
      %v808 = vld [vmem:[%s802 + $0x14] sm:$0xf]
      %v809 = vld [vmem:[%s802 + $0x18] sm:$0xf]
      %v810 = vld [vmem:[%s802 + $0x1c] sm:$0xf]
      %v811 = vld [vmem:[%s802 + $0x20] sm:$0xf]
      %v812 = vld [vmem:[%s802 + $0x24] sm:$0xf]
      %v813 = vld [vmem:[%s802 + $0x28] sm:$0xf]
      %v814 = vld [vmem:[%s802 + $0x2c] sm:$0xf]
      %v815 = vld [vmem:[%s802 + $0x30] sm:$0xf]
      %v816 = vld [vmem:[%s802 + $0x34] sm:$0xf]
      %v817 = vld [vmem:[%s802 + $0x38] sm:$0xf]
      %v818 = vld [vmem:[%s802 + $0x3c] sm:$0xf]
      %v819 = vld [vmem:[%s802 + $0x40] sm:$0xf]
      %v820 = vld [vmem:[%s802 + $0x44] sm:$0xf]
      %v821 = vld [vmem:[%s802 + $0x48] sm:$0xf]
      %v822 = vld [vmem:[%s802 + $0x4c] sm:$0xf]
      %v843 = vunpack.c.l.b16 %v803
      %v844 = vunpack.c.l.b16 %v804
      %v845 = vunpack.c.l.b16 %v805
      %v846 = vunpack.c.l.b16 %v806
      %v847 = vunpack.c.l.b16 %v807
      %v848 = vunpack.c.l.b16 %v808
      %v849 = vunpack.c.l.b16 %v809
      %v850 = vunpack.c.l.b16 %v810
      %v851 = vunpack.c.l.b16 %v811
      %v852 = vunpack.c.l.b16 %v812
      %v853 = vunpack.c.l.b16 %v813
      %v854 = vunpack.c.l.b16 %v814
      %v855 = vunpack.c.l.b16 %v815
      %v856 = vunpack.c.l.b16 %v816
      %v857 = vunpack.c.l.b16 %v817
      %v858 = vunpack.c.l.b16 %v818
      %v859 = vunpack.c.l.b16 %v819
      %v860 = vunpack.c.l.b16 %v820
      %v861 = vunpack.c.l.b16 %v821
      %v862 = vunpack.c.l.b16 %v822
      %v863 = vpack.c.b16 %v844, %v843
      %v864 = vpack.c.b16 %v846, %v845
      %v865 = vpack.c.b16 %v848, %v847
      %v866 = vpack.c.b16 %v850, %v849
      %v867 = vpack.c.b16 %v852, %v851
      %v868 = vpack.c.b16 %v854, %v853
      %v869 = vpack.c.b16 %v856, %v855
      %v870 = vpack.c.b16 %v858, %v857
      %v871 = vpack.c.b16 %v860, %v859
      %v872 = vpack.c.b16 %v862, %v861
      %v884 = vsel %vm365, %v794, 0
      %886 = vmatprep.subr.bf16.mxu0 0
      %887 = vmatpush1.bf16.msra.mxu0 %v870
      %888 = vmatprep.subr.bf16.mxu0 0
      %889 = vmatpush1.bf16.msra.mxu0 %v869
      %890 = vmatprep.subr.bf16.mxu0 0
      %891 = vmatpush1.bf16.msra.mxu0 %v868
      %892 = vmatprep.subr.bf16.mxu0 0
      %893 = vmatpush1.bf16.msra.mxu0 %v867
      %894 = vmatprep.subr.bf16.mxu0 0
      %895 = vmatpush1.bf16.msra.mxu0 %v866
      %896 = vmatprep.subr.bf16.mxu0 0
      %897 = vmatpush1.bf16.msra.mxu0 %v865
      %898 = vmatprep.subr.bf16.mxu0 0
      %899 = vmatpush1.bf16.msra.mxu0 %v864
      %900 = vmatprep.subr.bf16.mxu0 0
      %901 = vmatpush1.bf16.msra.mxu0 %v863
      %902 = vmatprep.subr.bf16.mxu0 0
      %903 = vmatpush2.bf16.msra.mxu0 0
      %904 = vmatprep.subr.bf16.mxu0 0
      %905 = vmatpush2.bf16.msra.mxu0 0
      %906 = vmatprep.subr.bf16.mxu0 0
      %907 = vmatpush2.bf16.msra.mxu0 0
      %908 = vmatprep.subr.bf16.mxu0 0
      %909 = vmatpush2.bf16.msra.mxu0 0
      %910 = vmatprep.subr.bf16.mxu0 0
      %911 = vmatpush2.bf16.msra.mxu0 0
      %912 = vmatprep.subr.bf16.mxu0 0
      %913 = vmatpush2.bf16.msra.mxu0 0
      %914 = vmatprep.subr.bf16.mxu0 0
      %915 = vmatpush2.bf16.msra.mxu0 %v872
      %916 = vmatprep.subr.bf16.mxu0 0
      %917 = vmatpush2.bf16.msra.mxu0 %v871
      %918 = vmatprep.mubr.bf16.mxu0 %v884
      %919 = vmatmul.mubr.bf16.gmra.mxu0 %v800
      %v920 = vpop.f32.mrf.mxu0
      %v921 = vadd.f32 0.0, %v920
      %v922 = vpop.f32.mrf.mxu0
      %v923 = vpop.f32.mrf.mxu0
      %v924 = vadd.f32 0.0, %v923
      %v925 = vpop.f32.mrf.mxu0
      %926 = vdwg.mxu0
      %s927 = scalar_lea.vmem %s2, 2
      %v928 = vld [vmem:[%s927] sm:$0x1]
      %v930 = vlaneseq
      %v931 = vshrl.u32 %v930, 7
      %v932 = vsub.s32 0, %v931
      %v933 = vrot.slane %v928, %v932
      %v935 = vmul.f32 %v921, %v933
      %v936 = vmul.f32 %v924, %v933
      %s937 = scalar_lea.vmem %s3, 2
      %v938 = vld [vmem:[%s937] sm:$0x1]
      %v940 = vlaneseq
      %v941 = vshrl.u32 %v940, 7
      %v942 = vsub.s32 0, %v941
      %v943 = vrot.slane %v938, %v942
      %v945 = vadd.f32 %v935, %v943
      %v946 = vadd.f32 %v936, %v943
      %v947 = vpack.c.bf16 %v946, %v945
      %v948 = vld [vmem:[%s4] sm:$0xf]
      %v949 = vld [vmem:[%s4 + $0x4] sm:$0xf]
      %v950 = vld [vmem:[%s4 + $0x8] sm:$0xf]
      %v951 = vld [vmem:[%s4 + $0xc] sm:$0xf]
      %v952 = vld [vmem:[%s5] sm:$0x1]
      %v954 = vlaneseq
      %v955 = vshrl.u32 %v954, 7
      %v956 = vsub.s32 0, %v955
      %v957 = vrot.slane %v952, %v956
      %v963 = vunpack.c.l.b16 %v948
      %v964 = vunpack.c.l.b16 %v949
      %v965 = vunpack.c.l.b16 %v950
      %v966 = vunpack.c.l.b16 %v951
      %v967 = vpack.c.b16 %v964, %v963
      %v968 = vpack.c.b16 %v966, %v965
      %v972 = vsel %vm365, %v947, 0
      %974 = vmatprep.subr.bf16.mxu0 0
      %975 = vmatpush1.bf16.msra.mxu0 0
      %976 = vmatprep.subr.bf16.mxu0 0
      %977 = vmatpush1.bf16.msra.mxu0 0
      %978 = vmatprep.subr.bf16.mxu0 0
      %979 = vmatpush1.bf16.msra.mxu0 0
      %980 = vmatprep.subr.bf16.mxu0 0
      %981 = vmatpush1.bf16.msra.mxu0 0
      %982 = vmatprep.subr.bf16.mxu0 0
      %983 = vmatpush1.bf16.msra.mxu0 0
      %984 = vmatprep.subr.bf16.mxu0 0
      %985 = vmatpush1.bf16.msra.mxu0 0
      %986 = vmatprep.subr.bf16.mxu0 0
      %987 = vmatpush1.bf16.msra.mxu0 %v968
      %988 = vmatprep.subr.bf16.mxu0 0
      %989 = vmatpush1.bf16.msra.mxu0 %v967
      %990 = vmatprep.subr.bf16.mxu0 0
      %991 = vmatpush2.bf16.msra.mxu0 0
      %992 = vmatprep.subr.bf16.mxu0 0
      %993 = vmatpush2.bf16.msra.mxu0 0
      %994 = vmatprep.subr.bf16.mxu0 0
      %995 = vmatpush2.bf16.msra.mxu0 0
      %996 = vmatprep.subr.bf16.mxu0 0
      %997 = vmatpush2.bf16.msra.mxu0 0
      %998 = vmatprep.subr.bf16.mxu0 0
      %999 = vmatpush2.bf16.msra.mxu0 0
      %1000 = vmatprep.subr.bf16.mxu0 0
      %1001 = vmatpush2.bf16.msra.mxu0 0
      %1002 = vmatprep.subr.bf16.mxu0 0
      %1003 = vmatpush2.bf16.msra.mxu0 0
      %1004 = vmatprep.subr.bf16.mxu0 0
      %1005 = vmatpush2.bf16.msra.mxu0 0
      %1006 = vmatprep.mubr.bf16.mxu0 0
      %1007 = vmatmul.mubr.bf16.gmra.mxu0 %v972
      %v1008 = vpop.f32.mrf.mxu0
      %v1009 = vadd.f32 %v957, %v1008
      %v1010 = vpop.f32.mrf.mxu0
      %v1011 = vpop.f32.mrf.mxu0
      %v1012 = vadd.f32 %v957, %v1011
      %v1013 = vpop.f32.mrf.mxu0
      %1014 = vdwg.mxu0
      %v1015 = vpack.c.bf16 %v1012, %v1009
      %v1017 = vunpack.c.l.b16 %v1015
      %v1018 = vunpack.c.h.b16 %v1015
      %v1019 = vpack.c.b16 %v1017, %v1017
      %v1020 = vpack.c.b16 %v1018, %v1018
      %vm1023 = vcmask 519168
      %1024 = vst.msk [vmem:[%s286] sm:$0xf] %vm1023, %v1019
      %1025 = vst.msk [vmem:[%s286 + $0x4] sm:$0xf] %vm1023, %v1020
      %1026 = vrot.lane.b32.xlu0 %v1019, 64
      %v1027 = vpop.permute.xlu0 %1026
      %1028 = vrot.lane.b32.xlu0 %v1020, 64
      %v1029 = vpop.permute.xlu0 %1028
      %1032 = vst.msk [vmem:[%s291] sm:$0xf] %vm1023, %v1027
      %1033 = vst.msk [vmem:[%s291 + $0x4] sm:$0xf] %vm1023, %v1029
      %p1034 = scmp.lt.s32.totalorder %s19, 1
      %s1035 = scalar_select %p1034, %s19, 1
      %s1036 = smul.addr %s1035, 2
      %s1037 = smul.addr %s1036, 4
      %s1038 = scalar_lea.vmem %s6, %s1037
      %p1039 = scmp.lt.s32.totalorder %s19, 1
      %s1040 = scalar_select %p1039, %s19, 1
      %s1041 = smul.addr %s1040, 2
      %s1042 = smul.addr %s1041, 4
      %s1043 = scalar_lea.vmem %s7, %s1042
      // Predicated region
      $region45: #{encoder_forward.2} parent=43 // pred_check
        %p1044 = pneg %p168
      $region46: #{encoder_forward.2} parent=43 // pred_check_branch
        %1046 = sbr.rel (%p1044) target = $region48
      $region47: #{encoder_forward.2} parent=43 // pred_region
        _
      $region48: #{encoder_forward.2} parent=43 // pred_fallthru
        _
      // Predicated region
      $region49: #{encoder_forward.2} parent=43 // pred_check
        %p1047 = pneg %p194
      $region50: #{encoder_forward.2} parent=43 // pred_check_branch
        %1049 = sbr.rel (%p1047) target = $region52
      $region51: #{encoder_forward.2} parent=43 // pred_region
        _
      $region52: #{encoder_forward.2} parent=43 // pred_fallthru
        _
    $region44: #{encoder_forward.2} parent=5 // pred_fallthru
      _
    %p1050 = scmp.le.s32.totalorder 2, %s14
    // Predicated region
    $region53: #{encoder_forward.2} parent=5 // pred_check
      %p1051 = pneg %p1050
    $region54: #{encoder_forward.2} parent=5 // pred_check_branch
      %1053 = sbr.rel (%p1051) target = $region56
    $region55: #{encoder_forward.2} parent=5 // pred_region
      %s1054 = ssub.s32 %s14, 2
      // Predicated region
      $region57: #{encoder_forward.2} parent=55 // pred_check
        %p1055 = pneg %p174
      $region58: #{encoder_forward.2} parent=55 // pred_check_branch
        %1057 = sbr.rel (%p1055) target = $region60
      $region59: #{encoder_forward.2} parent=55 // pred_region
        %p1058 = scmp.lt.s32.totalorder %s20, 1
        %s1059 = scalar_select %p1058, %s20, 1
        %s1060 = smul.addr %s1059, 2
        %s1061 = smul.addr %s1060, 4
        %s1062 = scalar_lea.vmem %s6, %s1061
      $region60: #{encoder_forward.2} parent=55 // pred_fallthru
        _
      // Predicated region
      $region61: #{encoder_forward.2} parent=55 // pred_check
        %p1063 = pneg %p200
      $region62: #{encoder_forward.2} parent=55 // pred_check_branch
        %1065 = sbr.rel (%p1063) target = $region64
      $region63: #{encoder_forward.2} parent=55 // pred_region
        %p1066 = scmp.lt.s32.totalorder %s20, 1
        %s1067 = scalar_select %p1066, %s20, 1
        %s1068 = smul.addr %s1067, 2
        %s1069 = smul.addr %s1068, 4
        %s1070 = scalar_lea.vmem %s7, %s1069
      $region64: #{encoder_forward.2} parent=55 // pred_fallthru
        _
    $region56: #{encoder_forward.2} parent=5 // pred_fallthru
      _
  $region6: #{encoder_forward.2} parent=0 // loop_footer
    %s18 = sadd.s32 1, %s14
  $region7: #{encoder_forward.2} parent=0 // loop_footer_branch
    %13 = sbr.rel target = $region3
  $region8: #{encoder_forward.2} parent=0 // loop_exit
    _

// kernel: encoder_forward.3
$region0: #{encoder_forward.3}
  #allocation0 [shape = 'u32[]', space=smem, size = 0x4, offset = 0x4, fixed_abs, tag = 'smem constant byte address 0x4 - core index']
  #allocation1 [shape = 'u32[144,128]{1,0:T(1,128)}', space=vmem, size = 0x12000, scoped, tag = 'internal scratch']
  #allocation2 [shape = 'f32[2,16]{1,0:T(2,128)}', space=vmem, size = 0x400, scoped, tag = 'scratch operand']
  #allocation3 [shape = 'f32[2,16]{1,0:T(2,128)}', space=vmem, size = 0x400, scoped, tag = 'scratch operand']
  #allocation4 [shape = 'f32[2,16]{1,0:T(2,128)}', space=vmem, size = 0x400, scoped, tag = 'scratch operand']
  #allocation5 [shape = 'f32[2,16]{1,0:T(2,128)}', space=vmem, size = 0x400, scoped, tag = 'scratch operand']
  %s0 = inlined_call_operand.vmem [shape: bf16[2,16,64], index: 0, kind: input, shape index: {}]
  %s1 = inlined_call_operand.vmem [shape: bf16[2,16,64], index: 1, kind: input, shape index: {}]
  %s2 = inlined_call_operand.vmem [shape: s32[2,1], index: 2, kind: input, shape index: {}]
  %s3 = inlined_call_operand.vmem [shape: bf16[16,64], index: 3, kind: input, shape index: {}]
  %s4 = inlined_call_operand.vmem [shape: bf16[16,64], index: 4, kind: input, shape index: {}]
  %s5 = inlined_call_operand.vmem [shape: f32[16,2,16], index: 5, kind: output, shape index: {0}]
  %s6 = inlined_call_operand.vmem [shape: f32[16,2,16], index: 6, kind: output, shape index: {1}]
  %7 = xla_tuple %s5, %s6
  %s8 = sld [smem:[#allocation0]]
  $region147: #{encoder_forward.3} parent=0
    _
  %s10 = ssub.s32 1, %s8
  %s11 = scalar_select 0, %s10, %s8
  $region1: #{encoder_forward.3} parent=0
    #allocation6 [shape = 'u8[8192]{0}', space=vmem, size = 0x2000, scoped, tag = 'input window, operand 0']
    #allocation7 [shape = 'u8[8192]{0}', space=vmem, size = 0x2000, scoped, tag = 'input window, operand 1']
    loop: start=0, step=1, limit=4
    $region2: #{encoder_forward.3} parent=1 // loop_pre_header
      _
    $region3: #{encoder_forward.3} parent=1 // loop_header
      %s13 = sphi 0, %s17
      %p14 = scmp.ge.s32.totalorder %s13, 4
      %s23 = sphi 0, %s25
      %s26 = sphi 0, %s23
      %s27 = sphi 0, %s26
      %s43 = sphi 0, %s27
      %s51 = sphi 0, %s53
      %s54 = sphi 0, %s51
      %s55 = sphi 0, %s54
      %s71 = sphi 0, %s55
      %s75 = sphi 0, %s75
      %s77 = sphi 0, %s75
      %s78 = sphi 0, %s77
      %s92 = sphi 0, %s78
      %s96 = sphi 0, %s96
      %s98 = sphi 0, %s96
      %s99 = sphi 0, %s98
      %s113 = sphi 0, %s99
      %s117 = sphi 0, %s117
      %s119 = sphi 0, %s117
      %s120 = sphi 0, %s119
      %s134 = sphi 0, %s120
      %s140 = sphi 0, %s142
      %s143 = sphi 0, %s140
      %s144 = sphi 0, %s143
      %s160 = sphi 0, %s144
      %s168 = sphi 0, %s170
      %s171 = sphi 0, %s168
      %s172 = sphi 0, %s171
      %s188 = sphi 0, %s172
    $region4: #{encoder_forward.3} parent=1 // loop_header_branch
      %16 = sbr.rel (%p14) target = $region8
    $region5: #{encoder_forward.3} parent=1 // loop_body
      %s18 = ssub.s32 %s13, 1
      %s19 = ssub.s32 %s13, 2
      %s20 = sadd.s32 %s13, 1
      %s21 = ssub.s32 %s13, %s20
      %p22 = scmp.eq.s32.totalorder %s21, 0
      %s24 = sadd.s32 %s23, 1
      %s25 = scalar_select %p22, %s23, %s24
      %p28 = pneg %p22
      %p29 = scmp.eq.s32.totalorder %s13, 1
      %p30 = por %p28, %p29
      %p31 = scmp.ne.s32.totalorder %s23, %s26
      %p32 = scmp.eq.s32.totalorder %s13, 0
      %p33 = por %p31, %p32
      %p34 = scmp.ne.s32.totalorder %s23, %s26
      %p35 = scmp.eq.s32.totalorder %s18, 1
      %p36 = por %p34, %p35
      %p37 = scmp.ne.s32.totalorder %s26, %s27
      %p38 = scmp.eq.s32.totalorder %s18, 0
      %p39 = por %p37, %p38
      %p40 = scmp.ne.s32.totalorder %s26, %s27
      %p41 = scmp.eq.s32.totalorder %s19, 1
      %p42 = por %p40, %p41
      %p44 = scmp.ne.s32.totalorder %s27, %s43
      %p45 = scmp.eq.s32.totalorder %s19, 0
      %p46 = por %p44, %p45
      %s47 = ssub.s32 1, %s13
      %s48 = ssub.s32 1, %s20
      %s49 = ssub.s32 %s47, %s48
      %p50 = scmp.eq.s32.totalorder %s49, 0
      %s52 = sadd.s32 %s51, 1
      %s53 = scalar_select %p50, %s51, %s52
      %p56 = pneg %p50
      %p57 = scmp.eq.s32.totalorder %s13, 1
      %p58 = por %p56, %p57
      %p59 = scmp.ne.s32.totalorder %s51, %s54
      %p60 = scmp.eq.s32.totalorder %s13, 0
      %p61 = por %p59, %p60
      %p62 = scmp.ne.s32.totalorder %s51, %s54
      %p63 = scmp.eq.s32.totalorder %s18, 1
      %p64 = por %p62, %p63
      %p65 = scmp.ne.s32.totalorder %s54, %s55
      %p66 = scmp.eq.s32.totalorder %s18, 0
      %p67 = por %p65, %p66
      %p68 = scmp.ne.s32.totalorder %s54, %s55
      %p69 = scmp.eq.s32.totalorder %s19, 1
      %p70 = por %p68, %p69
      %p72 = scmp.ne.s32.totalorder %s55, %s71
      %p73 = scmp.eq.s32.totalorder %s19, 0
      %p74 = por %p72, %p73
      %s76 = sadd.s32 %s75, 1
      %p79 = scmp.eq.s32.totalorder %s13, 1
      %p80 = scmp.ne.s32.totalorder %s75, %s77
      %p81 = scmp.eq.s32.totalorder %s13, 0
      %p82 = por %p80, %p81
      %p83 = scmp.ne.s32.totalorder %s75, %s77
      %p84 = scmp.eq.s32.totalorder %s18, 1
      %p85 = por %p83, %p84
      %p86 = scmp.ne.s32.totalorder %s77, %s78
      %p87 = scmp.eq.s32.totalorder %s18, 0
      %p88 = por %p86, %p87
      %p89 = scmp.ne.s32.totalorder %s77, %s78
      %p90 = scmp.eq.s32.totalorder %s19, 1
      %p91 = por %p89, %p90
      %p93 = scmp.ne.s32.totalorder %s78, %s92
      %p94 = scmp.eq.s32.totalorder %s19, 0
      %p95 = por %p93, %p94
      %s97 = sadd.s32 %s96, 1
      %p100 = scmp.eq.s32.totalorder %s13, 1
      %p101 = scmp.ne.s32.totalorder %s96, %s98
      %p102 = scmp.eq.s32.totalorder %s13, 0
      %p103 = por %p101, %p102
      %p104 = scmp.ne.s32.totalorder %s96, %s98
      %p105 = scmp.eq.s32.totalorder %s18, 1
      %p106 = por %p104, %p105
      %p107 = scmp.ne.s32.totalorder %s98, %s99
      %p108 = scmp.eq.s32.totalorder %s18, 0
      %p109 = por %p107, %p108
      %p110 = scmp.ne.s32.totalorder %s98, %s99
      %p111 = scmp.eq.s32.totalorder %s19, 1
      %p112 = por %p110, %p111
      %p114 = scmp.ne.s32.totalorder %s99, %s113
      %p115 = scmp.eq.s32.totalorder %s19, 0
      %p116 = por %p114, %p115
      %s118 = sadd.s32 %s117, 1
      %p121 = scmp.eq.s32.totalorder %s13, 1
      %p122 = scmp.ne.s32.totalorder %s117, %s119
      %p123 = scmp.eq.s32.totalorder %s13, 0
      %p124 = por %p122, %p123
      %p125 = scmp.ne.s32.totalorder %s117, %s119
      %p126 = scmp.eq.s32.totalorder %s18, 1
      %p127 = por %p125, %p126
      %p128 = scmp.ne.s32.totalorder %s119, %s120
      %p129 = scmp.eq.s32.totalorder %s18, 0
      %p130 = por %p128, %p129
      %p131 = scmp.ne.s32.totalorder %s119, %s120
      %p132 = scmp.eq.s32.totalorder %s19, 1
      %p133 = por %p131, %p132
      %p135 = scmp.ne.s32.totalorder %s120, %s134
      %p136 = scmp.eq.s32.totalorder %s19, 0
      %p137 = por %p135, %p136
      %s138 = ssub.s32 %s13, %s20
      %p139 = scmp.eq.s32.totalorder %s138, 0
      %s141 = sadd.s32 %s140, 1
      %s142 = scalar_select %p139, %s140, %s141
      %p145 = pneg %p139
      %p146 = scmp.eq.s32.totalorder %s13, 1
      %p147 = por %p145, %p146
      %p148 = scmp.ne.s32.totalorder %s140, %s143
      %p149 = scmp.eq.s32.totalorder %s13, 0
      %p150 = por %p148, %p149
      %p151 = scmp.ne.s32.totalorder %s140, %s143
      %p152 = scmp.eq.s32.totalorder %s18, 1
      %p153 = por %p151, %p152
      %p154 = scmp.ne.s32.totalorder %s143, %s144
      %p155 = scmp.eq.s32.totalorder %s18, 0
      %p156 = por %p154, %p155
      %p157 = scmp.ne.s32.totalorder %s143, %s144
      %p158 = scmp.eq.s32.totalorder %s19, 1
      %p159 = por %p157, %p158
      %p161 = scmp.ne.s32.totalorder %s144, %s160
      %p162 = scmp.eq.s32.totalorder %s19, 0
      %p163 = por %p161, %p162
      %s164 = ssub.s32 1, %s13
      %s165 = ssub.s32 1, %s20
      %s166 = ssub.s32 %s164, %s165
      %p167 = scmp.eq.s32.totalorder %s166, 0
      %s169 = sadd.s32 %s168, 1
      %s170 = scalar_select %p167, %s168, %s169
      %p173 = pneg %p167
      %p174 = scmp.eq.s32.totalorder %s13, 1
      %p175 = por %p173, %p174
      %p176 = scmp.ne.s32.totalorder %s168, %s171
      %p177 = scmp.eq.s32.totalorder %s13, 0
      %p178 = por %p176, %p177
      %p179 = scmp.ne.s32.totalorder %s168, %s171
      %p180 = scmp.eq.s32.totalorder %s18, 1
      %p181 = por %p179, %p180
      %p182 = scmp.ne.s32.totalorder %s171, %s172
      %p183 = scmp.eq.s32.totalorder %s18, 0
      %p184 = por %p182, %p183
      %p185 = scmp.ne.s32.totalorder %s171, %s172
      %p186 = scmp.eq.s32.totalorder %s19, 1
      %p187 = por %p185, %p186
      %p189 = scmp.ne.s32.totalorder %s172, %s188
      %p190 = scmp.eq.s32.totalorder %s19, 0
      %p191 = por %p189, %p190
      %p192 = scmp.le.s32.totalorder 1, %s13
      %p193 = scmp.lt.s32.totalorder %s13, 3
      %p194 = pnand %p192, %p193
      %p195 = pneg %p194
      // Predicated region
      $region9: #{encoder_forward.3} parent=5 // pred_check
        _
      $region10: #{encoder_forward.3} parent=5 // pred_check_branch
        %197 = sbr.rel (%p194) target = $region12
      $region11: #{encoder_forward.3} parent=5 // pred_region
        %s198 = ssub.s32 %s13, 1
        // Predicated region
        $region13: #{encoder_forward.3} parent=11 // pred_check
          %p199 = pneg %p88
        $region14: #{encoder_forward.3} parent=11 // pred_check_branch
          %201 = sbr.rel (%p199) target = $region16
        $region15: #{encoder_forward.3} parent=11 // pred_region
          _
        $region16: #{encoder_forward.3} parent=11 // pred_fallthru
          _
        // Predicated region
        $region17: #{encoder_forward.3} parent=11 // pred_check
          %p202 = pneg %p109
        $region18: #{encoder_forward.3} parent=11 // pred_check_branch
          %204 = sbr.rel (%p202) target = $region20
        $region19: #{encoder_forward.3} parent=11 // pred_region
          _
        $region20: #{encoder_forward.3} parent=11 // pred_fallthru
          _
        // Predicated region
        $region21: #{encoder_forward.3} parent=11 // pred_check
          %p205 = pneg %p130
        $region22: #{encoder_forward.3} parent=11 // pred_check_branch
          %207 = sbr.rel (%p205) target = $region24
        $region23: #{encoder_forward.3} parent=11 // pred_region
          _
        $region24: #{encoder_forward.3} parent=11 // pred_fallthru
          _
      $region12: #{encoder_forward.3} parent=5 // pred_fallthru
        _
      %p208 = scmp.lt.s32.totalorder %s13, 2
      // Predicated region
      $region25: #{encoder_forward.3} parent=5 // pred_check
        %p209 = pneg %p208
      $region26: #{encoder_forward.3} parent=5 // pred_check_branch
        %211 = sbr.rel (%p209) target = $region28
      $region27: #{encoder_forward.3} parent=5 // pred_region
        // Predicated region
        $region29: #{encoder_forward.3} parent=27 // pred_check
          %p212 = pneg %p33
        $region30: #{encoder_forward.3} parent=27 // pred_check_branch
          %214 = sbr.rel (%p212) target = $region32
        $region31: #{encoder_forward.3} parent=27 // pred_region
          %s215 = sand.u32 %s23, 1
          %s216 = sand.u32 %s23, 1
          %s217 = smul.addr %s216, 8
          %s218 = scalar_lea.vmem [#allocation6], %s217
          %s219 = smul.addr %s13, 4
          %s220 = scalar_lea.vmem %s0, %s219
          // Predicated region
          $region33: #{encoder_forward.3} parent=31 // pred_check
            _
          $region34: #{encoder_forward.3} parent=31 // pred_check_branch
            %222 = sbr.rel (0) target = $region36
          $region35: #{encoder_forward.3} parent=31 // pred_region
            // Predicated region
            $region37: #{encoder_forward.3} parent=35 // pred_check
              _
            $region38: #{encoder_forward.3} parent=35 // pred_check_branch
              %224 = sbr.rel target = $region40
            $region39: #{encoder_forward.3} parent=35 // pred_region
              // Predicated region
              $region52: #{encoder_forward.3} parent=39 // pred_check
                _
              $region53: #{encoder_forward.3} parent=39 // pred_check_branch
                %242 = sbr.rel (0) target = $region55
              $region54: #{encoder_forward.3} parent=39 // pred_region
                loop: start=0, step=1, limit=1
                $region56: #{encoder_forward.3} parent=54 // loop_pre_header
                  _
                $region57: #{encoder_forward.3} parent=54 // loop_header
                  %s244 = sphi 0, %s248
                  %p245 = scmp.ge.s32.totalorder %s244, 1
                  %s249 = sphi %s220, %s220
                  %s250 = sphi %s218, %s218
                $region58: #{encoder_forward.3} parent=54 // loop_header_branch
                  %247 = sbr.rel (%p245) target = $region62
                $region59: #{encoder_forward.3} parent=54 // loop_body
                  _
                $region60: #{encoder_forward.3} parent=54 // loop_footer
                  %s248 = sadd.s32 1, %s244
                $region61: #{encoder_forward.3} parent=54 // loop_footer_branch
                  %243 = sbr.rel target = $region57
                $region62: #{encoder_forward.3} parent=54 // loop_exit
                  _
                %s252 = ssub.s32 16, 1
                loop: start=0, step=1, limit=1
                $region63: #{encoder_forward.3} parent=54 // loop_pre_header
                  _
                $region64: #{encoder_forward.3} parent=54 // loop_header
                  %s254 = sphi 0, %s258
                  %p255 = scmp.ge.s32.totalorder %s254, 1
                  %s259 = sphi %s220, %s220
                  %s260 = sphi %s218, %s218
                $region65: #{encoder_forward.3} parent=54 // loop_header_branch
                  %257 = sbr.rel (%p255) target = $region69
                $region66: #{encoder_forward.3} parent=54 // loop_body
                  %v261 = vld [vmem:[%s259] sm:%s252]
                  %262 = vst [vmem:[%s260] sm:%s252] %v261
                  %v263 = vld [vmem:[%s259 + $0x8] sm:%s252]
                  %264 = vst [vmem:[%s260 + $0x4] sm:%s252] %v263
                $region67: #{encoder_forward.3} parent=54 // loop_footer
                  %s258 = sadd.s32 1, %s254
                $region68: #{encoder_forward.3} parent=54 // loop_footer_branch
                  %253 = sbr.rel target = $region64
                $region69: #{encoder_forward.3} parent=54 // loop_exit
                  _
              $region55: #{encoder_forward.3} parent=39 // pred_fallthru
                _
            $region40: #{encoder_forward.3} parent=35 // pred_fallthru
              _
            // Predicated region
            $region41: #{encoder_forward.3} parent=35 // pred_check
              _
            $region42: #{encoder_forward.3} parent=35 // pred_check_branch
              %226 = sbr.rel (0) target = $region44
            $region43: #{encoder_forward.3} parent=35 // pred_region
              %s228 = ssub.s32 16, 1
              loop: start=0, step=1, limit=1
              $region45: #{encoder_forward.3} parent=43 // loop_pre_header
                _
              $region46: #{encoder_forward.3} parent=43 // loop_header
                %s230 = sphi 0, %s234
                %p231 = scmp.ge.s32.totalorder %s230, 1
                %s235 = sphi %s220, %s220
                %s236 = sphi %s218, %s218
              $region47: #{encoder_forward.3} parent=43 // loop_header_branch
                %233 = sbr.rel (%p231) target = $region51
              $region48: #{encoder_forward.3} parent=43 // loop_body
                %v237 = vld [vmem:[%s235] sm:%s228]
                %238 = vst [vmem:[%s236] sm:%s228] %v237
                %v239 = vld [vmem:[%s235 + $0x8] sm:%s228]
                %240 = vst [vmem:[%s236 + $0x4] sm:%s228] %v239
              $region49: #{encoder_forward.3} parent=43 // loop_footer
                %s234 = sadd.s32 1, %s230
              $region50: #{encoder_forward.3} parent=43 // loop_footer_branch
                %229 = sbr.rel target = $region46
              $region51: #{encoder_forward.3} parent=43 // loop_exit
                _
            $region44: #{encoder_forward.3} parent=35 // pred_fallthru
              _
          $region36: #{encoder_forward.3} parent=31 // pred_fallthru
            _
          %265 = vnop
        $region32: #{encoder_forward.3} parent=27 // pred_fallthru
          _
        // Predicated region
        $region70: #{encoder_forward.3} parent=27 // pred_check
          %p266 = pneg %p61
        $region71: #{encoder_forward.3} parent=27 // pred_check_branch
          %268 = sbr.rel (%p266) target = $region73
        $region72: #{encoder_forward.3} parent=27 // pred_region
          %s269 = sand.u32 %s51, 1
          %s270 = sand.u32 %s51, 1
          %s271 = smul.addr %s270, 8
          %s272 = scalar_lea.vmem [#allocation7], %s271
          %s273 = ssub.s32 1, %s13
          %s274 = smul.addr %s273, 4
          %s275 = scalar_lea.vmem %s1, %s274
          // Predicated region
          $region74: #{encoder_forward.3} parent=72 // pred_check
            _
          $region75: #{encoder_forward.3} parent=72 // pred_check_branch
            %277 = sbr.rel (0) target = $region77
          $region76: #{encoder_forward.3} parent=72 // pred_region
            // Predicated region
            $region78: #{encoder_forward.3} parent=76 // pred_check
              _
            $region79: #{encoder_forward.3} parent=76 // pred_check_branch
              %279 = sbr.rel target = $region81
            $region80: #{encoder_forward.3} parent=76 // pred_region
              // Predicated region
              $region93: #{encoder_forward.3} parent=80 // pred_check
                _
              $region94: #{encoder_forward.3} parent=80 // pred_check_branch
                %297 = sbr.rel (0) target = $region96
              $region95: #{encoder_forward.3} parent=80 // pred_region
                loop: start=0, step=1, limit=1
                $region97: #{encoder_forward.3} parent=95 // loop_pre_header
                  _
                $region98: #{encoder_forward.3} parent=95 // loop_header
                  %s299 = sphi 0, %s303
                  %p300 = scmp.ge.s32.totalorder %s299, 1
                  %s304 = sphi %s275, %s275
                  %s305 = sphi %s272, %s272
                $region99: #{encoder_forward.3} parent=95 // loop_header_branch
                  %302 = sbr.rel (%p300) target = $region103
                $region100: #{encoder_forward.3} parent=95 // loop_body
                  _
                $region101: #{encoder_forward.3} parent=95 // loop_footer
                  %s303 = sadd.s32 1, %s299
                $region102: #{encoder_forward.3} parent=95 // loop_footer_branch
                  %298 = sbr.rel target = $region98
                $region103: #{encoder_forward.3} parent=95 // loop_exit
                  _
                %s307 = ssub.s32 16, 1
                loop: start=0, step=1, limit=1
                $region104: #{encoder_forward.3} parent=95 // loop_pre_header
                  _
                $region105: #{encoder_forward.3} parent=95 // loop_header
                  %s309 = sphi 0, %s313
                  %p310 = scmp.ge.s32.totalorder %s309, 1
                  %s314 = sphi %s275, %s275
                  %s315 = sphi %s272, %s272
                $region106: #{encoder_forward.3} parent=95 // loop_header_branch
                  %312 = sbr.rel (%p310) target = $region110
                $region107: #{encoder_forward.3} parent=95 // loop_body
                  %v316 = vld [vmem:[%s314] sm:%s307]
                  %317 = vst [vmem:[%s315] sm:%s307] %v316
                  %v318 = vld [vmem:[%s314 + $0x8] sm:%s307]
                  %319 = vst [vmem:[%s315 + $0x4] sm:%s307] %v318
                $region108: #{encoder_forward.3} parent=95 // loop_footer
                  %s313 = sadd.s32 1, %s309
                $region109: #{encoder_forward.3} parent=95 // loop_footer_branch
                  %308 = sbr.rel target = $region105
                $region110: #{encoder_forward.3} parent=95 // loop_exit
                  _
              $region96: #{encoder_forward.3} parent=80 // pred_fallthru
                _
            $region81: #{encoder_forward.3} parent=76 // pred_fallthru
              _
            // Predicated region
            $region82: #{encoder_forward.3} parent=76 // pred_check
              _
            $region83: #{encoder_forward.3} parent=76 // pred_check_branch
              %281 = sbr.rel (0) target = $region85
            $region84: #{encoder_forward.3} parent=76 // pred_region
              %s283 = ssub.s32 16, 1
              loop: start=0, step=1, limit=1
              $region86: #{encoder_forward.3} parent=84 // loop_pre_header
                _
              $region87: #{encoder_forward.3} parent=84 // loop_header
                %s285 = sphi 0, %s289
                %p286 = scmp.ge.s32.totalorder %s285, 1
                %s290 = sphi %s275, %s275
                %s291 = sphi %s272, %s272
              $region88: #{encoder_forward.3} parent=84 // loop_header_branch
                %288 = sbr.rel (%p286) target = $region92
              $region89: #{encoder_forward.3} parent=84 // loop_body
                %v292 = vld [vmem:[%s290] sm:%s283]
                %293 = vst [vmem:[%s291] sm:%s283] %v292
                %v294 = vld [vmem:[%s290 + $0x8] sm:%s283]
                %295 = vst [vmem:[%s291 + $0x4] sm:%s283] %v294
              $region90: #{encoder_forward.3} parent=84 // loop_footer
                %s289 = sadd.s32 1, %s285
              $region91: #{encoder_forward.3} parent=84 // loop_footer_branch
                %284 = sbr.rel target = $region87
              $region92: #{encoder_forward.3} parent=84 // loop_exit
                _
            $region85: #{encoder_forward.3} parent=76 // pred_fallthru
              _
          $region77: #{encoder_forward.3} parent=72 // pred_fallthru
            _
          %320 = vnop
        $region73: #{encoder_forward.3} parent=27 // pred_fallthru
          _
      $region28: #{encoder_forward.3} parent=5 // pred_fallthru
        _
      %p321 = scmp.le.s32.totalorder 1, %s13
      %p322 = scmp.lt.s32.totalorder %s13, 3
      %p323 = pnand %p321, %p322
      %p324 = pneg %p323
      // Predicated region
      $region111: #{encoder_forward.3} parent=5 // pred_check
        _
      $region112: #{encoder_forward.3} parent=5 // pred_check_branch
        %326 = sbr.rel (%p323) target = $region114
      $region113: #{encoder_forward.3} parent=5 // pred_region
        %s327 = ssub.s32 %s13, 1
        %s328 = sand.u32 %s26, 1
        %s329 = sand.u32 %s26, 1
        %s330 = smul.addr %s329, 8
        %s331 = scalar_lea.vmem [#allocation6], %s330
        // Predicated region
        $region115: #{encoder_forward.3} parent=113 // pred_check
          %p332 = pneg %p39
        $region116: #{encoder_forward.3} parent=113 // pred_check_branch
          %334 = sbr.rel (%p332) target = $region118
        $region117: #{encoder_forward.3} parent=113 // pred_region
          _
        $region118: #{encoder_forward.3} parent=113 // pred_fallthru
          _
        %s335 = sand.u32 %s54, 1
        %s336 = sand.u32 %s54, 1
        %s337 = smul.addr %s336, 8
        %s338 = scalar_lea.vmem [#allocation7], %s337
        // Predicated region
        $region119: #{encoder_forward.3} parent=113 // pred_check
          %p339 = pneg %p67
        $region120: #{encoder_forward.3} parent=113 // pred_check_branch
          %341 = sbr.rel (%p339) target = $region122
        $region121: #{encoder_forward.3} parent=113 // pred_region
          _
        $region122: #{encoder_forward.3} parent=113 // pred_fallthru
          _
        %s342 = sand.u32 %s26, 1
        %s343 = sand.u32 %s26, 1
        %s344 = smul.addr %s343, 8
        %s345 = scalar_lea.vmem [#allocation6], %s344
        %p346 = pneg %p39
        %p347 = pneg %p36
        %s348 = sand.u32 %s54, 1
        %s349 = sand.u32 %s54, 1
        %s350 = smul.addr %s349, 8
        %s351 = scalar_lea.vmem [#allocation7], %s350
        %p352 = pneg %p67
        %p353 = pneg %p64
        %p354 = pneg %p88
        %p355 = pneg %p85
        %p356 = pneg %p109
        %p357 = pneg %p106
        %p358 = pneg %p130
        %p359 = pneg %p127
        %p360 = pneg %p156
        %p361 = pneg %p153
        %s362 = smul.u32 8, %s18
        %p363 = scmp.lt.s32.totalorder %s362, 15
        %s364 = scalar_select %p363, %s362, 15
        %s365 = smul.addr %s364, 2
        %s366 = scalar_lea.vmem %s5, %s365
        %p367 = pneg %p184
        %p368 = pneg %p181
        %s369 = ssub.s32 1, %s18
        %s370 = smul.u32 8, %s369
        %p371 = scmp.lt.s32.totalorder %s370, 15
        %s372 = scalar_select %p371, %s370, 15
        %s373 = smul.addr %s372, 2
        %s374 = scalar_lea.vmem %s6, %s373
        %s375 = ssub.s32 1, %s18
        %s376 = smul.u32 8, %s18
        %p377 = scmp.lt.s32.totalorder %s376, 15
        %s378 = scalar_select %p377, %s376, 15
        %s379 = smul.addr %s378, 2
        %s380 = scalar_lea.vmem %s5, %s379
        %s381 = smul.u32 8, %s18
        %s382 = ssub.s32 1, %s18
        %s383 = smul.u32 8, %s382
        %p384 = scmp.lt.s32.totalorder %s383, 15
        %s385 = scalar_select %p384, %s383, 15
        %s386 = smul.addr %s385, 2
        %s387 = scalar_lea.vmem %s6, %s386
        %s388 = ssub.s32 1, %s18
        %s389 = smul.u32 8, %s388
        %p391 = scmp.eq.s32.totalorder %s18, 0
        // Predicated region
        $region123: #{encoder_forward.3} parent=113 // pred_check
          %p392 = pneg %p391
        $region124: #{encoder_forward.3} parent=113 // pred_check_branch
          %394 = sbr.rel (%p392) target = $region126
        $region125: #{encoder_forward.3} parent=113 // pred_region
          %vm395 = vcmask 123904
          %396 = vst.msk [vmem:[#allocation2] sm:$0x3] %vm395, 0.0
          %397 = vst.msk [vmem:[#allocation3] sm:$0x3] %vm395, 0.0
          %398 = vst.msk [vmem:[#allocation4] sm:$0x3] %vm395, 0.0
          %399 = vst.msk [vmem:[#allocation5] sm:$0x3] %vm395, 0.0
        $region126: #{encoder_forward.3} parent=113 // pred_fallthru
          _
        %v400 = vld [vmem:[#allocation2] sm:$0x3]
        %v401 = vld [vmem:[#allocation3] sm:$0x3]
        %v402 = vld [vmem:[#allocation4] sm:$0x3]
        %v403 = vld [vmem:[#allocation5] sm:$0x3]
        %v404 = vld [vmem:[%s3] sm:$0xf]
        %v405 = vld [vmem:[%s3 + $0x4] sm:$0xf]
        %v406 = vld [vmem:[%s4] sm:$0xf]
        %v407 = vld [vmem:[%s4 + $0x4] sm:$0xf]
        %v408 = vld [vmem:[%s2] sm:$0x3]
        %s409 = smul.u32 %s18, 8
        %s410 = ssub.s32 1, %s18
        %s411 = smul.u32 %s410, 8
        %s412 = sadd.s32 %s411, 7
        %v413 = vld [vmem:[%s331] sm:$0x1]
        %v414 = vld [vmem:[%s331 + $0x4] sm:$0x1]
        %v415 = vunpack.c.l.bf16 %v413
        %v416 = vunpack.c.l.bf16 %v414
        %v417 = vpack.c.bf16 %v400, %v400
        %v420 = vunpack.c.l.b16 %v404
        %v421 = vunpack.c.l.b16 %v405
        %v422 = vpack.c.b16 %v421, %v420
        %vm424 = vcmask 130048
        %v426 = vsel %vm424, %v417, 0
        %428 = vmatprep.subr.bf16.mxu0 0
        %429 = vmatpush1.bf16.msra.mxu0 0
        %430 = vmatprep.subr.bf16.mxu0 0
        %431 = vmatpush1.bf16.msra.mxu0 0
        %432 = vmatprep.subr.bf16.mxu0 0
        %433 = vmatpush1.bf16.msra.mxu0 0
        %434 = vmatprep.subr.bf16.mxu0 0
        %435 = vmatpush1.bf16.msra.mxu0 0
        %436 = vmatprep.subr.bf16.mxu0 0
        %437 = vmatpush1.bf16.msra.mxu0 0
        %438 = vmatprep.subr.bf16.mxu0 0
        %439 = vmatpush1.bf16.msra.mxu0 0
        %440 = vmatprep.subr.bf16.mxu0 0
        %441 = vmatpush1.bf16.msra.mxu0 0
        %442 = vmatprep.subr.bf16.mxu0 0
        %443 = vmatpush1.bf16.msra.mxu0 %v422
        %444 = vmatprep.subr.bf16.mxu0 0
        %445 = vmatpush2.bf16.msra.mxu0 0
        %446 = vmatprep.subr.bf16.mxu0 0
        %447 = vmatpush2.bf16.msra.mxu0 0
        %448 = vmatprep.subr.bf16.mxu0 0
        %449 = vmatpush2.bf16.msra.mxu0 0
        %450 = vmatprep.subr.bf16.mxu0 0
        %451 = vmatpush2.bf16.msra.mxu0 0
        %452 = vmatprep.subr.bf16.mxu0 0
        %453 = vmatpush2.bf16.msra.mxu0 0
        %454 = vmatprep.subr.bf16.mxu0 0
        %455 = vmatpush2.bf16.msra.mxu0 0
        %456 = vmatprep.subr.bf16.mxu0 0
        %457 = vmatpush2.bf16.msra.mxu0 0
        %458 = vmatprep.subr.bf16.mxu0 0
        %459 = vmatpush2.bf16.msra.mxu0 0
        %460 = vmatprep.mubr.bf16.mxu0 0
        %461 = vmatmul.mubr.bf16.gmra.mxu0 %v426
        %v462 = vpop.f32.mrf.mxu0
        %v463 = vadd.f32 0.0, %v462
        %v464 = vpop.f32.mrf.mxu0
        %v465 = vpop.f32.mrf.mxu0
        %v466 = vpop.f32.mrf.mxu0
        %467 = vdwg.mxu0
        %v469 = vrot.slane %v463, 1
        %v472 = vadd.f32 %v415, %v463
        %v473 = vadd.f32 %v416, %v469
        %v474 = vxor.u32 %v472, 2147483648
        %v475 = vxor.u32 %v473, 2147483648
        %v476 = vmul.f32 %v474, 1.442695
        %v477 = vpow.pop %v476
        %v478 = vmul.f32 %v475, 1.442695
        %v479 = vpow.pop %v478
        %v480 = vadd.f32 %v477, 1.0
        %v481 = vadd.f32 %v479, 1.0
        %v482 = vrcp.pop %v480
        %v483 = vmul.f32 1.0, %v482
        %v484 = vrcp.pop %v481
        %v485 = vmul.f32 1.0, %v484
        %v486 = vtanh.pop %v472
        %v487 = vtanh.pop %v473
        %v489 = vrot.slane %v401, 1
        %490 = vrot.lane.b32.xlu0 %v401, 16
        %v491 = vpop.permute.xlu0 %490
        %492 = vrot.lane.b32.xlu0 %v489, 16
        %v493 = vpop.permute.xlu0 %492
        %v496 = vmul.f32 %v483, %v491
        %v497 = vmul.f32 %v485, %v493
        %500 = vrot.lane.b32.xlu0 %v486, 80
        %v501 = vpop.permute.xlu0 %500
        %502 = vrot.lane.b32.xlu0 %v487, 80
        %v503 = vpop.permute.xlu0 %502
        %v506 = vmul.f32 %v483, %v501
        %v507 = vmul.f32 %v485, %v503
        %510 = vrot.lane.b32.xlu0 %v506, 16
        %v511 = vpop.permute.xlu0 %510
        %512 = vrot.lane.b32.xlu0 %v507, 16
        %v513 = vpop.permute.xlu0 %512
        %v516 = vadd.f32 %v496, %v511
        %v517 = vadd.f32 %v497, %v513
        %v518 = vtanh.pop %v516
        %v519 = vtanh.pop %v517
        %522 = vrot.lane.b32.xlu0 %v518, 16
        %v523 = vpop.permute.xlu0 %522
        %524 = vrot.lane.b32.xlu0 %v519, 16
        %v525 = vpop.permute.xlu0 %524
        %v528 = vmul.f32 %v483, %v523
        %v529 = vmul.f32 %v485, %v525
        %v530 = vld [vmem:[%s338] sm:$0x8]
        %v531 = vld [vmem:[%s338 + $0x4] sm:$0x8]
        %v532 = vunpack.c.l.bf16 %v530
        %v533 = vunpack.c.l.bf16 %v531
        %v534 = vpack.c.bf16 %v402, %v402
        %v537 = vunpack.c.l.b16 %v406
        %v538 = vunpack.c.l.b16 %v407
        %v539 = vpack.c.b16 %v538, %v537
        %v542 = vsel %vm424, %v534, 0
        %544 = vmatprep.subr.bf16.mxu0 0
        %545 = vmatpush1.bf16.msra.mxu0 0
        %546 = vmatprep.subr.bf16.mxu0 0
        %547 = vmatpush1.bf16.msra.mxu0 0
        %548 = vmatprep.subr.bf16.mxu0 0
        %549 = vmatpush1.bf16.msra.mxu0 0
        %550 = vmatprep.subr.bf16.mxu0 0
        %551 = vmatpush1.bf16.msra.mxu0 0
        %552 = vmatprep.subr.bf16.mxu0 0
        %553 = vmatpush1.bf16.msra.mxu0 0
        %554 = vmatprep.subr.bf16.mxu0 0
        %555 = vmatpush1.bf16.msra.mxu0 0
        %556 = vmatprep.subr.bf16.mxu0 0
        %557 = vmatpush1.bf16.msra.mxu0 0
        %558 = vmatprep.subr.bf16.mxu0 0
        %559 = vmatpush1.bf16.msra.mxu0 %v539
        %560 = vmatprep.subr.bf16.mxu0 0
        %561 = vmatpush2.bf16.msra.mxu0 0
        %562 = vmatprep.subr.bf16.mxu0 0
        %563 = vmatpush2.bf16.msra.mxu0 0
        %564 = vmatprep.subr.bf16.mxu0 0
        %565 = vmatpush2.bf16.msra.mxu0 0
        %566 = vmatprep.subr.bf16.mxu0 0
        %567 = vmatpush2.bf16.msra.mxu0 0
        %568 = vmatprep.subr.bf16.mxu0 0
        %569 = vmatpush2.bf16.msra.mxu0 0
        %570 = vmatprep.subr.bf16.mxu0 0
        %571 = vmatpush2.bf16.msra.mxu0 0
        %572 = vmatprep.subr.bf16.mxu0 0
        %573 = vmatpush2.bf16.msra.mxu0 0
        %574 = vmatprep.subr.bf16.mxu0 0
        %575 = vmatpush2.bf16.msra.mxu0 0
        %576 = vmatprep.mubr.bf16.mxu0 0
        %577 = vmatmul.mubr.bf16.gmra.mxu0 %v542
        %v578 = vpop.f32.mrf.mxu0
        %v579 = vadd.f32 0.0, %v578
        %v580 = vpop.f32.mrf.mxu0
        %v581 = vpop.f32.mrf.mxu0
        %v582 = vpop.f32.mrf.mxu0
        %583 = vdwg.mxu0
        %v585 = vrot.slane %v579, 1
        %v586 = vrot.slane %v579, 2
        %v589 = vadd.f32 %v532, %v585
        %v590 = vadd.f32 %v533, %v586
        %v591 = vxor.u32 %v589, 2147483648
        %v592 = vxor.u32 %v590, 2147483648
        %v593 = vmul.f32 %v591, 1.442695
        %v594 = vpow.pop %v593
        %v595 = vmul.f32 %v592, 1.442695
        %v596 = vpow.pop %v595
        %v597 = vadd.f32 %v594, 1.0
        %v598 = vadd.f32 %v596, 1.0
        %v599 = vrcp.pop %v597
        %v600 = vmul.f32 1.0, %v599
        %v601 = vrcp.pop %v598
        %v602 = vmul.f32 1.0, %v601
        %v603 = vtanh.pop %v589
        %v604 = vtanh.pop %v590
        %v606 = vrot.slane %v403, 1
        %v607 = vrot.slane %v403, 2
        %608 = vrot.lane.b32.xlu0 %v606, 16
        %v609 = vpop.permute.xlu0 %608
        %610 = vrot.lane.b32.xlu0 %v607, 16
        %v611 = vpop.permute.xlu0 %610
        %v614 = vmul.f32 %v600, %v609
        %v615 = vmul.f32 %v602, %v611
        %618 = vrot.lane.b32.xlu0 %v603, 80
        %v619 = vpop.permute.xlu0 %618
        %620 = vrot.lane.b32.xlu0 %v604, 80
        %v621 = vpop.permute.xlu0 %620
        %v624 = vmul.f32 %v600, %v619
        %v625 = vmul.f32 %v602, %v621
        %628 = vrot.lane.b32.xlu0 %v624, 16
        %v629 = vpop.permute.xlu0 %628
        %630 = vrot.lane.b32.xlu0 %v625, 16
        %v631 = vpop.permute.xlu0 %630
        %v634 = vadd.f32 %v614, %v629
        %v635 = vadd.f32 %v615, %v631
        %v636 = vtanh.pop %v634
        %v637 = vtanh.pop %v635
        %640 = vrot.lane.b32.xlu0 %v636, 16
        %v641 = vpop.permute.xlu0 %640
        %642 = vrot.lane.b32.xlu0 %v637, 16
        %v643 = vpop.permute.xlu0 %642
        %v646 = vmul.f32 %v600, %v641
        %v647 = vmul.f32 %v602, %v643
        %v648 = vstv %s409
        %vm649 = vcmp.lt.s32.totalorder %v648, %v408
        %v650 = vstv %s412
        %vm651 = vcmp.lt.s32.totalorder %v650, %v408
        %v652 = vsel %vm649, 1, 0
        %653 = vset.pattern.permute.xlu0 0
        %654 = vperm.xlu0 %653, %v652
        %v655 = vpop.permute.xlu0 %654
        %vm656 = vcmp.eq.s32.totalorder %v655, 1
        %v659 = vrot.slane %v517, 7
        %vm660 = vcmask 1041409
        %v661 = vsel %vm660, %v659, %v516
        %662 = vrot.lane.b32.xlu0 %v661, 112
        %v663 = vpop.permute.xlu0 %662
        %v665 = vsel %vm656, %v663, %v401
        %v668 = vrot.slane %v529, 7
        %v669 = vsel %vm660, %v668, %v528
        %670 = vrot.lane.b32.xlu0 %v669, 96
        %v671 = vpop.permute.xlu0 %670
        %v673 = vsel %vm656, %v671, %v400
        %v674 = vsel %vm651, 1, 0
        %675 = vset.pattern.permute.xlu0 0
        %676 = vperm.xlu0 %675, %v674
        %v677 = vpop.permute.xlu0 %676
        %vm678 = vcmp.eq.s32.totalorder %v677, 1
        %v681 = vrot.slane %v634, 7
        %v682 = vrot.slane %v635, 6
        %v683 = vsel %vm660, %v682, %v681
        %684 = vrot.lane.b32.xlu0 %v683, 112
        %v685 = vpop.permute.xlu0 %684
        %v687 = vsel %vm678, %v685, %v403
        %v690 = vrot.slane %v646, 7
        %v691 = vrot.slane %v647, 6
        %v692 = vsel %vm660, %v691, %v690
        %693 = vrot.lane.b32.xlu0 %v692, 96
        %v694 = vpop.permute.xlu0 %693
        %v696 = vsel %vm678, %v694, %v402
        %v697 = vsel %vm656, %v671, 0.0
        %vm698 = vcmask 123904
        %699 = vst.msk [vmem:[%s380] sm:$0x3] %vm698, %v697
        %v700 = vsel %vm678, %v694, 0.0
        %s701 = scalar_lea.vmem %s387, 14
        %702 = vst.msk [vmem:[%s701] sm:$0x3] %vm698, %v700
        %s703 = sadd.s32 %s409, 1
        %s704 = sadd.s32 %s411, 6
        %v705 = vld [vmem:[%s331] sm:$0x1]
        %v706 = vld [vmem:[%s331 + $0x4] sm:$0x1]
        %v707 = vunpack.c.l.bf16 %v705
        %v708 = vunpack.c.l.bf16 %v706
        %v709 = vpack.c.bf16 %v673, %v673
        %v711 = vsel %vm424, %v709, 0
        %713 = vmatprep.subr.bf16.mxu0 0
        %714 = vmatpush1.bf16.msra.mxu0 0
        %715 = vmatprep.subr.bf16.mxu0 0
        %716 = vmatpush1.bf16.msra.mxu0 0
        %717 = vmatprep.subr.bf16.mxu0 0
        %718 = vmatpush1.bf16.msra.mxu0 0
        %719 = vmatprep.subr.bf16.mxu0 0
        %720 = vmatpush1.bf16.msra.mxu0 0
        %721 = vmatprep.subr.bf16.mxu0 0
        %722 = vmatpush1.bf16.msra.mxu0 0
        %723 = vmatprep.subr.bf16.mxu0 0
        %724 = vmatpush1.bf16.msra.mxu0 0
        %725 = vmatprep.subr.bf16.mxu0 0
        %726 = vmatpush1.bf16.msra.mxu0 0
        %727 = vmatprep.subr.bf16.mxu0 0
        %728 = vmatpush1.bf16.msra.mxu0 %v422
        %729 = vmatprep.subr.bf16.mxu0 0
        %730 = vmatpush2.bf16.msra.mxu0 0
        %731 = vmatprep.subr.bf16.mxu0 0
        %732 = vmatpush2.bf16.msra.mxu0 0
        %733 = vmatprep.subr.bf16.mxu0 0
        %734 = vmatpush2.bf16.msra.mxu0 0
        %735 = vmatprep.subr.bf16.mxu0 0
        %736 = vmatpush2.bf16.msra.mxu0 0
        %737 = vmatprep.subr.bf16.mxu0 0
        %738 = vmatpush2.bf16.msra.mxu0 0
        %739 = vmatprep.subr.bf16.mxu0 0
        %740 = vmatpush2.bf16.msra.mxu0 0
        %741 = vmatprep.subr.bf16.mxu0 0
        %742 = vmatpush2.bf16.msra.mxu0 0
        %743 = vmatprep.subr.bf16.mxu0 0
        %744 = vmatpush2.bf16.msra.mxu0 0
        %745 = vmatprep.mubr.bf16.mxu0 0
        %746 = vmatmul.mubr.bf16.gmra.mxu0 %v711
        %v747 = vpop.f32.mrf.mxu0
        %v748 = vadd.f32 0.0, %v747
        %v749 = vpop.f32.mrf.mxu0
        %v750 = vpop.f32.mrf.mxu0
        %v751 = vpop.f32.mrf.mxu0
        %752 = vdwg.mxu0
        %v754 = vrot.slane %v748, 7
        %v757 = vadd.f32 %v707, %v754
        %v758 = vadd.f32 %v708, %v748
        %v759 = vxor.u32 %v757, 2147483648
        %v760 = vxor.u32 %v758, 2147483648
        %v761 = vmul.f32 %v759, 1.442695
        %v762 = vpow.pop %v761
        %v763 = vmul.f32 %v760, 1.442695
        %v764 = vpow.pop %v763
        %v765 = vadd.f32 %v762, 1.0
        %v766 = vadd.f32 %v764, 1.0
        %v767 = vrcp.pop %v765
        %v768 = vmul.f32 1.0, %v767
        %v769 = vrcp.pop %v766
        %v770 = vmul.f32 1.0, %v769
        %v771 = vtanh.pop %v757
        %v772 = vtanh.pop %v758
        %v774 = vrot.slane %v665, 7
        %775 = vrot.lane.b32.xlu0 %v774, 16
        %v776 = vpop.permute.xlu0 %775
        %777 = vrot.lane.b32.xlu0 %v665, 16
        %v778 = vpop.permute.xlu0 %777
        %v781 = vmul.f32 %v768, %v776
        %v782 = vmul.f32 %v770, %v778
        %785 = vrot.lane.b32.xlu0 %v771, 80
        %v786 = vpop.permute.xlu0 %785
        %787 = vrot.lane.b32.xlu0 %v772, 80
        %v788 = vpop.permute.xlu0 %787
        %v791 = vmul.f32 %v768, %v786
        %v792 = vmul.f32 %v770, %v788
        %795 = vrot.lane.b32.xlu0 %v791, 16
        %v796 = vpop.permute.xlu0 %795
        %797 = vrot.lane.b32.xlu0 %v792, 16
        %v798 = vpop.permute.xlu0 %797
        %v801 = vadd.f32 %v781, %v796
        %v802 = vadd.f32 %v782, %v798
        %v803 = vtanh.pop %v801
        %v804 = vtanh.pop %v802
        %807 = vrot.lane.b32.xlu0 %v803, 16
        %v808 = vpop.permute.xlu0 %807
        %809 = vrot.lane.b32.xlu0 %v804, 16
        %v810 = vpop.permute.xlu0 %809
        %v813 = vmul.f32 %v768, %v808
        %v814 = vmul.f32 %v770, %v810
        %v815 = vld [vmem:[%s338] sm:$0x8]
        %v816 = vld [vmem:[%s338 + $0x4] sm:$0x8]
        %v817 = vunpack.c.l.bf16 %v815
        %v818 = vunpack.c.l.bf16 %v816
        %v819 = vpack.c.bf16 %v696, %v696
        %v821 = vsel %vm424, %v819, 0
        %823 = vmatprep.subr.bf16.mxu0 0
        %824 = vmatpush1.bf16.msra.mxu0 0
        %825 = vmatprep.subr.bf16.mxu0 0
        %826 = vmatpush1.bf16.msra.mxu0 0
        %827 = vmatprep.subr.bf16.mxu0 0
        %828 = vmatpush1.bf16.msra.mxu0 0
        %829 = vmatprep.subr.bf16.mxu0 0
        %830 = vmatpush1.bf16.msra.mxu0 0
        %831 = vmatprep.subr.bf16.mxu0 0
        %832 = vmatpush1.bf16.msra.mxu0 0
        %833 = vmatprep.subr.bf16.mxu0 0
        %834 = vmatpush1.bf16.msra.mxu0 0
        %835 = vmatprep.subr.bf16.mxu0 0
        %836 = vmatpush1.bf16.msra.mxu0 0
        %837 = vmatprep.subr.bf16.mxu0 0
        %838 = vmatpush1.bf16.msra.mxu0 %v539
        %839 = vmatprep.subr.bf16.mxu0 0
        %840 = vmatpush2.bf16.msra.mxu0 0
        %841 = vmatprep.subr.bf16.mxu0 0
        %842 = vmatpush2.bf16.msra.mxu0 0
        %843 = vmatprep.subr.bf16.mxu0 0
        %844 = vmatpush2.bf16.msra.mxu0 0
        %845 = vmatprep.subr.bf16.mxu0 0
        %846 = vmatpush2.bf16.msra.mxu0 0
        %847 = vmatprep.subr.bf16.mxu0 0
        %848 = vmatpush2.bf16.msra.mxu0 0
        %849 = vmatprep.subr.bf16.mxu0 0
        %850 = vmatpush2.bf16.msra.mxu0 0
        %851 = vmatprep.subr.bf16.mxu0 0
        %852 = vmatpush2.bf16.msra.mxu0 0
        %853 = vmatprep.subr.bf16.mxu0 0
        %854 = vmatpush2.bf16.msra.mxu0 0
        %855 = vmatprep.mubr.bf16.mxu0 0
        %856 = vmatmul.mubr.bf16.gmra.mxu0 %v821
        %v857 = vpop.f32.mrf.mxu0
        %v858 = vadd.f32 0.0, %v857
        %v859 = vpop.f32.mrf.mxu0
        %v860 = vpop.f32.mrf.mxu0
        %v861 = vpop.f32.mrf.mxu0
        %862 = vdwg.mxu0
        %v864 = vrot.slane %v858, 2
        %v865 = vrot.slane %v858, 3
        %v868 = vadd.f32 %v817, %v864
        %v869 = vadd.f32 %v818, %v865
        %v870 = vxor.u32 %v868, 2147483648
        %v871 = vxor.u32 %v869, 2147483648
        %v872 = vmul.f32 %v870, 1.442695
        %v873 = vpow.pop %v872
        %v874 = vmul.f32 %v871, 1.442695
        %v875 = vpow.pop %v874
        %v876 = vadd.f32 %v873, 1.0
        %v877 = vadd.f32 %v875, 1.0
        %v878 = vrcp.pop %v876
        %v879 = vmul.f32 1.0, %v878
        %v880 = vrcp.pop %v877
        %v881 = vmul.f32 1.0, %v880
        %v882 = vtanh.pop %v868
        %v883 = vtanh.pop %v869
        %v885 = vrot.slane %v687, 2
        %v886 = vrot.slane %v687, 3
        %887 = vrot.lane.b32.xlu0 %v885, 16
        %v888 = vpop.permute.xlu0 %887
        %889 = vrot.lane.b32.xlu0 %v886, 16
        %v890 = vpop.permute.xlu0 %889
        %v893 = vmul.f32 %v879, %v888
        %v894 = vmul.f32 %v881, %v890
        %897 = vrot.lane.b32.xlu0 %v882, 80
        %v898 = vpop.permute.xlu0 %897
        %899 = vrot.lane.b32.xlu0 %v883, 80
        %v900 = vpop.permute.xlu0 %899
        %v903 = vmul.f32 %v879, %v898
        %v904 = vmul.f32 %v881, %v900
        %907 = vrot.lane.b32.xlu0 %v903, 16
        %v908 = vpop.permute.xlu0 %907
        %909 = vrot.lane.b32.xlu0 %v904, 16
        %v910 = vpop.permute.xlu0 %909
        %v913 = vadd.f32 %v893, %v908
        %v914 = vadd.f32 %v894, %v910
        %v915 = vtanh.pop %v913
        %v916 = vtanh.pop %v914
        %919 = vrot.lane.b32.xlu0 %v915, 16
        %v920 = vpop.permute.xlu0 %919
        %921 = vrot.lane.b32.xlu0 %v916, 16
        %v922 = vpop.permute.xlu0 %921
        %v925 = vmul.f32 %v879, %v920
        %v926 = vmul.f32 %v881, %v922
        %v927 = vstv %s703
        %vm928 = vcmp.lt.s32.totalorder %v927, %v408
        %v929 = vstv %s704
        %vm930 = vcmp.lt.s32.totalorder %v929, %v408
        %v931 = vsel %vm928, 1, 0
        %932 = vset.pattern.permute.xlu0 0
        %933 = vperm.xlu0 %932, %v931
        %v934 = vpop.permute.xlu0 %933
        %vm935 = vcmp.eq.s32.totalorder %v934, 1
        %v938 = vrot.slane %v801, 1
        %v939 = vsel %vm660, %v802, %v938
        %940 = vrot.lane.b32.xlu0 %v939, 112
        %v941 = vpop.permute.xlu0 %940
        %v943 = vsel %vm935, %v941, %v665
        %v946 = vrot.slane %v813, 1
        %v947 = vsel %vm660, %v814, %v946
        %948 = vrot.lane.b32.xlu0 %v947, 96
        %v949 = vpop.permute.xlu0 %948
        %v951 = vsel %vm935, %v949, %v673
        %v952 = vsel %vm930, 1, 0
        %953 = vset.pattern.permute.xlu0 0
        %954 = vperm.xlu0 %953, %v952
        %v955 = vpop.permute.xlu0 %954
        %vm956 = vcmp.eq.s32.totalorder %v955, 1
        %v959 = vrot.slane %v913, 6
        %v960 = vrot.slane %v914, 5
        %v961 = vsel %vm660, %v960, %v959
        %962 = vrot.lane.b32.xlu0 %v961, 112
        %v963 = vpop.permute.xlu0 %962
        %v965 = vsel %vm956, %v963, %v687
        %v968 = vrot.slane %v925, 6
        %v969 = vrot.slane %v926, 5
        %v970 = vsel %vm660, %v969, %v968
        %971 = vrot.lane.b32.xlu0 %v970, 96
        %v972 = vpop.permute.xlu0 %971
        %v974 = vsel %vm956, %v972, %v696
        %v975 = vsel %vm935, %v949, 0.0
        %s976 = scalar_lea.vmem %s380, 2
        %977 = vst.msk [vmem:[%s976] sm:$0x3] %vm698, %v975
        %v978 = vsel %vm956, %v972, 0.0
        %s979 = scalar_lea.vmem %s387, 12
        %980 = vst.msk [vmem:[%s979] sm:$0x3] %vm698, %v978
        %s981 = sadd.s32 %s409, 2
        %s982 = sadd.s32 %s411, 5
        %v983 = vld [vmem:[%s331] sm:$0x2]
        %v984 = vld [vmem:[%s331 + $0x4] sm:$0x2]
        %v985 = vunpack.c.l.bf16 %v983
        %v986 = vunpack.c.l.bf16 %v984
        %v987 = vpack.c.bf16 %v951, %v951
        %v989 = vsel %vm424, %v987, 0
        %991 = vmatprep.subr.bf16.mxu0 0
        %992 = vmatpush1.bf16.msra.mxu0 0
        %993 = vmatprep.subr.bf16.mxu0 0
        %994 = vmatpush1.bf16.msra.mxu0 0
        %995 = vmatprep.subr.bf16.mxu0 0
        %996 = vmatpush1.bf16.msra.mxu0 0
        %997 = vmatprep.subr.bf16.mxu0 0
        %998 = vmatpush1.bf16.msra.mxu0 0
        %999 = vmatprep.subr.bf16.mxu0 0
        %1000 = vmatpush1.bf16.msra.mxu0 0
        %1001 = vmatprep.subr.bf16.mxu0 0
        %1002 = vmatpush1.bf16.msra.mxu0 0
        %1003 = vmatprep.subr.bf16.mxu0 0
        %1004 = vmatpush1.bf16.msra.mxu0 0
        %1005 = vmatprep.subr.bf16.mxu0 0
        %1006 = vmatpush1.bf16.msra.mxu0 %v422
        %1007 = vmatprep.subr.bf16.mxu0 0
        %1008 = vmatpush2.bf16.msra.mxu0 0
        %1009 = vmatprep.subr.bf16.mxu0 0
        %1010 = vmatpush2.bf16.msra.mxu0 0
        %1011 = vmatprep.subr.bf16.mxu0 0
        %1012 = vmatpush2.bf16.msra.mxu0 0
        %1013 = vmatprep.subr.bf16.mxu0 0
        %1014 = vmatpush2.bf16.msra.mxu0 0
        %1015 = vmatprep.subr.bf16.mxu0 0
        %1016 = vmatpush2.bf16.msra.mxu0 0
        %1017 = vmatprep.subr.bf16.mxu0 0
        %1018 = vmatpush2.bf16.msra.mxu0 0
        %1019 = vmatprep.subr.bf16.mxu0 0
        %1020 = vmatpush2.bf16.msra.mxu0 0
        %1021 = vmatprep.subr.bf16.mxu0 0
        %1022 = vmatpush2.bf16.msra.mxu0 0
        %1023 = vmatprep.mubr.bf16.mxu0 0
        %1024 = vmatmul.mubr.bf16.gmra.mxu0 %v989
        %v1025 = vpop.f32.mrf.mxu0
        %v1026 = vadd.f32 0.0, %v1025
        %v1027 = vpop.f32.mrf.mxu0
        %v1028 = vpop.f32.mrf.mxu0
        %v1029 = vpop.f32.mrf.mxu0
        %1030 = vdwg.mxu0
        %v1032 = vrot.slane %v1026, 6
        %v1033 = vrot.slane %v1026, 7
        %v1036 = vadd.f32 %v985, %v1032
        %v1037 = vadd.f32 %v986, %v1033
        %v1038 = vxor.u32 %v1036, 2147483648
        %v1039 = vxor.u32 %v1037, 2147483648
        %v1040 = vmul.f32 %v1038, 1.442695
        %v1041 = vpow.pop %v1040
        %v1042 = vmul.f32 %v1039, 1.442695
        %v1043 = vpow.pop %v1042
        %v1044 = vadd.f32 %v1041, 1.0
        %v1045 = vadd.f32 %v1043, 1.0
        %v1046 = vrcp.pop %v1044
        %v1047 = vmul.f32 1.0, %v1046
        %v1048 = vrcp.pop %v1045
        %v1049 = vmul.f32 1.0, %v1048
        %v1050 = vtanh.pop %v1036
        %v1051 = vtanh.pop %v1037
        %v1053 = vrot.slane %v943, 6
        %v1054 = vrot.slane %v943, 7
        %1055 = vrot.lane.b32.xlu0 %v1053, 16
        %v1056 = vpop.permute.xlu0 %1055
        %1057 = vrot.lane.b32.xlu0 %v1054, 16
        %v1058 = vpop.permute.xlu0 %1057
        %v1061 = vmul.f32 %v1047, %v1056
        %v1062 = vmul.f32 %v1049, %v1058
        %1065 = vrot.lane.b32.xlu0 %v1050, 80
        %v1066 = vpop.permute.xlu0 %1065
        %1067 = vrot.lane.b32.xlu0 %v1051, 80
        %v1068 = vpop.permute.xlu0 %1067
        %v1071 = vmul.f32 %v1047, %v1066
        %v1072 = vmul.f32 %v1049, %v1068
        %1075 = vrot.lane.b32.xlu0 %v1071, 16
        %v1076 = vpop.permute.xlu0 %1075
        %1077 = vrot.lane.b32.xlu0 %v1072, 16
        %v1078 = vpop.permute.xlu0 %1077
        %v1081 = vadd.f32 %v1061, %v1076
        %v1082 = vadd.f32 %v1062, %v1078
        %v1083 = vtanh.pop %v1081
        %v1084 = vtanh.pop %v1082
        %1087 = vrot.lane.b32.xlu0 %v1083, 16
        %v1088 = vpop.permute.xlu0 %1087
        %1089 = vrot.lane.b32.xlu0 %v1084, 16
        %v1090 = vpop.permute.xlu0 %1089
        %v1093 = vmul.f32 %v1047, %v1088
        %v1094 = vmul.f32 %v1049, %v1090
        %v1095 = vld [vmem:[%s338] sm:$0x4]
        %v1096 = vld [vmem:[%s338 + $0x4] sm:$0x4]
        %v1097 = vunpack.c.l.bf16 %v1095
        %v1098 = vunpack.c.l.bf16 %v1096
        %v1099 = vpack.c.bf16 %v974, %v974
        %v1101 = vsel %vm424, %v1099, 0
        %1103 = vmatprep.subr.bf16.mxu0 0
        %1104 = vmatpush1.bf16.msra.mxu0 0
        %1105 = vmatprep.subr.bf16.mxu0 0
        %1106 = vmatpush1.bf16.msra.mxu0 0
        %1107 = vmatprep.subr.bf16.mxu0 0
        %1108 = vmatpush1.bf16.msra.mxu0 0
        %1109 = vmatprep.subr.bf16.mxu0 0
        %1110 = vmatpush1.bf16.msra.mxu0 0
        %1111 = vmatprep.subr.bf16.mxu0 0
        %1112 = vmatpush1.bf16.msra.mxu0 0
        %1113 = vmatprep.subr.bf16.mxu0 0
        %1114 = vmatpush1.bf16.msra.mxu0 0
        %1115 = vmatprep.subr.bf16.mxu0 0
        %1116 = vmatpush1.bf16.msra.mxu0 0
        %1117 = vmatprep.subr.bf16.mxu0 0
        %1118 = vmatpush1.bf16.msra.mxu0 %v539
        %1119 = vmatprep.subr.bf16.mxu0 0
        %1120 = vmatpush2.bf16.msra.mxu0 0
        %1121 = vmatprep.subr.bf16.mxu0 0
        %1122 = vmatpush2.bf16.msra.mxu0 0
        %1123 = vmatprep.subr.bf16.mxu0 0
        %1124 = vmatpush2.bf16.msra.mxu0 0
        %1125 = vmatprep.subr.bf16.mxu0 0
        %1126 = vmatpush2.bf16.msra.mxu0 0
        %1127 = vmatprep.subr.bf16.mxu0 0
        %1128 = vmatpush2.bf16.msra.mxu0 0
        %1129 = vmatprep.subr.bf16.mxu0 0
        %1130 = vmatpush2.bf16.msra.mxu0 0
        %1131 = vmatprep.subr.bf16.mxu0 0
        %1132 = vmatpush2.bf16.msra.mxu0 0
        %1133 = vmatprep.subr.bf16.mxu0 0
        %1134 = vmatpush2.bf16.msra.mxu0 0
        %1135 = vmatprep.mubr.bf16.mxu0 0
        %1136 = vmatmul.mubr.bf16.gmra.mxu0 %v1101
        %v1137 = vpop.f32.mrf.mxu0
        %v1138 = vadd.f32 0.0, %v1137
        %v1139 = vpop.f32.mrf.mxu0
        %v1140 = vpop.f32.mrf.mxu0
        %v1141 = vpop.f32.mrf.mxu0
        %1142 = vdwg.mxu0
        %v1144 = vrot.slane %v1138, 3
        %v1145 = vrot.slane %v1138, 4
        %v1148 = vadd.f32 %v1097, %v1144
        %v1149 = vadd.f32 %v1098, %v1145
        %v1150 = vxor.u32 %v1148, 2147483648
        %v1151 = vxor.u32 %v1149, 2147483648
        %v1152 = vmul.f32 %v1150, 1.442695
        %v1153 = vpow.pop %v1152
        %v1154 = vmul.f32 %v1151, 1.442695
        %v1155 = vpow.pop %v1154
        %v1156 = vadd.f32 %v1153, 1.0
        %v1157 = vadd.f32 %v1155, 1.0
        %v1158 = vrcp.pop %v1156
        %v1159 = vmul.f32 1.0, %v1158
        %v1160 = vrcp.pop %v1157
        %v1161 = vmul.f32 1.0, %v1160
        %v1162 = vtanh.pop %v1148
        %v1163 = vtanh.pop %v1149
        %v1165 = vrot.slane %v965, 3
        %v1166 = vrot.slane %v965, 4
        %1167 = vrot.lane.b32.xlu0 %v1165, 16
        %v1168 = vpop.permute.xlu0 %1167
        %1169 = vrot.lane.b32.xlu0 %v1166, 16
        %v1170 = vpop.permute.xlu0 %1169
        %v1173 = vmul.f32 %v1159, %v1168
        %v1174 = vmul.f32 %v1161, %v1170
        %1177 = vrot.lane.b32.xlu0 %v1162, 80
        %v1178 = vpop.permute.xlu0 %1177
        %1179 = vrot.lane.b32.xlu0 %v1163, 80
        %v1180 = vpop.permute.xlu0 %1179
        %v1183 = vmul.f32 %v1159, %v1178
        %v1184 = vmul.f32 %v1161, %v1180
        %1187 = vrot.lane.b32.xlu0 %v1183, 16
        %v1188 = vpop.permute.xlu0 %1187
        %1189 = vrot.lane.b32.xlu0 %v1184, 16
        %v1190 = vpop.permute.xlu0 %1189
        %v1193 = vadd.f32 %v1173, %v1188
        %v1194 = vadd.f32 %v1174, %v1190
        %v1195 = vtanh.pop %v1193
        %v1196 = vtanh.pop %v1194
        %1199 = vrot.lane.b32.xlu0 %v1195, 16
        %v1200 = vpop.permute.xlu0 %1199
        %1201 = vrot.lane.b32.xlu0 %v1196, 16
        %v1202 = vpop.permute.xlu0 %1201
        %v1205 = vmul.f32 %v1159, %v1200
        %v1206 = vmul.f32 %v1161, %v1202
        %v1207 = vstv %s981
        %vm1208 = vcmp.lt.s32.totalorder %v1207, %v408
        %v1209 = vstv %s982
        %vm1210 = vcmp.lt.s32.totalorder %v1209, %v408
        %v1211 = vsel %vm1208, 1, 0
        %1212 = vset.pattern.permute.xlu0 0
        %1213 = vperm.xlu0 %1212, %v1211
        %v1214 = vpop.permute.xlu0 %1213
        %vm1215 = vcmp.eq.s32.totalorder %v1214, 1
        %v1218 = vrot.slane %v1081, 2
        %v1219 = vrot.slane %v1082, 1
        %v1220 = vsel %vm660, %v1219, %v1218
        %1221 = vrot.lane.b32.xlu0 %v1220, 112
        %v1222 = vpop.permute.xlu0 %1221
        %v1224 = vsel %vm1215, %v1222, %v943
        %v1227 = vrot.slane %v1093, 2
        %v1228 = vrot.slane %v1094, 1
        %v1229 = vsel %vm660, %v1228, %v1227
        %1230 = vrot.lane.b32.xlu0 %v1229, 96
        %v1231 = vpop.permute.xlu0 %1230
        %v1233 = vsel %vm1215, %v1231, %v951
        %v1234 = vsel %vm1210, 1, 0
        %1235 = vset.pattern.permute.xlu0 0
        %1236 = vperm.xlu0 %1235, %v1234
        %v1237 = vpop.permute.xlu0 %1236
        %vm1238 = vcmp.eq.s32.totalorder %v1237, 1
        %v1241 = vrot.slane %v1193, 5
        %v1242 = vrot.slane %v1194, 4
        %v1243 = vsel %vm660, %v1242, %v1241
        %1244 = vrot.lane.b32.xlu0 %v1243, 112
        %v1245 = vpop.permute.xlu0 %1244
        %v1247 = vsel %vm1238, %v1245, %v965
        %v1250 = vrot.slane %v1205, 5
        %v1251 = vrot.slane %v1206, 4
        %v1252 = vsel %vm660, %v1251, %v1250
        %1253 = vrot.lane.b32.xlu0 %v1252, 96
        %v1254 = vpop.permute.xlu0 %1253
        %v1256 = vsel %vm1238, %v1254, %v974
        %v1257 = vsel %vm1215, %v1231, 0.0
        %s1258 = scalar_lea.vmem %s380, 4
        %1259 = vst.msk [vmem:[%s1258] sm:$0x3] %vm698, %v1257
        %v1260 = vsel %vm1238, %v1254, 0.0
        %s1261 = scalar_lea.vmem %s387, 10
        %1262 = vst.msk [vmem:[%s1261] sm:$0x3] %vm698, %v1260
        %s1263 = sadd.s32 %s409, 3
        %s1264 = sadd.s32 %s411, 4
        %v1265 = vld [vmem:[%s331] sm:$0x2]
        %v1266 = vld [vmem:[%s331 + $0x4] sm:$0x2]
        %v1267 = vunpack.c.l.bf16 %v1265
        %v1268 = vunpack.c.l.bf16 %v1266
        %v1269 = vpack.c.bf16 %v1233, %v1233
        %v1271 = vsel %vm424, %v1269, 0
        %1273 = vmatprep.subr.bf16.mxu0 0
        %1274 = vmatpush1.bf16.msra.mxu0 0
        %1275 = vmatprep.subr.bf16.mxu0 0
        %1276 = vmatpush1.bf16.msra.mxu0 0
        %1277 = vmatprep.subr.bf16.mxu0 0
        %1278 = vmatpush1.bf16.msra.mxu0 0
        %1279 = vmatprep.subr.bf16.mxu0 0
        %1280 = vmatpush1.bf16.msra.mxu0 0
        %1281 = vmatprep.subr.bf16.mxu0 0
        %1282 = vmatpush1.bf16.msra.mxu0 0
        %1283 = vmatprep.subr.bf16.mxu0 0
        %1284 = vmatpush1.bf16.msra.mxu0 0
        %1285 = vmatprep.subr.bf16.mxu0 0
        %1286 = vmatpush1.bf16.msra.mxu0 0
        %1287 = vmatprep.subr.bf16.mxu0 0
        %1288 = vmatpush1.bf16.msra.mxu0 %v422
        %1289 = vmatprep.subr.bf16.mxu0 0
        %1290 = vmatpush2.bf16.msra.mxu0 0
        %1291 = vmatprep.subr.bf16.mxu0 0
        %1292 = vmatpush2.bf16.msra.mxu0 0
        %1293 = vmatprep.subr.bf16.mxu0 0
        %1294 = vmatpush2.bf16.msra.mxu0 0
        %1295 = vmatprep.subr.bf16.mxu0 0
        %1296 = vmatpush2.bf16.msra.mxu0 0
        %1297 = vmatprep.subr.bf16.mxu0 0
        %1298 = vmatpush2.bf16.msra.mxu0 0
        %1299 = vmatprep.subr.bf16.mxu0 0
        %1300 = vmatpush2.bf16.msra.mxu0 0
        %1301 = vmatprep.subr.bf16.mxu0 0
        %1302 = vmatpush2.bf16.msra.mxu0 0
        %1303 = vmatprep.subr.bf16.mxu0 0
        %1304 = vmatpush2.bf16.msra.mxu0 0
        %1305 = vmatprep.mubr.bf16.mxu0 0
        %1306 = vmatmul.mubr.bf16.gmra.mxu0 %v1271
        %v1307 = vpop.f32.mrf.mxu0
        %v1308 = vadd.f32 0.0, %v1307
        %v1309 = vpop.f32.mrf.mxu0
        %v1310 = vpop.f32.mrf.mxu0
        %v1311 = vpop.f32.mrf.mxu0
        %1312 = vdwg.mxu0
        %v1314 = vrot.slane %v1308, 5
        %v1315 = vrot.slane %v1308, 6
        %v1318 = vadd.f32 %v1267, %v1314
        %v1319 = vadd.f32 %v1268, %v1315
        %v1320 = vxor.u32 %v1318, 2147483648
        %v1321 = vxor.u32 %v1319, 2147483648
        %v1322 = vmul.f32 %v1320, 1.442695
        %v1323 = vpow.pop %v1322
        %v1324 = vmul.f32 %v1321, 1.442695
        %v1325 = vpow.pop %v1324
        %v1326 = vadd.f32 %v1323, 1.0
        %v1327 = vadd.f32 %v1325, 1.0
        %v1328 = vrcp.pop %v1326
        %v1329 = vmul.f32 1.0, %v1328
        %v1330 = vrcp.pop %v1327
        %v1331 = vmul.f32 1.0, %v1330
        %v1332 = vtanh.pop %v1318
        %v1333 = vtanh.pop %v1319
        %v1335 = vrot.slane %v1224, 5
        %v1336 = vrot.slane %v1224, 6
        %1337 = vrot.lane.b32.xlu0 %v1335, 16
        %v1338 = vpop.permute.xlu0 %1337
        %1339 = vrot.lane.b32.xlu0 %v1336, 16
        %v1340 = vpop.permute.xlu0 %1339
        %v1343 = vmul.f32 %v1329, %v1338
        %v1344 = vmul.f32 %v1331, %v1340
        %1347 = vrot.lane.b32.xlu0 %v1332, 80
        %v1348 = vpop.permute.xlu0 %1347
        %1349 = vrot.lane.b32.xlu0 %v1333, 80
        %v1350 = vpop.permute.xlu0 %1349
        %v1353 = vmul.f32 %v1329, %v1348
        %v1354 = vmul.f32 %v1331, %v1350
        %1357 = vrot.lane.b32.xlu0 %v1353, 16
        %v1358 = vpop.permute.xlu0 %1357
        %1359 = vrot.lane.b32.xlu0 %v1354, 16
        %v1360 = vpop.permute.xlu0 %1359
        %v1363 = vadd.f32 %v1343, %v1358
        %v1364 = vadd.f32 %v1344, %v1360
        %v1365 = vtanh.pop %v1363
        %v1366 = vtanh.pop %v1364
        %1369 = vrot.lane.b32.xlu0 %v1365, 16
        %v1370 = vpop.permute.xlu0 %1369
        %1371 = vrot.lane.b32.xlu0 %v1366, 16
        %v1372 = vpop.permute.xlu0 %1371
        %v1375 = vmul.f32 %v1329, %v1370
        %v1376 = vmul.f32 %v1331, %v1372
        %v1377 = vld [vmem:[%s338] sm:$0x4]
        %v1378 = vld [vmem:[%s338 + $0x4] sm:$0x4]
        %v1379 = vunpack.c.l.bf16 %v1377
        %v1380 = vunpack.c.l.bf16 %v1378
        %v1381 = vpack.c.bf16 %v1256, %v1256
        %v1383 = vsel %vm424, %v1381, 0
        %1385 = vmatprep.subr.bf16.mxu0 0
        %1386 = vmatpush1.bf16.msra.mxu0 0
        %1387 = vmatprep.subr.bf16.mxu0 0
        %1388 = vmatpush1.bf16.msra.mxu0 0
        %1389 = vmatprep.subr.bf16.mxu0 0
        %1390 = vmatpush1.bf16.msra.mxu0 0
        %1391 = vmatprep.subr.bf16.mxu0 0
        %1392 = vmatpush1.bf16.msra.mxu0 0
        %1393 = vmatprep.subr.bf16.mxu0 0
        %1394 = vmatpush1.bf16.msra.mxu0 0
        %1395 = vmatprep.subr.bf16.mxu0 0
        %1396 = vmatpush1.bf16.msra.mxu0 0
        %1397 = vmatprep.subr.bf16.mxu0 0
        %1398 = vmatpush1.bf16.msra.mxu0 0
        %1399 = vmatprep.subr.bf16.mxu0 0
        %1400 = vmatpush1.bf16.msra.mxu0 %v539
        %1401 = vmatprep.subr.bf16.mxu0 0
        %1402 = vmatpush2.bf16.msra.mxu0 0
        %1403 = vmatprep.subr.bf16.mxu0 0
        %1404 = vmatpush2.bf16.msra.mxu0 0
        %1405 = vmatprep.subr.bf16.mxu0 0
        %1406 = vmatpush2.bf16.msra.mxu0 0
        %1407 = vmatprep.subr.bf16.mxu0 0
        %1408 = vmatpush2.bf16.msra.mxu0 0
        %1409 = vmatprep.subr.bf16.mxu0 0
        %1410 = vmatpush2.bf16.msra.mxu0 0
        %1411 = vmatprep.subr.bf16.mxu0 0
        %1412 = vmatpush2.bf16.msra.mxu0 0
        %1413 = vmatprep.subr.bf16.mxu0 0
        %1414 = vmatpush2.bf16.msra.mxu0 0
        %1415 = vmatprep.subr.bf16.mxu0 0
        %1416 = vmatpush2.bf16.msra.mxu0 0
        %1417 = vmatprep.mubr.bf16.mxu0 0
        %1418 = vmatmul.mubr.bf16.gmra.mxu0 %v1383
        %v1419 = vpop.f32.mrf.mxu0
        %v1420 = vadd.f32 0.0, %v1419
        %v1421 = vpop.f32.mrf.mxu0
        %v1422 = vpop.f32.mrf.mxu0
        %v1423 = vpop.f32.mrf.mxu0
        %1424 = vdwg.mxu0
        %v1426 = vrot.slane %v1420, 4
        %v1427 = vrot.slane %v1420, 5
        %v1430 = vadd.f32 %v1379, %v1426
        %v1431 = vadd.f32 %v1380, %v1427
        %v1432 = vxor.u32 %v1430, 2147483648
        %v1433 = vxor.u32 %v1431, 2147483648
        %v1434 = vmul.f32 %v1432, 1.442695
        %v1435 = vpow.pop %v1434
        %v1436 = vmul.f32 %v1433, 1.442695
        %v1437 = vpow.pop %v1436
        %v1438 = vadd.f32 %v1435, 1.0
        %v1439 = vadd.f32 %v1437, 1.0
        %v1440 = vrcp.pop %v1438
        %v1441 = vmul.f32 1.0, %v1440
        %v1442 = vrcp.pop %v1439
        %v1443 = vmul.f32 1.0, %v1442
        %v1444 = vtanh.pop %v1430
        %v1445 = vtanh.pop %v1431
        %v1447 = vrot.slane %v1247, 4
        %v1448 = vrot.slane %v1247, 5
        %1449 = vrot.lane.b32.xlu0 %v1447, 16
        %v1450 = vpop.permute.xlu0 %1449
        %1451 = vrot.lane.b32.xlu0 %v1448, 16
        %v1452 = vpop.permute.xlu0 %1451
        %v1455 = vmul.f32 %v1441, %v1450
        %v1456 = vmul.f32 %v1443, %v1452
        %1459 = vrot.lane.b32.xlu0 %v1444, 80
        %v1460 = vpop.permute.xlu0 %1459
        %1461 = vrot.lane.b32.xlu0 %v1445, 80
        %v1462 = vpop.permute.xlu0 %1461
        %v1465 = vmul.f32 %v1441, %v1460
        %v1466 = vmul.f32 %v1443, %v1462
        %1469 = vrot.lane.b32.xlu0 %v1465, 16
        %v1470 = vpop.permute.xlu0 %1469
        %1471 = vrot.lane.b32.xlu0 %v1466, 16
        %v1472 = vpop.permute.xlu0 %1471
        %v1475 = vadd.f32 %v1455, %v1470
        %v1476 = vadd.f32 %v1456, %v1472
        %v1477 = vtanh.pop %v1475
        %v1478 = vtanh.pop %v1476
        %1481 = vrot.lane.b32.xlu0 %v1477, 16
        %v1482 = vpop.permute.xlu0 %1481
        %1483 = vrot.lane.b32.xlu0 %v1478, 16
        %v1484 = vpop.permute.xlu0 %1483
        %v1487 = vmul.f32 %v1441, %v1482
        %v1488 = vmul.f32 %v1443, %v1484
        %v1489 = vstv %s1263
        %vm1490 = vcmp.lt.s32.totalorder %v1489, %v408
        %v1491 = vstv %s1264
        %vm1492 = vcmp.lt.s32.totalorder %v1491, %v408
        %v1493 = vsel %vm1490, 1, 0
        %1494 = vset.pattern.permute.xlu0 0
        %1495 = vperm.xlu0 %1494, %v1493
        %v1496 = vpop.permute.xlu0 %1495
        %vm1497 = vcmp.eq.s32.totalorder %v1496, 1
        %v1500 = vrot.slane %v1363, 3
        %v1501 = vrot.slane %v1364, 2
        %v1502 = vsel %vm660, %v1501, %v1500
        %1503 = vrot.lane.b32.xlu0 %v1502, 112
        %v1504 = vpop.permute.xlu0 %1503
        %v1506 = vsel %vm1497, %v1504, %v1224
        %v1509 = vrot.slane %v1375, 3
        %v1510 = vrot.slane %v1376, 2
        %v1511 = vsel %vm660, %v1510, %v1509
        %1512 = vrot.lane.b32.xlu0 %v1511, 96
        %v1513 = vpop.permute.xlu0 %1512
        %v1515 = vsel %vm1497, %v1513, %v1233
        %v1516 = vsel %vm1492, 1, 0
        %1517 = vset.pattern.permute.xlu0 0
        %1518 = vperm.xlu0 %1517, %v1516
        %v1519 = vpop.permute.xlu0 %1518
        %vm1520 = vcmp.eq.s32.totalorder %v1519, 1
        %v1523 = vrot.slane %v1475, 4
        %v1524 = vrot.slane %v1476, 3
        %v1525 = vsel %vm660, %v1524, %v1523
        %1526 = vrot.lane.b32.xlu0 %v1525, 112
        %v1527 = vpop.permute.xlu0 %1526
        %v1529 = vsel %vm1520, %v1527, %v1247
        %v1532 = vrot.slane %v1487, 4
        %v1533 = vrot.slane %v1488, 3
        %v1534 = vsel %vm660, %v1533, %v1532
        %1535 = vrot.lane.b32.xlu0 %v1534, 96
        %v1536 = vpop.permute.xlu0 %1535
        %v1538 = vsel %vm1520, %v1536, %v1256
        %v1539 = vsel %vm1497, %v1513, 0.0
        %s1540 = scalar_lea.vmem %s380, 6
        %1541 = vst.msk [vmem:[%s1540] sm:$0x3] %vm698, %v1539
        %v1542 = vsel %vm1520, %v1536, 0.0
        %s1543 = scalar_lea.vmem %s387, 8
        %1544 = vst.msk [vmem:[%s1543] sm:$0x3] %vm698, %v1542
        %s1545 = sadd.s32 %s409, 4
        %s1546 = sadd.s32 %s411, 3
        %v1547 = vld [vmem:[%s331] sm:$0x4]
        %v1548 = vld [vmem:[%s331 + $0x4] sm:$0x4]
        %v1549 = vunpack.c.l.bf16 %v1547
        %v1550 = vunpack.c.l.bf16 %v1548
        %v1551 = vpack.c.bf16 %v1515, %v1515
        %v1553 = vsel %vm424, %v1551, 0
        %1555 = vmatprep.subr.bf16.mxu0 0
        %1556 = vmatpush1.bf16.msra.mxu0 0
        %1557 = vmatprep.subr.bf16.mxu0 0
        %1558 = vmatpush1.bf16.msra.mxu0 0
        %1559 = vmatprep.subr.bf16.mxu0 0
        %1560 = vmatpush1.bf16.msra.mxu0 0
        %1561 = vmatprep.subr.bf16.mxu0 0
        %1562 = vmatpush1.bf16.msra.mxu0 0
        %1563 = vmatprep.subr.bf16.mxu0 0
        %1564 = vmatpush1.bf16.msra.mxu0 0
        %1565 = vmatprep.subr.bf16.mxu0 0
        %1566 = vmatpush1.bf16.msra.mxu0 0
        %1567 = vmatprep.subr.bf16.mxu0 0
        %1568 = vmatpush1.bf16.msra.mxu0 0
        %1569 = vmatprep.subr.bf16.mxu0 0
        %1570 = vmatpush1.bf16.msra.mxu0 %v422
        %1571 = vmatprep.subr.bf16.mxu0 0
        %1572 = vmatpush2.bf16.msra.mxu0 0
        %1573 = vmatprep.subr.bf16.mxu0 0
        %1574 = vmatpush2.bf16.msra.mxu0 0
        %1575 = vmatprep.subr.bf16.mxu0 0
        %1576 = vmatpush2.bf16.msra.mxu0 0
        %1577 = vmatprep.subr.bf16.mxu0 0
        %1578 = vmatpush2.bf16.msra.mxu0 0
        %1579 = vmatprep.subr.bf16.mxu0 0
        %1580 = vmatpush2.bf16.msra.mxu0 0
        %1581 = vmatprep.subr.bf16.mxu0 0
        %1582 = vmatpush2.bf16.msra.mxu0 0
        %1583 = vmatprep.subr.bf16.mxu0 0
        %1584 = vmatpush2.bf16.msra.mxu0 0
        %1585 = vmatprep.subr.bf16.mxu0 0
        %1586 = vmatpush2.bf16.msra.mxu0 0
        %1587 = vmatprep.mubr.bf16.mxu0 0
        %1588 = vmatmul.mubr.bf16.gmra.mxu0 %v1553
        %v1589 = vpop.f32.mrf.mxu0
        %v1590 = vadd.f32 0.0, %v1589
        %v1591 = vpop.f32.mrf.mxu0
        %v1592 = vpop.f32.mrf.mxu0
        %v1593 = vpop.f32.mrf.mxu0
        %1594 = vdwg.mxu0
        %v1596 = vrot.slane %v1590, 4
        %v1597 = vrot.slane %v1590, 5
        %v1600 = vadd.f32 %v1549, %v1596
        %v1601 = vadd.f32 %v1550, %v1597
        %v1602 = vxor.u32 %v1600, 2147483648
        %v1603 = vxor.u32 %v1601, 2147483648
        %v1604 = vmul.f32 %v1602, 1.442695
        %v1605 = vpow.pop %v1604
        %v1606 = vmul.f32 %v1603, 1.442695
        %v1607 = vpow.pop %v1606
        %v1608 = vadd.f32 %v1605, 1.0
        %v1609 = vadd.f32 %v1607, 1.0
        %v1610 = vrcp.pop %v1608
        %v1611 = vmul.f32 1.0, %v1610
        %v1612 = vrcp.pop %v1609
        %v1613 = vmul.f32 1.0, %v1612
        %v1614 = vtanh.pop %v1600
        %v1615 = vtanh.pop %v1601
        %v1617 = vrot.slane %v1506, 4
        %v1618 = vrot.slane %v1506, 5
        %1619 = vrot.lane.b32.xlu0 %v1617, 16
        %v1620 = vpop.permute.xlu0 %1619
        %1621 = vrot.lane.b32.xlu0 %v1618, 16
        %v1622 = vpop.permute.xlu0 %1621
        %v1625 = vmul.f32 %v1611, %v1620
        %v1626 = vmul.f32 %v1613, %v1622
        %1629 = vrot.lane.b32.xlu0 %v1614, 80
        %v1630 = vpop.permute.xlu0 %1629
        %1631 = vrot.lane.b32.xlu0 %v1615, 80
        %v1632 = vpop.permute.xlu0 %1631
        %v1635 = vmul.f32 %v1611, %v1630
        %v1636 = vmul.f32 %v1613, %v1632
        %1639 = vrot.lane.b32.xlu0 %v1635, 16
        %v1640 = vpop.permute.xlu0 %1639
        %1641 = vrot.lane.b32.xlu0 %v1636, 16
        %v1642 = vpop.permute.xlu0 %1641
        %v1645 = vadd.f32 %v1625, %v1640
        %v1646 = vadd.f32 %v1626, %v1642
        %v1647 = vtanh.pop %v1645
        %v1648 = vtanh.pop %v1646
        %1651 = vrot.lane.b32.xlu0 %v1647, 16
        %v1652 = vpop.permute.xlu0 %1651
        %1653 = vrot.lane.b32.xlu0 %v1648, 16
        %v1654 = vpop.permute.xlu0 %1653
        %v1657 = vmul.f32 %v1611, %v1652
        %v1658 = vmul.f32 %v1613, %v1654
        %v1659 = vld [vmem:[%s338] sm:$0x2]
        %v1660 = vld [vmem:[%s338 + $0x4] sm:$0x2]
        %v1661 = vunpack.c.l.bf16 %v1659
        %v1662 = vunpack.c.l.bf16 %v1660
        %v1663 = vpack.c.bf16 %v1538, %v1538
        %v1665 = vsel %vm424, %v1663, 0
        %1667 = vmatprep.subr.bf16.mxu0 0
        %1668 = vmatpush1.bf16.msra.mxu0 0
        %1669 = vmatprep.subr.bf16.mxu0 0
        %1670 = vmatpush1.bf16.msra.mxu0 0
        %1671 = vmatprep.subr.bf16.mxu0 0
        %1672 = vmatpush1.bf16.msra.mxu0 0
        %1673 = vmatprep.subr.bf16.mxu0 0
        %1674 = vmatpush1.bf16.msra.mxu0 0
        %1675 = vmatprep.subr.bf16.mxu0 0
        %1676 = vmatpush1.bf16.msra.mxu0 0
        %1677 = vmatprep.subr.bf16.mxu0 0
        %1678 = vmatpush1.bf16.msra.mxu0 0
        %1679 = vmatprep.subr.bf16.mxu0 0
        %1680 = vmatpush1.bf16.msra.mxu0 0
        %1681 = vmatprep.subr.bf16.mxu0 0
        %1682 = vmatpush1.bf16.msra.mxu0 %v539
        %1683 = vmatprep.subr.bf16.mxu0 0
        %1684 = vmatpush2.bf16.msra.mxu0 0
        %1685 = vmatprep.subr.bf16.mxu0 0
        %1686 = vmatpush2.bf16.msra.mxu0 0
        %1687 = vmatprep.subr.bf16.mxu0 0
        %1688 = vmatpush2.bf16.msra.mxu0 0
        %1689 = vmatprep.subr.bf16.mxu0 0
        %1690 = vmatpush2.bf16.msra.mxu0 0
        %1691 = vmatprep.subr.bf16.mxu0 0
        %1692 = vmatpush2.bf16.msra.mxu0 0
        %1693 = vmatprep.subr.bf16.mxu0 0
        %1694 = vmatpush2.bf16.msra.mxu0 0
        %1695 = vmatprep.subr.bf16.mxu0 0
        %1696 = vmatpush2.bf16.msra.mxu0 0
        %1697 = vmatprep.subr.bf16.mxu0 0
        %1698 = vmatpush2.bf16.msra.mxu0 0
        %1699 = vmatprep.mubr.bf16.mxu0 0
        %1700 = vmatmul.mubr.bf16.gmra.mxu0 %v1665
        %v1701 = vpop.f32.mrf.mxu0
        %v1702 = vadd.f32 0.0, %v1701
        %v1703 = vpop.f32.mrf.mxu0
        %v1704 = vpop.f32.mrf.mxu0
        %v1705 = vpop.f32.mrf.mxu0
        %1706 = vdwg.mxu0
        %v1708 = vrot.slane %v1702, 5
        %v1709 = vrot.slane %v1702, 6
        %v1712 = vadd.f32 %v1661, %v1708
        %v1713 = vadd.f32 %v1662, %v1709
        %v1714 = vxor.u32 %v1712, 2147483648
        %v1715 = vxor.u32 %v1713, 2147483648
        %v1716 = vmul.f32 %v1714, 1.442695
        %v1717 = vpow.pop %v1716
        %v1718 = vmul.f32 %v1715, 1.442695
        %v1719 = vpow.pop %v1718
        %v1720 = vadd.f32 %v1717, 1.0
        %v1721 = vadd.f32 %v1719, 1.0
        %v1722 = vrcp.pop %v1720
        %v1723 = vmul.f32 1.0, %v1722
        %v1724 = vrcp.pop %v1721
        %v1725 = vmul.f32 1.0, %v1724
        %v1726 = vtanh.pop %v1712
        %v1727 = vtanh.pop %v1713
        %v1729 = vrot.slane %v1529, 5
        %v1730 = vrot.slane %v1529, 6
        %1731 = vrot.lane.b32.xlu0 %v1729, 16
        %v1732 = vpop.permute.xlu0 %1731
        %1733 = vrot.lane.b32.xlu0 %v1730, 16
        %v1734 = vpop.permute.xlu0 %1733
        %v1737 = vmul.f32 %v1723, %v1732
        %v1738 = vmul.f32 %v1725, %v1734
        %1741 = vrot.lane.b32.xlu0 %v1726, 80
        %v1742 = vpop.permute.xlu0 %1741
        %1743 = vrot.lane.b32.xlu0 %v1727, 80
        %v1744 = vpop.permute.xlu0 %1743
        %v1747 = vmul.f32 %v1723, %v1742
        %v1748 = vmul.f32 %v1725, %v1744
        %1751 = vrot.lane.b32.xlu0 %v1747, 16
        %v1752 = vpop.permute.xlu0 %1751
        %1753 = vrot.lane.b32.xlu0 %v1748, 16
        %v1754 = vpop.permute.xlu0 %1753
        %v1757 = vadd.f32 %v1737, %v1752
        %v1758 = vadd.f32 %v1738, %v1754
        %v1759 = vtanh.pop %v1757
        %v1760 = vtanh.pop %v1758
        %1763 = vrot.lane.b32.xlu0 %v1759, 16
        %v1764 = vpop.permute.xlu0 %1763
        %1765 = vrot.lane.b32.xlu0 %v1760, 16
        %v1766 = vpop.permute.xlu0 %1765
        %v1769 = vmul.f32 %v1723, %v1764
        %v1770 = vmul.f32 %v1725, %v1766
        %v1771 = vstv %s1545
        %vm1772 = vcmp.lt.s32.totalorder %v1771, %v408
        %v1773 = vstv %s1546
        %vm1774 = vcmp.lt.s32.totalorder %v1773, %v408
        %v1775 = vsel %vm1772, 1, 0
        %1776 = vset.pattern.permute.xlu0 0
        %1777 = vperm.xlu0 %1776, %v1775
        %v1778 = vpop.permute.xlu0 %1777
        %vm1779 = vcmp.eq.s32.totalorder %v1778, 1
        %v1782 = vrot.slane %v1645, 4
        %v1783 = vrot.slane %v1646, 3
        %v1784 = vsel %vm660, %v1783, %v1782
        %1785 = vrot.lane.b32.xlu0 %v1784, 112
        %v1786 = vpop.permute.xlu0 %1785
        %v1788 = vsel %vm1779, %v1786, %v1506
        %v1791 = vrot.slane %v1657, 4
        %v1792 = vrot.slane %v1658, 3
        %v1793 = vsel %vm660, %v1792, %v1791
        %1794 = vrot.lane.b32.xlu0 %v1793, 96
        %v1795 = vpop.permute.xlu0 %1794
        %v1797 = vsel %vm1779, %v1795, %v1515
        %v1798 = vsel %vm1774, 1, 0
        %1799 = vset.pattern.permute.xlu0 0
        %1800 = vperm.xlu0 %1799, %v1798
        %v1801 = vpop.permute.xlu0 %1800
        %vm1802 = vcmp.eq.s32.totalorder %v1801, 1
        %v1805 = vrot.slane %v1757, 3
        %v1806 = vrot.slane %v1758, 2
        %v1807 = vsel %vm660, %v1806, %v1805
        %1808 = vrot.lane.b32.xlu0 %v1807, 112
        %v1809 = vpop.permute.xlu0 %1808
        %v1811 = vsel %vm1802, %v1809, %v1529
        %v1814 = vrot.slane %v1769, 3
        %v1815 = vrot.slane %v1770, 2
        %v1816 = vsel %vm660, %v1815, %v1814
        %1817 = vrot.lane.b32.xlu0 %v1816, 96
        %v1818 = vpop.permute.xlu0 %1817
        %v1820 = vsel %vm1802, %v1818, %v1538
        %v1821 = vsel %vm1779, %v1795, 0.0
        %s1822 = scalar_lea.vmem %s380, 8
        %1823 = vst.msk [vmem:[%s1822] sm:$0x3] %vm698, %v1821
        %v1824 = vsel %vm1802, %v1818, 0.0
        %s1825 = scalar_lea.vmem %s387, 6
        %1826 = vst.msk [vmem:[%s1825] sm:$0x3] %vm698, %v1824
        %s1827 = sadd.s32 %s409, 5
        %s1828 = sadd.s32 %s411, 2
        %v1829 = vld [vmem:[%s331] sm:$0x4]
        %v1830 = vld [vmem:[%s331 + $0x4] sm:$0x4]
        %v1831 = vunpack.c.l.bf16 %v1829
        %v1832 = vunpack.c.l.bf16 %v1830
        %v1833 = vpack.c.bf16 %v1797, %v1797
        %v1835 = vsel %vm424, %v1833, 0
        %1837 = vmatprep.subr.bf16.mxu0 0
        %1838 = vmatpush1.bf16.msra.mxu0 0
        %1839 = vmatprep.subr.bf16.mxu0 0
        %1840 = vmatpush1.bf16.msra.mxu0 0
        %1841 = vmatprep.subr.bf16.mxu0 0
        %1842 = vmatpush1.bf16.msra.mxu0 0
        %1843 = vmatprep.subr.bf16.mxu0 0
        %1844 = vmatpush1.bf16.msra.mxu0 0
        %1845 = vmatprep.subr.bf16.mxu0 0
        %1846 = vmatpush1.bf16.msra.mxu0 0
        %1847 = vmatprep.subr.bf16.mxu0 0
        %1848 = vmatpush1.bf16.msra.mxu0 0
        %1849 = vmatprep.subr.bf16.mxu0 0
        %1850 = vmatpush1.bf16.msra.mxu0 0
        %1851 = vmatprep.subr.bf16.mxu0 0
        %1852 = vmatpush1.bf16.msra.mxu0 %v422
        %1853 = vmatprep.subr.bf16.mxu0 0
        %1854 = vmatpush2.bf16.msra.mxu0 0
        %1855 = vmatprep.subr.bf16.mxu0 0
        %1856 = vmatpush2.bf16.msra.mxu0 0
        %1857 = vmatprep.subr.bf16.mxu0 0
        %1858 = vmatpush2.bf16.msra.mxu0 0
        %1859 = vmatprep.subr.bf16.mxu0 0
        %1860 = vmatpush2.bf16.msra.mxu0 0
        %1861 = vmatprep.subr.bf16.mxu0 0
        %1862 = vmatpush2.bf16.msra.mxu0 0
        %1863 = vmatprep.subr.bf16.mxu0 0
        %1864 = vmatpush2.bf16.msra.mxu0 0
        %1865 = vmatprep.subr.bf16.mxu0 0
        %1866 = vmatpush2.bf16.msra.mxu0 0
        %1867 = vmatprep.subr.bf16.mxu0 0
        %1868 = vmatpush2.bf16.msra.mxu0 0
        %1869 = vmatprep.mubr.bf16.mxu0 0
        %1870 = vmatmul.mubr.bf16.gmra.mxu0 %v1835
        %v1871 = vpop.f32.mrf.mxu0
        %v1872 = vadd.f32 0.0, %v1871
        %v1873 = vpop.f32.mrf.mxu0
        %v1874 = vpop.f32.mrf.mxu0
        %v1875 = vpop.f32.mrf.mxu0
        %1876 = vdwg.mxu0
        %v1878 = vrot.slane %v1872, 3
        %v1879 = vrot.slane %v1872, 4
        %v1882 = vadd.f32 %v1831, %v1878
        %v1883 = vadd.f32 %v1832, %v1879
        %v1884 = vxor.u32 %v1882, 2147483648
        %v1885 = vxor.u32 %v1883, 2147483648
        %v1886 = vmul.f32 %v1884, 1.442695
        %v1887 = vpow.pop %v1886
        %v1888 = vmul.f32 %v1885, 1.442695
        %v1889 = vpow.pop %v1888
        %v1890 = vadd.f32 %v1887, 1.0
        %v1891 = vadd.f32 %v1889, 1.0
        %v1892 = vrcp.pop %v1890
        %v1893 = vmul.f32 1.0, %v1892
        %v1894 = vrcp.pop %v1891
        %v1895 = vmul.f32 1.0, %v1894
        %v1896 = vtanh.pop %v1882
        %v1897 = vtanh.pop %v1883
        %v1899 = vrot.slane %v1788, 3
        %v1900 = vrot.slane %v1788, 4
        %1901 = vrot.lane.b32.xlu0 %v1899, 16
        %v1902 = vpop.permute.xlu0 %1901
        %1903 = vrot.lane.b32.xlu0 %v1900, 16
        %v1904 = vpop.permute.xlu0 %1903
        %v1907 = vmul.f32 %v1893, %v1902
        %v1908 = vmul.f32 %v1895, %v1904
        %1911 = vrot.lane.b32.xlu0 %v1896, 80
        %v1912 = vpop.permute.xlu0 %1911
        %1913 = vrot.lane.b32.xlu0 %v1897, 80
        %v1914 = vpop.permute.xlu0 %1913
        %v1917 = vmul.f32 %v1893, %v1912
        %v1918 = vmul.f32 %v1895, %v1914
        %1921 = vrot.lane.b32.xlu0 %v1917, 16
        %v1922 = vpop.permute.xlu0 %1921
        %1923 = vrot.lane.b32.xlu0 %v1918, 16
        %v1924 = vpop.permute.xlu0 %1923
        %v1927 = vadd.f32 %v1907, %v1922
        %v1928 = vadd.f32 %v1908, %v1924
        %v1929 = vtanh.pop %v1927
        %v1930 = vtanh.pop %v1928
        %1933 = vrot.lane.b32.xlu0 %v1929, 16
        %v1934 = vpop.permute.xlu0 %1933
        %1935 = vrot.lane.b32.xlu0 %v1930, 16
        %v1936 = vpop.permute.xlu0 %1935
        %v1939 = vmul.f32 %v1893, %v1934
        %v1940 = vmul.f32 %v1895, %v1936
        %v1941 = vld [vmem:[%s338] sm:$0x2]
        %v1942 = vld [vmem:[%s338 + $0x4] sm:$0x2]
        %v1943 = vunpack.c.l.bf16 %v1941
        %v1944 = vunpack.c.l.bf16 %v1942
        %v1945 = vpack.c.bf16 %v1820, %v1820
        %v1947 = vsel %vm424, %v1945, 0
        %1949 = vmatprep.subr.bf16.mxu0 0
        %1950 = vmatpush1.bf16.msra.mxu0 0
        %1951 = vmatprep.subr.bf16.mxu0 0
        %1952 = vmatpush1.bf16.msra.mxu0 0
        %1953 = vmatprep.subr.bf16.mxu0 0
        %1954 = vmatpush1.bf16.msra.mxu0 0
        %1955 = vmatprep.subr.bf16.mxu0 0
        %1956 = vmatpush1.bf16.msra.mxu0 0
        %1957 = vmatprep.subr.bf16.mxu0 0
        %1958 = vmatpush1.bf16.msra.mxu0 0
        %1959 = vmatprep.subr.bf16.mxu0 0
        %1960 = vmatpush1.bf16.msra.mxu0 0
        %1961 = vmatprep.subr.bf16.mxu0 0
        %1962 = vmatpush1.bf16.msra.mxu0 0
        %1963 = vmatprep.subr.bf16.mxu0 0
        %1964 = vmatpush1.bf16.msra.mxu0 %v539
        %1965 = vmatprep.subr.bf16.mxu0 0
        %1966 = vmatpush2.bf16.msra.mxu0 0
        %1967 = vmatprep.subr.bf16.mxu0 0
        %1968 = vmatpush2.bf16.msra.mxu0 0
        %1969 = vmatprep.subr.bf16.mxu0 0
        %1970 = vmatpush2.bf16.msra.mxu0 0
        %1971 = vmatprep.subr.bf16.mxu0 0
        %1972 = vmatpush2.bf16.msra.mxu0 0
        %1973 = vmatprep.subr.bf16.mxu0 0
        %1974 = vmatpush2.bf16.msra.mxu0 0
        %1975 = vmatprep.subr.bf16.mxu0 0
        %1976 = vmatpush2.bf16.msra.mxu0 0
        %1977 = vmatprep.subr.bf16.mxu0 0
        %1978 = vmatpush2.bf16.msra.mxu0 0
        %1979 = vmatprep.subr.bf16.mxu0 0
        %1980 = vmatpush2.bf16.msra.mxu0 0
        %1981 = vmatprep.mubr.bf16.mxu0 0
        %1982 = vmatmul.mubr.bf16.gmra.mxu0 %v1947
        %v1983 = vpop.f32.mrf.mxu0
        %v1984 = vadd.f32 0.0, %v1983
        %v1985 = vpop.f32.mrf.mxu0
        %v1986 = vpop.f32.mrf.mxu0
        %v1987 = vpop.f32.mrf.mxu0
        %1988 = vdwg.mxu0
        %v1990 = vrot.slane %v1984, 6
        %v1991 = vrot.slane %v1984, 7
        %v1994 = vadd.f32 %v1943, %v1990
        %v1995 = vadd.f32 %v1944, %v1991
        %v1996 = vxor.u32 %v1994, 2147483648
        %v1997 = vxor.u32 %v1995, 2147483648
        %v1998 = vmul.f32 %v1996, 1.442695
        %v1999 = vpow.pop %v1998
        %v2000 = vmul.f32 %v1997, 1.442695
        %v2001 = vpow.pop %v2000
        %v2002 = vadd.f32 %v1999, 1.0
        %v2003 = vadd.f32 %v2001, 1.0
        %v2004 = vrcp.pop %v2002
        %v2005 = vmul.f32 1.0, %v2004
        %v2006 = vrcp.pop %v2003
        %v2007 = vmul.f32 1.0, %v2006
        %v2008 = vtanh.pop %v1994
        %v2009 = vtanh.pop %v1995
        %v2011 = vrot.slane %v1811, 6
        %v2012 = vrot.slane %v1811, 7
        %2013 = vrot.lane.b32.xlu0 %v2011, 16
        %v2014 = vpop.permute.xlu0 %2013
        %2015 = vrot.lane.b32.xlu0 %v2012, 16
        %v2016 = vpop.permute.xlu0 %2015
        %v2019 = vmul.f32 %v2005, %v2014
        %v2020 = vmul.f32 %v2007, %v2016
        %2023 = vrot.lane.b32.xlu0 %v2008, 80
        %v2024 = vpop.permute.xlu0 %2023
        %2025 = vrot.lane.b32.xlu0 %v2009, 80
        %v2026 = vpop.permute.xlu0 %2025
        %v2029 = vmul.f32 %v2005, %v2024
        %v2030 = vmul.f32 %v2007, %v2026
        %2033 = vrot.lane.b32.xlu0 %v2029, 16
        %v2034 = vpop.permute.xlu0 %2033
        %2035 = vrot.lane.b32.xlu0 %v2030, 16
        %v2036 = vpop.permute.xlu0 %2035
        %v2039 = vadd.f32 %v2019, %v2034
        %v2040 = vadd.f32 %v2020, %v2036
        %v2041 = vtanh.pop %v2039
        %v2042 = vtanh.pop %v2040
        %2045 = vrot.lane.b32.xlu0 %v2041, 16
        %v2046 = vpop.permute.xlu0 %2045
        %2047 = vrot.lane.b32.xlu0 %v2042, 16
        %v2048 = vpop.permute.xlu0 %2047
        %v2051 = vmul.f32 %v2005, %v2046
        %v2052 = vmul.f32 %v2007, %v2048
        %v2053 = vstv %s1827
        %vm2054 = vcmp.lt.s32.totalorder %v2053, %v408
        %v2055 = vstv %s1828
        %vm2056 = vcmp.lt.s32.totalorder %v2055, %v408
        %v2057 = vsel %vm2054, 1, 0
        %2058 = vset.pattern.permute.xlu0 0
        %2059 = vperm.xlu0 %2058, %v2057
        %v2060 = vpop.permute.xlu0 %2059
        %vm2061 = vcmp.eq.s32.totalorder %v2060, 1
        %v2064 = vrot.slane %v1927, 5
        %v2065 = vrot.slane %v1928, 4
        %v2066 = vsel %vm660, %v2065, %v2064
        %2067 = vrot.lane.b32.xlu0 %v2066, 112
        %v2068 = vpop.permute.xlu0 %2067
        %v2070 = vsel %vm2061, %v2068, %v1788
        %v2073 = vrot.slane %v1939, 5
        %v2074 = vrot.slane %v1940, 4
        %v2075 = vsel %vm660, %v2074, %v2073
        %2076 = vrot.lane.b32.xlu0 %v2075, 96
        %v2077 = vpop.permute.xlu0 %2076
        %v2079 = vsel %vm2061, %v2077, %v1797
        %v2080 = vsel %vm2056, 1, 0
        %2081 = vset.pattern.permute.xlu0 0
        %2082 = vperm.xlu0 %2081, %v2080
        %v2083 = vpop.permute.xlu0 %2082
        %vm2084 = vcmp.eq.s32.totalorder %v2083, 1
        %v2087 = vrot.slane %v2039, 2
        %v2088 = vrot.slane %v2040, 1
        %v2089 = vsel %vm660, %v2088, %v2087
        %2090 = vrot.lane.b32.xlu0 %v2089, 112
        %v2091 = vpop.permute.xlu0 %2090
        %v2093 = vsel %vm2084, %v2091, %v1811
        %v2096 = vrot.slane %v2051, 2
        %v2097 = vrot.slane %v2052, 1
        %v2098 = vsel %vm660, %v2097, %v2096
        %2099 = vrot.lane.b32.xlu0 %v2098, 96
        %v2100 = vpop.permute.xlu0 %2099
        %v2102 = vsel %vm2084, %v2100, %v1820
        %v2103 = vsel %vm2061, %v2077, 0.0
        %s2104 = scalar_lea.vmem %s380, 10
        %2105 = vst.msk [vmem:[%s2104] sm:$0x3] %vm698, %v2103
        %v2106 = vsel %vm2084, %v2100, 0.0
        %s2107 = scalar_lea.vmem %s387, 4
        %2108 = vst.msk [vmem:[%s2107] sm:$0x3] %vm698, %v2106
        %s2109 = sadd.s32 %s409, 6
        %s2110 = sadd.s32 %s411, 1
        %v2111 = vld [vmem:[%s331] sm:$0x8]
        %v2112 = vld [vmem:[%s331 + $0x4] sm:$0x8]
        %v2113 = vunpack.c.l.bf16 %v2111
        %v2114 = vunpack.c.l.bf16 %v2112
        %v2115 = vpack.c.bf16 %v2079, %v2079
        %v2117 = vsel %vm424, %v2115, 0
        %2119 = vmatprep.subr.bf16.mxu0 0
        %2120 = vmatpush1.bf16.msra.mxu0 0
        %2121 = vmatprep.subr.bf16.mxu0 0
        %2122 = vmatpush1.bf16.msra.mxu0 0
        %2123 = vmatprep.subr.bf16.mxu0 0
        %2124 = vmatpush1.bf16.msra.mxu0 0
        %2125 = vmatprep.subr.bf16.mxu0 0
        %2126 = vmatpush1.bf16.msra.mxu0 0
        %2127 = vmatprep.subr.bf16.mxu0 0
        %2128 = vmatpush1.bf16.msra.mxu0 0
        %2129 = vmatprep.subr.bf16.mxu0 0
        %2130 = vmatpush1.bf16.msra.mxu0 0
        %2131 = vmatprep.subr.bf16.mxu0 0
        %2132 = vmatpush1.bf16.msra.mxu0 0
        %2133 = vmatprep.subr.bf16.mxu0 0
        %2134 = vmatpush1.bf16.msra.mxu0 %v422
        %2135 = vmatprep.subr.bf16.mxu0 0
        %2136 = vmatpush2.bf16.msra.mxu0 0
        %2137 = vmatprep.subr.bf16.mxu0 0
        %2138 = vmatpush2.bf16.msra.mxu0 0
        %2139 = vmatprep.subr.bf16.mxu0 0
        %2140 = vmatpush2.bf16.msra.mxu0 0
        %2141 = vmatprep.subr.bf16.mxu0 0
        %2142 = vmatpush2.bf16.msra.mxu0 0
        %2143 = vmatprep.subr.bf16.mxu0 0
        %2144 = vmatpush2.bf16.msra.mxu0 0
        %2145 = vmatprep.subr.bf16.mxu0 0
        %2146 = vmatpush2.bf16.msra.mxu0 0
        %2147 = vmatprep.subr.bf16.mxu0 0
        %2148 = vmatpush2.bf16.msra.mxu0 0
        %2149 = vmatprep.subr.bf16.mxu0 0
        %2150 = vmatpush2.bf16.msra.mxu0 0
        %2151 = vmatprep.mubr.bf16.mxu0 0
        %2152 = vmatmul.mubr.bf16.gmra.mxu0 %v2117
        %v2153 = vpop.f32.mrf.mxu0
        %v2154 = vadd.f32 0.0, %v2153
        %v2155 = vpop.f32.mrf.mxu0
        %v2156 = vpop.f32.mrf.mxu0
        %v2157 = vpop.f32.mrf.mxu0
        %2158 = vdwg.mxu0
        %v2160 = vrot.slane %v2154, 2
        %v2161 = vrot.slane %v2154, 3
        %v2164 = vadd.f32 %v2113, %v2160
        %v2165 = vadd.f32 %v2114, %v2161
        %v2166 = vxor.u32 %v2164, 2147483648
        %v2167 = vxor.u32 %v2165, 2147483648
        %v2168 = vmul.f32 %v2166, 1.442695
        %v2169 = vpow.pop %v2168
        %v2170 = vmul.f32 %v2167, 1.442695
        %v2171 = vpow.pop %v2170
        %v2172 = vadd.f32 %v2169, 1.0
        %v2173 = vadd.f32 %v2171, 1.0
        %v2174 = vrcp.pop %v2172
        %v2175 = vmul.f32 1.0, %v2174
        %v2176 = vrcp.pop %v2173
        %v2177 = vmul.f32 1.0, %v2176
        %v2178 = vtanh.pop %v2164
        %v2179 = vtanh.pop %v2165
        %v2181 = vrot.slane %v2070, 2
        %v2182 = vrot.slane %v2070, 3
        %2183 = vrot.lane.b32.xlu0 %v2181, 16
        %v2184 = vpop.permute.xlu0 %2183
        %2185 = vrot.lane.b32.xlu0 %v2182, 16
        %v2186 = vpop.permute.xlu0 %2185
        %v2189 = vmul.f32 %v2175, %v2184
        %v2190 = vmul.f32 %v2177, %v2186
        %2193 = vrot.lane.b32.xlu0 %v2178, 80
        %v2194 = vpop.permute.xlu0 %2193
        %2195 = vrot.lane.b32.xlu0 %v2179, 80
        %v2196 = vpop.permute.xlu0 %2195
        %v2199 = vmul.f32 %v2175, %v2194
        %v2200 = vmul.f32 %v2177, %v2196
        %2203 = vrot.lane.b32.xlu0 %v2199, 16
        %v2204 = vpop.permute.xlu0 %2203
        %2205 = vrot.lane.b32.xlu0 %v2200, 16
        %v2206 = vpop.permute.xlu0 %2205
        %v2209 = vadd.f32 %v2189, %v2204
        %v2210 = vadd.f32 %v2190, %v2206
        %v2211 = vtanh.pop %v2209
        %v2212 = vtanh.pop %v2210
        %2215 = vrot.lane.b32.xlu0 %v2211, 16
        %v2216 = vpop.permute.xlu0 %2215
        %2217 = vrot.lane.b32.xlu0 %v2212, 16
        %v2218 = vpop.permute.xlu0 %2217
        %v2221 = vmul.f32 %v2175, %v2216
        %v2222 = vmul.f32 %v2177, %v2218
        %v2223 = vld [vmem:[%s338] sm:$0x1]
        %v2224 = vld [vmem:[%s338 + $0x4] sm:$0x1]
        %v2225 = vunpack.c.l.bf16 %v2223
        %v2226 = vunpack.c.l.bf16 %v2224
        %v2227 = vpack.c.bf16 %v2102, %v2102
        %v2229 = vsel %vm424, %v2227, 0
        %2231 = vmatprep.subr.bf16.mxu0 0
        %2232 = vmatpush1.bf16.msra.mxu0 0
        %2233 = vmatprep.subr.bf16.mxu0 0
        %2234 = vmatpush1.bf16.msra.mxu0 0
        %2235 = vmatprep.subr.bf16.mxu0 0
        %2236 = vmatpush1.bf16.msra.mxu0 0
        %2237 = vmatprep.subr.bf16.mxu0 0
        %2238 = vmatpush1.bf16.msra.mxu0 0
        %2239 = vmatprep.subr.bf16.mxu0 0
        %2240 = vmatpush1.bf16.msra.mxu0 0
        %2241 = vmatprep.subr.bf16.mxu0 0
        %2242 = vmatpush1.bf16.msra.mxu0 0
        %2243 = vmatprep.subr.bf16.mxu0 0
        %2244 = vmatpush1.bf16.msra.mxu0 0
        %2245 = vmatprep.subr.bf16.mxu0 0
        %2246 = vmatpush1.bf16.msra.mxu0 %v539
        %2247 = vmatprep.subr.bf16.mxu0 0
        %2248 = vmatpush2.bf16.msra.mxu0 0
        %2249 = vmatprep.subr.bf16.mxu0 0
        %2250 = vmatpush2.bf16.msra.mxu0 0
        %2251 = vmatprep.subr.bf16.mxu0 0
        %2252 = vmatpush2.bf16.msra.mxu0 0
        %2253 = vmatprep.subr.bf16.mxu0 0
        %2254 = vmatpush2.bf16.msra.mxu0 0
        %2255 = vmatprep.subr.bf16.mxu0 0
        %2256 = vmatpush2.bf16.msra.mxu0 0
        %2257 = vmatprep.subr.bf16.mxu0 0
        %2258 = vmatpush2.bf16.msra.mxu0 0
        %2259 = vmatprep.subr.bf16.mxu0 0
        %2260 = vmatpush2.bf16.msra.mxu0 0
        %2261 = vmatprep.subr.bf16.mxu0 0
        %2262 = vmatpush2.bf16.msra.mxu0 0
        %2263 = vmatprep.mubr.bf16.mxu0 0
        %2264 = vmatmul.mubr.bf16.gmra.mxu0 %v2229
        %v2265 = vpop.f32.mrf.mxu0
        %v2266 = vadd.f32 0.0, %v2265
        %v2267 = vpop.f32.mrf.mxu0
        %v2268 = vpop.f32.mrf.mxu0
        %v2269 = vpop.f32.mrf.mxu0
        %2270 = vdwg.mxu0
        %v2272 = vrot.slane %v2266, 7
        %v2275 = vadd.f32 %v2225, %v2272
        %v2276 = vadd.f32 %v2226, %v2266
        %v2277 = vxor.u32 %v2275, 2147483648
        %v2278 = vxor.u32 %v2276, 2147483648
        %v2279 = vmul.f32 %v2277, 1.442695
        %v2280 = vpow.pop %v2279
        %v2281 = vmul.f32 %v2278, 1.442695
        %v2282 = vpow.pop %v2281
        %v2283 = vadd.f32 %v2280, 1.0
        %v2284 = vadd.f32 %v2282, 1.0
        %v2285 = vrcp.pop %v2283
        %v2286 = vmul.f32 1.0, %v2285
        %v2287 = vrcp.pop %v2284
        %v2288 = vmul.f32 1.0, %v2287
        %v2289 = vtanh.pop %v2275
        %v2290 = vtanh.pop %v2276
        %v2292 = vrot.slane %v2093, 7
        %2293 = vrot.lane.b32.xlu0 %v2292, 16
        %v2294 = vpop.permute.xlu0 %2293
        %2295 = vrot.lane.b32.xlu0 %v2093, 16
        %v2296 = vpop.permute.xlu0 %2295
        %v2299 = vmul.f32 %v2286, %v2294
        %v2300 = vmul.f32 %v2288, %v2296
        %2303 = vrot.lane.b32.xlu0 %v2289, 80
        %v2304 = vpop.permute.xlu0 %2303
        %2305 = vrot.lane.b32.xlu0 %v2290, 80
        %v2306 = vpop.permute.xlu0 %2305
        %v2309 = vmul.f32 %v2286, %v2304
        %v2310 = vmul.f32 %v2288, %v2306
        %2313 = vrot.lane.b32.xlu0 %v2309, 16
        %v2314 = vpop.permute.xlu0 %2313
        %2315 = vrot.lane.b32.xlu0 %v2310, 16
        %v2316 = vpop.permute.xlu0 %2315
        %v2319 = vadd.f32 %v2299, %v2314
        %v2320 = vadd.f32 %v2300, %v2316
        %v2321 = vtanh.pop %v2319
        %v2322 = vtanh.pop %v2320
        %2325 = vrot.lane.b32.xlu0 %v2321, 16
        %v2326 = vpop.permute.xlu0 %2325
        %2327 = vrot.lane.b32.xlu0 %v2322, 16
        %v2328 = vpop.permute.xlu0 %2327
        %v2331 = vmul.f32 %v2286, %v2326
        %v2332 = vmul.f32 %v2288, %v2328
        %v2333 = vstv %s2109
        %vm2334 = vcmp.lt.s32.totalorder %v2333, %v408
        %v2335 = vstv %s2110
        %vm2336 = vcmp.lt.s32.totalorder %v2335, %v408
        %v2337 = vsel %vm2334, 1, 0
        %2338 = vset.pattern.permute.xlu0 0
        %2339 = vperm.xlu0 %2338, %v2337
        %v2340 = vpop.permute.xlu0 %2339
        %vm2341 = vcmp.eq.s32.totalorder %v2340, 1
        %v2344 = vrot.slane %v2209, 6
        %v2345 = vrot.slane %v2210, 5
        %v2346 = vsel %vm660, %v2345, %v2344
        %2347 = vrot.lane.b32.xlu0 %v2346, 112
        %v2348 = vpop.permute.xlu0 %2347
        %v2350 = vsel %vm2341, %v2348, %v2070
        %v2353 = vrot.slane %v2221, 6
        %v2354 = vrot.slane %v2222, 5
        %v2355 = vsel %vm660, %v2354, %v2353
        %2356 = vrot.lane.b32.xlu0 %v2355, 96
        %v2357 = vpop.permute.xlu0 %2356
        %v2359 = vsel %vm2341, %v2357, %v2079
        %v2360 = vsel %vm2336, 1, 0
        %2361 = vset.pattern.permute.xlu0 0
        %2362 = vperm.xlu0 %2361, %v2360
        %v2363 = vpop.permute.xlu0 %2362
        %vm2364 = vcmp.eq.s32.totalorder %v2363, 1
        %v2367 = vrot.slane %v2319, 1
        %v2368 = vsel %vm660, %v2320, %v2367
        %2369 = vrot.lane.b32.xlu0 %v2368, 112
        %v2370 = vpop.permute.xlu0 %2369
        %v2372 = vsel %vm2364, %v2370, %v2093
        %v2375 = vrot.slane %v2331, 1
        %v2376 = vsel %vm660, %v2332, %v2375
        %2377 = vrot.lane.b32.xlu0 %v2376, 96
        %v2378 = vpop.permute.xlu0 %2377
        %v2380 = vsel %vm2364, %v2378, %v2102
        %v2381 = vsel %vm2341, %v2357, 0.0
        %s2382 = scalar_lea.vmem %s380, 12
        %2383 = vst.msk [vmem:[%s2382] sm:$0x3] %vm698, %v2381
        %v2384 = vsel %vm2364, %v2378, 0.0
        %s2385 = scalar_lea.vmem %s387, 2
        %2386 = vst.msk [vmem:[%s2385] sm:$0x3] %vm698, %v2384
        %s2387 = sadd.s32 %s409, 7
        %v2388 = vld [vmem:[%s331] sm:$0x8]
        %v2389 = vld [vmem:[%s331 + $0x4] sm:$0x8]
        %v2390 = vunpack.c.l.bf16 %v2388
        %v2391 = vunpack.c.l.bf16 %v2389
        %v2392 = vpack.c.bf16 %v2359, %v2359
        %v2394 = vsel %vm424, %v2392, 0
        %2396 = vmatprep.subr.bf16.mxu0 0
        %2397 = vmatpush1.bf16.msra.mxu0 0
        %2398 = vmatprep.subr.bf16.mxu0 0
        %2399 = vmatpush1.bf16.msra.mxu0 0
        %2400 = vmatprep.subr.bf16.mxu0 0
        %2401 = vmatpush1.bf16.msra.mxu0 0
        %2402 = vmatprep.subr.bf16.mxu0 0
        %2403 = vmatpush1.bf16.msra.mxu0 0
        %2404 = vmatprep.subr.bf16.mxu0 0
        %2405 = vmatpush1.bf16.msra.mxu0 0
        %2406 = vmatprep.subr.bf16.mxu0 0
        %2407 = vmatpush1.bf16.msra.mxu0 0
        %2408 = vmatprep.subr.bf16.mxu0 0
        %2409 = vmatpush1.bf16.msra.mxu0 0
        %2410 = vmatprep.subr.bf16.mxu0 0
        %2411 = vmatpush1.bf16.msra.mxu0 %v422
        %2412 = vmatprep.subr.bf16.mxu0 0
        %2413 = vmatpush2.bf16.msra.mxu0 0
        %2414 = vmatprep.subr.bf16.mxu0 0
        %2415 = vmatpush2.bf16.msra.mxu0 0
        %2416 = vmatprep.subr.bf16.mxu0 0
        %2417 = vmatpush2.bf16.msra.mxu0 0
        %2418 = vmatprep.subr.bf16.mxu0 0
        %2419 = vmatpush2.bf16.msra.mxu0 0
        %2420 = vmatprep.subr.bf16.mxu0 0
        %2421 = vmatpush2.bf16.msra.mxu0 0
        %2422 = vmatprep.subr.bf16.mxu0 0
        %2423 = vmatpush2.bf16.msra.mxu0 0
        %2424 = vmatprep.subr.bf16.mxu0 0
        %2425 = vmatpush2.bf16.msra.mxu0 0
        %2426 = vmatprep.subr.bf16.mxu0 0
        %2427 = vmatpush2.bf16.msra.mxu0 0
        %2428 = vmatprep.mubr.bf16.mxu0 0
        %2429 = vmatmul.mubr.bf16.gmra.mxu0 %v2394
        %v2430 = vpop.f32.mrf.mxu0
        %v2431 = vadd.f32 0.0, %v2430
        %v2432 = vpop.f32.mrf.mxu0
        %v2433 = vpop.f32.mrf.mxu0
        %v2434 = vpop.f32.mrf.mxu0
        %2435 = vdwg.mxu0
        %v2437 = vrot.slane %v2431, 1
        %v2438 = vrot.slane %v2431, 2
        %v2441 = vadd.f32 %v2390, %v2437
        %v2442 = vadd.f32 %v2391, %v2438
        %v2443 = vxor.u32 %v2441, 2147483648
        %v2444 = vxor.u32 %v2442, 2147483648
        %v2445 = vmul.f32 %v2443, 1.442695
        %v2446 = vpow.pop %v2445
        %v2447 = vmul.f32 %v2444, 1.442695
        %v2448 = vpow.pop %v2447
        %v2449 = vadd.f32 %v2446, 1.0
        %v2450 = vadd.f32 %v2448, 1.0
        %v2451 = vrcp.pop %v2449
        %v2452 = vmul.f32 1.0, %v2451
        %v2453 = vrcp.pop %v2450
        %v2454 = vmul.f32 1.0, %v2453
        %v2455 = vtanh.pop %v2441
        %v2456 = vtanh.pop %v2442
        %v2458 = vrot.slane %v2350, 1
        %v2459 = vrot.slane %v2350, 2
        %2460 = vrot.lane.b32.xlu0 %v2458, 16
        %v2461 = vpop.permute.xlu0 %2460
        %2462 = vrot.lane.b32.xlu0 %v2459, 16
        %v2463 = vpop.permute.xlu0 %2462
        %v2466 = vmul.f32 %v2452, %v2461
        %v2467 = vmul.f32 %v2454, %v2463
        %2470 = vrot.lane.b32.xlu0 %v2455, 80
        %v2471 = vpop.permute.xlu0 %2470
        %2472 = vrot.lane.b32.xlu0 %v2456, 80
        %v2473 = vpop.permute.xlu0 %2472
        %v2476 = vmul.f32 %v2452, %v2471
        %v2477 = vmul.f32 %v2454, %v2473
        %2480 = vrot.lane.b32.xlu0 %v2476, 16
        %v2481 = vpop.permute.xlu0 %2480
        %2482 = vrot.lane.b32.xlu0 %v2477, 16
        %v2483 = vpop.permute.xlu0 %2482
        %v2486 = vadd.f32 %v2466, %v2481
        %v2487 = vadd.f32 %v2467, %v2483
        %v2488 = vtanh.pop %v2486
        %v2489 = vtanh.pop %v2487
        %2492 = vrot.lane.b32.xlu0 %v2488, 16
        %v2493 = vpop.permute.xlu0 %2492
        %2494 = vrot.lane.b32.xlu0 %v2489, 16
        %v2495 = vpop.permute.xlu0 %2494
        %v2498 = vmul.f32 %v2452, %v2493
        %v2499 = vmul.f32 %v2454, %v2495
        %v2500 = vld [vmem:[%s338] sm:$0x1]
        %v2501 = vld [vmem:[%s338 + $0x4] sm:$0x1]
        %v2502 = vunpack.c.l.bf16 %v2500
        %v2503 = vunpack.c.l.bf16 %v2501
        %v2504 = vpack.c.bf16 %v2380, %v2380
        %v2506 = vsel %vm424, %v2504, 0
        %2508 = vmatprep.subr.bf16.mxu0 0
        %2509 = vmatpush1.bf16.msra.mxu0 0
        %2510 = vmatprep.subr.bf16.mxu0 0
        %2511 = vmatpush1.bf16.msra.mxu0 0
        %2512 = vmatprep.subr.bf16.mxu0 0
        %2513 = vmatpush1.bf16.msra.mxu0 0
        %2514 = vmatprep.subr.bf16.mxu0 0
        %2515 = vmatpush1.bf16.msra.mxu0 0
        %2516 = vmatprep.subr.bf16.mxu0 0
        %2517 = vmatpush1.bf16.msra.mxu0 0
        %2518 = vmatprep.subr.bf16.mxu0 0
        %2519 = vmatpush1.bf16.msra.mxu0 0
        %2520 = vmatprep.subr.bf16.mxu0 0
        %2521 = vmatpush1.bf16.msra.mxu0 0
        %2522 = vmatprep.subr.bf16.mxu0 0
        %2523 = vmatpush1.bf16.msra.mxu0 %v539
        %2524 = vmatprep.subr.bf16.mxu0 0
        %2525 = vmatpush2.bf16.msra.mxu0 0
        %2526 = vmatprep.subr.bf16.mxu0 0
        %2527 = vmatpush2.bf16.msra.mxu0 0
        %2528 = vmatprep.subr.bf16.mxu0 0
        %2529 = vmatpush2.bf16.msra.mxu0 0
        %2530 = vmatprep.subr.bf16.mxu0 0
        %2531 = vmatpush2.bf16.msra.mxu0 0
        %2532 = vmatprep.subr.bf16.mxu0 0
        %2533 = vmatpush2.bf16.msra.mxu0 0
        %2534 = vmatprep.subr.bf16.mxu0 0
        %2535 = vmatpush2.bf16.msra.mxu0 0
        %2536 = vmatprep.subr.bf16.mxu0 0
        %2537 = vmatpush2.bf16.msra.mxu0 0
        %2538 = vmatprep.subr.bf16.mxu0 0
        %2539 = vmatpush2.bf16.msra.mxu0 0
        %2540 = vmatprep.mubr.bf16.mxu0 0
        %2541 = vmatmul.mubr.bf16.gmra.mxu0 %v2506
        %v2542 = vpop.f32.mrf.mxu0
        %v2543 = vadd.f32 0.0, %v2542
        %v2544 = vpop.f32.mrf.mxu0
        %v2545 = vpop.f32.mrf.mxu0
        %v2546 = vpop.f32.mrf.mxu0
        %2547 = vdwg.mxu0
        %v2549 = vrot.slane %v2543, 1
        %v2552 = vadd.f32 %v2502, %v2543
        %v2553 = vadd.f32 %v2503, %v2549
        %v2554 = vxor.u32 %v2552, 2147483648
        %v2555 = vxor.u32 %v2553, 2147483648
        %v2556 = vmul.f32 %v2554, 1.442695
        %v2557 = vpow.pop %v2556
        %v2558 = vmul.f32 %v2555, 1.442695
        %v2559 = vpow.pop %v2558
        %v2560 = vadd.f32 %v2557, 1.0
        %v2561 = vadd.f32 %v2559, 1.0
        %v2562 = vrcp.pop %v2560
        %v2563 = vmul.f32 1.0, %v2562
        %v2564 = vrcp.pop %v2561
        %v2565 = vmul.f32 1.0, %v2564
        %v2566 = vtanh.pop %v2552
        %v2567 = vtanh.pop %v2553
        %v2569 = vrot.slane %v2372, 1
        %2570 = vrot.lane.b32.xlu0 %v2372, 16
        %v2571 = vpop.permute.xlu0 %2570
        %2572 = vrot.lane.b32.xlu0 %v2569, 16
        %v2573 = vpop.permute.xlu0 %2572
        %v2576 = vmul.f32 %v2563, %v2571
        %v2577 = vmul.f32 %v2565, %v2573
        %2580 = vrot.lane.b32.xlu0 %v2566, 80
        %v2581 = vpop.permute.xlu0 %2580
        %2582 = vrot.lane.b32.xlu0 %v2567, 80
        %v2583 = vpop.permute.xlu0 %2582
        %v2586 = vmul.f32 %v2563, %v2581
        %v2587 = vmul.f32 %v2565, %v2583
        %2590 = vrot.lane.b32.xlu0 %v2586, 16
        %v2591 = vpop.permute.xlu0 %2590
        %2592 = vrot.lane.b32.xlu0 %v2587, 16
        %v2593 = vpop.permute.xlu0 %2592
        %v2596 = vadd.f32 %v2576, %v2591
        %v2597 = vadd.f32 %v2577, %v2593
        %v2598 = vtanh.pop %v2596
        %v2599 = vtanh.pop %v2597
        %2602 = vrot.lane.b32.xlu0 %v2598, 16
        %v2603 = vpop.permute.xlu0 %2602
        %2604 = vrot.lane.b32.xlu0 %v2599, 16
        %v2605 = vpop.permute.xlu0 %2604
        %v2608 = vmul.f32 %v2563, %v2603
        %v2609 = vmul.f32 %v2565, %v2605
        %v2610 = vstv %s2387
        %vm2611 = vcmp.lt.s32.totalorder %v2610, %v408
        %v2612 = vstv %s411
        %vm2613 = vcmp.lt.s32.totalorder %v2612, %v408
        %v2614 = vsel %vm2611, 1, 0
        %2615 = vset.pattern.permute.xlu0 0
        %2616 = vperm.xlu0 %2615, %v2614
        %v2617 = vpop.permute.xlu0 %2616
        %vm2618 = vcmp.eq.s32.totalorder %v2617, 1
        %v2621 = vrot.slane %v2486, 7
        %v2622 = vrot.slane %v2487, 6
        %v2623 = vsel %vm660, %v2622, %v2621
        %2624 = vrot.lane.b32.xlu0 %v2623, 112
        %v2625 = vpop.permute.xlu0 %2624
        %v2627 = vsel %vm2618, %v2625, %v2350
        %v2630 = vrot.slane %v2498, 7
        %v2631 = vrot.slane %v2499, 6
        %v2632 = vsel %vm660, %v2631, %v2630
        %2633 = vrot.lane.b32.xlu0 %v2632, 96
        %v2634 = vpop.permute.xlu0 %2633
        %v2636 = vsel %vm2618, %v2634, %v2359
        %v2637 = vsel %vm2613, 1, 0
        %2638 = vset.pattern.permute.xlu0 0
        %2639 = vperm.xlu0 %2638, %v2637
        %v2640 = vpop.permute.xlu0 %2639
        %vm2641 = vcmp.eq.s32.totalorder %v2640, 1
        %v2644 = vrot.slane %v2597, 7
        %v2645 = vsel %vm660, %v2644, %v2596
        %2646 = vrot.lane.b32.xlu0 %v2645, 112
        %v2647 = vpop.permute.xlu0 %2646
        %v2649 = vsel %vm2641, %v2647, %v2372
        %v2652 = vrot.slane %v2609, 7
        %v2653 = vsel %vm660, %v2652, %v2608
        %2654 = vrot.lane.b32.xlu0 %v2653, 96
        %v2655 = vpop.permute.xlu0 %2654
        %v2657 = vsel %vm2641, %v2655, %v2380
        %v2658 = vsel %vm2618, %v2634, 0.0
        %s2659 = scalar_lea.vmem %s380, 14
        %2660 = vst.msk [vmem:[%s2659] sm:$0x3] %vm698, %v2658
        %v2661 = vsel %vm2641, %v2655, 0.0
        %2662 = vst.msk [vmem:[%s387] sm:$0x3] %vm698, %v2661
        %2663 = vst.msk [vmem:[#allocation2] sm:$0x3] %vm698, %v2636
        %2664 = vst.msk [vmem:[#allocation3] sm:$0x3] %vm698, %v2627
        %2665 = vst.msk [vmem:[#allocation4] sm:$0x3] %vm698, %v2657
        %2666 = vst.msk [vmem:[#allocation5] sm:$0x3] %vm698, %v2649
        %s2667 = smul.u32 8, %s18
        %p2668 = scmp.lt.s32.totalorder %s2667, 15
        %s2669 = scalar_select %p2668, %s2667, 15
        %s2670 = smul.addr %s2669, 2
        %s2671 = scalar_lea.vmem %s5, %s2670
        %s2672 = ssub.s32 1, %s18
        %s2673 = smul.u32 8, %s2672
        %p2674 = scmp.lt.s32.totalorder %s2673, 15
        %s2675 = scalar_select %p2674, %s2673, 15
        %s2676 = smul.addr %s2675, 2
        %s2677 = scalar_lea.vmem %s6, %s2676
        // Predicated region
        $region127: #{encoder_forward.3} parent=113 // pred_check
          %p2678 = pneg %p153
        $region128: #{encoder_forward.3} parent=113 // pred_check_branch
          %2680 = sbr.rel (%p2678) target = $region130
        $region129: #{encoder_forward.3} parent=113 // pred_region
          %s2681 = smul.u32 8, %s18
        $region130: #{encoder_forward.3} parent=113 // pred_fallthru
          _
        // Predicated region
        $region131: #{encoder_forward.3} parent=113 // pred_check
          %p2682 = pneg %p181
        $region132: #{encoder_forward.3} parent=113 // pred_check_branch
          %2684 = sbr.rel (%p2682) target = $region134
        $region133: #{encoder_forward.3} parent=113 // pred_region
          %s2685 = ssub.s32 1, %s18
          %s2686 = smul.u32 8, %s2685
        $region134: #{encoder_forward.3} parent=113 // pred_fallthru
          _
      $region114: #{encoder_forward.3} parent=5 // pred_fallthru
        _
      %p2687 = scmp.le.s32.totalorder 2, %s13
      // Predicated region
      $region135: #{encoder_forward.3} parent=5 // pred_check
        %p2688 = pneg %p2687
      $region136: #{encoder_forward.3} parent=5 // pred_check_branch
        %2690 = sbr.rel (%p2688) target = $region138
      $region137: #{encoder_forward.3} parent=5 // pred_region
        %s2691 = ssub.s32 %s13, 2
        // Predicated region
        $region139: #{encoder_forward.3} parent=137 // pred_check
          %p2692 = pneg %p159
        $region140: #{encoder_forward.3} parent=137 // pred_check_branch
          %2694 = sbr.rel (%p2692) target = $region142
        $region141: #{encoder_forward.3} parent=137 // pred_region
          %s2695 = smul.u32 8, %s19
          %p2696 = scmp.lt.s32.totalorder %s2695, 15
          %s2697 = scalar_select %p2696, %s2695, 15
          %s2698 = smul.addr %s2697, 2
          %s2699 = scalar_lea.vmem %s5, %s2698
        $region142: #{encoder_forward.3} parent=137 // pred_fallthru
          _
        // Predicated region
        $region143: #{encoder_forward.3} parent=137 // pred_check
          %p2700 = pneg %p187
        $region144: #{encoder_forward.3} parent=137 // pred_check_branch
          %2702 = sbr.rel (%p2700) target = $region146
        $region145: #{encoder_forward.3} parent=137 // pred_region
          %s2703 = ssub.s32 1, %s19
          %s2704 = smul.u32 8, %s2703
          %p2705 = scmp.lt.s32.totalorder %s2704, 15
          %s2706 = scalar_select %p2705, %s2704, 15
          %s2707 = smul.addr %s2706, 2
          %s2708 = scalar_lea.vmem %s6, %s2707
        $region146: #{encoder_forward.3} parent=137 // pred_fallthru
          _
      $region138: #{encoder_forward.3} parent=5 // pred_fallthru
        _
    $region6: #{encoder_forward.3} parent=1 // loop_footer
      %s17 = sadd.s32 1, %s13
    $region7: #{encoder_forward.3} parent=1 // loop_footer_branch
      %12 = sbr.rel target = $region3
    $region8: #{encoder_forward.3} parent=1 // loop_exit
      _

</llo_original>
